<compile_context>
chip_gen: v7x
topology: tpu7x:2x2x1
jax: 0.10.0
libtpu: 0.0.40
codegen_flags: <defaults>
</compile_context>

<pallas_src>
import functools

import jax
import jax.numpy as jnp
from jax.experimental import pallas as pl
from jax.experimental.pallas import tpu as pltpu

H1 = 128    # lstm1 hidden size
H2 = 64     # lstm2 hidden size (logical)
H2P = 128   # lstm2 hidden size padded to a full lane group
IN = 1      # lstm1 input size


def _lstm_fc_kernel(x_ref,      # (T, B, 1)        f32  full sequence, resident in VMEM
                    wih1_ref,   # (1, 4*H1)        f32  (used on the VPU, K=1 path)
                    whh1_ref,   # (H1, 4*H1)       bf16
                    b1_ref,     # (1, 4*H1)        f32
                    w2_ref,     # (H1+H2P, 4*H2P)  bf16 fused [W_ih2; W_hh2], gate-padded
                    b2_ref,     # (1, 4*H2P)       f32
                    fcw_ref,    # (H2P, P)         f32
                    fcb_ref,    # (1, P)           f32
                    out_ref):   # (B, P)           f32
    T, B, _ = x_ref.shape

    # Hoist all weight loads out of the recurrence (JAX does not CSE these).
    wih1 = wih1_ref[...]
    whh1 = whh1_ref[...]
    b1 = b1_ref[...]
    w2 = w2_ref[...]
    b2 = b2_ref[...]

    def step(t, carry):
        h1, c1, h2, c2 = carry
        x_t = x_ref[t]                                     # (B, 1)

        # ---- LSTM layer 1: VPU broadcast for the K=1 input term + one bf16 MXU dot ----
        gates1 = (x_t * wih1
                  + jnp.dot(h1.astype(jnp.bfloat16), whh1,
                            preferred_element_type=jnp.float32)
                  + b1)
        s1 = jax.nn.sigmoid(gates1[:, :3 * H1])            # [i | f | o] in one EUP pass
        g1 = jnp.tanh(gates1[:, 3 * H1:])                  # [g]
        c1 = s1[:, H1:2 * H1] * c1 + s1[:, :H1] * g1
        h1 = s1[:, 2 * H1:] * jnp.tanh(c1)

        # ---- LSTM layer 2: single fused dot over K = H1 + H2P = 256 ----
        hcat = jnp.concatenate([h1, h2], axis=1).astype(jnp.bfloat16)   # (B, 256)
        gates2 = jnp.dot(hcat, w2, preferred_element_type=jnp.float32) + b2
        s2 = jax.nn.sigmoid(gates2[:, :3 * H2P])
        g2 = jnp.tanh(gates2[:, 3 * H2P:])
        # Padded lanes (cols 64:128 of each gate block) have zero weights/bias, so their
        # g = tanh(0) = 0 keeps the padded halves of c2/h2 exactly zero forever.
        c2 = s2[:, H2P:2 * H2P] * c2 + s2[:, :H2P] * g2
        h2 = s2[:, 2 * H2P:] * jnp.tanh(c2)
        return (h1, c1, h2, c2)

    zeros = lambda n: jnp.zeros((B, n), jnp.float32)
    _, _, h2, _ = jax.lax.fori_loop(
        0, T, step, (zeros(H1), zeros(H1), zeros(H2P), zeros(H2P)),
        unroll=bool(T <= 16))

    # ---- Final FC on the last timestep's h2 (padded rows of fcw are zero) ----
    out_ref[...] = (jnp.dot(h2, fcw_ref[...], preferred_element_type=jnp.float32)
                    + fcb_ref[...]).astype(out_ref.dtype)


@functools.partial(jax.jit, static_argnames=("predict_size",))
def my_lstm_forward(x, params, predict_size):
    """x: (B, T, 1) batch_first, like the PyTorch module. Returns (B, predict_size)."""
    B, T, _ = x.shape
    x_tm = jnp.transpose(x, (1, 0, 2))  # (T, B, 1) time-major
    wih1, whh1, b1, w2, b2, fcw, fcb = params
    P = predict_size

    full = lambda shape: pl.BlockSpec(shape, lambda i: tuple(0 for _ in shape))

    # Single grid step: x (~T*B*4 bytes) plus ~0.5 MiB of weights are resident in VMEM and
    # the whole recurrence runs inside one kernel invocation.
    # TODO(synk): if B grows, shard the batch over a leading "parallel" grid axis (megacore
    # on v7x); at B=2 there is nothing to shard.  For very long T, chunk x over a leading
    # "arbitrary" grid axis carrying h/c in VMEM scratch instead of one resident block.
    return pl.pallas_call(
        _lstm_fc_kernel,
        out_shape=jax.ShapeDtypeStruct((B, P), jnp.float32),
        grid_spec=pltpu.PrefetchScalarGridSpec(
            num_scalar_prefetch=0,
            grid=(1,),
            in_specs=[
                full((T, B, 1)),
                full((1, 4 * H1)),
                full((H1, 4 * H1)),
                full((1, 4 * H1)),
                full((H1 + H2P, 4 * H2P)),
                full((1, 4 * H2P)),
                full((H2P, P)),
                full((1, P)),
            ],
            out_specs=pl.BlockSpec((B, P), lambda i: (0, 0)),
        ),
        compiler_params=pltpu.CompilerParams(
            dimension_semantics=("arbitrary",)),
    )(x_tm, wih1, whh1, b1, w2, b2, fcw, fcb)


# ----------------------------------------------------------------------------------
# Parameter construction / packing
# ----------------------------------------------------------------------------------
def init_raw_params(key, predict_size):
    """Deterministic synthetic parameters with exact PyTorch nn.LSTM/Linear shapes."""
    ks = jax.random.split(key, 10)
    u = lambda k, shape, s: jax.random.uniform(k, shape, jnp.float32, -s, s)
    s1 = 1.0 / jnp.sqrt(H1)
    s2 = 1.0 / jnp.sqrt(H2)
    return (
        u(ks[0], (4 * H1, IN), s1),   # lstm1 weight_ih_l0
        u(ks[1], (4 * H1, H1), s1),   # lstm1 weight_hh_l0
        u(ks[2], (4 * H1,), s1),      # lstm1 bias_ih_l0
        u(ks[3], (4 * H1,), s1),      # lstm1 bias_hh_l0
        u(ks[4], (4 * H2, H1), s2),   # lstm2 weight_ih_l0
        u(ks[5], (4 * H2, H2), s2),   # lstm2 weight_hh_l0
        u(ks[6], (4 * H2,), s2),      # lstm2 bias_ih_l0
        u(ks[7], (4 * H2,), s2),      # lstm2 bias_hh_l0
        u(ks[8], (predict_size, H2), s2),  # fc.weight
        u(ks[9], (predict_size,), s2),     # fc.bias
    )


def _reorder_ifog(w):
    """Rows of (4H, K) from PyTorch gate order [i, f, g, o] -> [i, f, o, g]."""
    i, f, g, o = jnp.split(w, 4, axis=0)
    return jnp.concatenate([i, f, o, g], axis=0)


def pack_params(raw):
    (w_ih1, w_hh1, b_ih1, b_hh1,
     w_ih2, w_hh2, b_ih2, b_hh2, fc_w, fc_b) = raw

    # ---- layer 1 (H1=128: gate blocks already 128-lane aligned) ----
    wih1 = _reorder_ifog(w_ih1).T                                   # (1, 4H1)   f32
    whh1 = _reorder_ifog(w_hh1).T.astype(jnp.bfloat16)              # (H1, 4H1)  bf16
    b1 = _reorder_ifog((b_ih1 + b_hh1)[:, None]).T                  # (1, 4H1)   f32

    # ---- layer 2: reorder, pad each 64-wide gate to a 128-lane block, pad the
    #      recurrent K from 64 -> 128, and fuse [W_ih2; W_hh2] into one weight ----
    def pad_gates(w_t):  # (K, 4*H2) -> (K, 4*H2P), gate g in lanes [g*H2P, g*H2P+H2)
        parts = jnp.split(w_t, 4, axis=1)
        return jnp.concatenate(
            [jnp.pad(p, ((0, 0), (0, H2P - H2))) for p in parts], axis=1)

    wih2_t = pad_gates(_reorder_ifog(w_ih2).T)                      # (H1, 4*H2P)
    whh2_t = pad_gates(_reorder_ifog(w_hh2).T)                      # (H2, 4*H2P)
    whh2_t = jnp.pad(whh2_t, ((0, H2P - H2), (0, 0)))               # (H2P, 4*H2P)
    w2 = jnp.concatenate([wih2_t, whh2_t], axis=0).astype(jnp.bfloat16)  # (256, 512)
    b2 = pad_gates(_reorder_ifog((b_ih2 + b_hh2)[:, None]).T)       # (1, 4*H2P) f32

    fcw = jnp.pad(fc_w.T, ((0, H2P - H2), (0, 0)))                  # (H2P, P)   f32
    fcb = fc_b[None, :]                                             # (1, P)
    return (wih1, whh1, b1, w2, b2, fcw, fcb)


# ----------------------------------------------------------------------------------
# References for correctness checks
# ----------------------------------------------------------------------------------
def _packed_reference(x, params):
    """Pure-JAX mirror of the kernel math (same packing/precision)."""
    wih1, whh1, b1, w2, b2, fcw, fcb = params
    B, _, _ = x.shape

    def step(carry, x_t):
        h1, c1, h2, c2 = carry
        g1 = (x_t * wih1
              + jnp.dot(h1.astype(jnp.bfloat16), whh1,
                        preferred_element_type=jnp.float32) + b1)
        s1 = jax.nn.sigmoid(g1[:, :3 * H1]); t1 = jnp.tanh(g1[:, 3 * H1:])
        c1 = s1[:, H1:2 * H1] * c1 + s1[:, :H1] * t1
        h1 = s1[:, 2 * H1:] * jnp.tanh(c1)

        hc = jnp.concatenate([h1, h2], axis=1).astype(jnp.bfloat16)
        g2 = jnp.dot(hc, w2, preferred_element_type=jnp.float32) + b2
        s2 = jax.nn.sigmoid(g2[:, :3 * H2P]); t2 = jnp.tanh(g2[:, 3 * H2P:])
        c2 = s2[:, H2P:2 * H2P] * c2 + s2[:, :H2P] * t2
        h2 = s2[:, 2 * H2P:] * jnp.tanh(c2)
        return (h1, c1, h2, c2), None

    init = (jnp.zeros((B, H1)), jnp.zeros((B, H1)),
            jnp.zeros((B, H2P)), jnp.zeros((B, H2P)))
    (_, _, h2, _), _ = jax.lax.scan(step, init, jnp.transpose(x, (1, 0, 2)))
    return jnp.dot(h2, fcw, preferred_element_type=jnp.float32) + fcb


def _reference_forward_f32(x, raw):
    """Full-f32 reference with PyTorch semantics (validates reordering/packing)."""
    (w_ih1, w_hh1, b_ih1, b_hh1,
     w_ih2, w_hh2, b_ih2, b_hh2, fc_w, fc_b) = raw
    B, _, _ = x.shape

    def cell(x_t, h, c, w_ih, w_hh, b_ih, b_hh):
        g = x_t @ w_ih.T + h @ w_hh.T + b_ih + b_hh
        i, f, gg, o = jnp.split(g, 4, axis=-1)
        c = jax.nn.sigmoid(f) * c + jax.nn.sigmoid(i) * jnp.tanh(gg)
        h = jax.nn.sigmoid(o) * jnp.tanh(c)
        return h, c

    def step(carry, x_t):
        h1, c1, h2, c2 = carry
        h1, c1 = cell(x_t, h1, c1, w_ih1, w_hh1, b_ih1, b_hh1)
        h2, c2 = cell(h1, h2, c2, w_ih2, w_hh2, b_ih2, b_hh2)
        return (h1, c1, h2, c2), None

    init = (jnp.zeros((B, H1)), jnp.zeros((B, H1)),
            jnp.zeros((B, H2)), jnp.zeros((B, H2)))
    (_, _, h2, _), _ = jax.lax.scan(step, init, jnp.transpose(x, (1, 0, 2)))
    return h2 @ fc_w.T + fc_b


if __name__ == "__main__":
    B, T, PREDICT_SIZE = 2, 8, 8

    key = jax.random.PRNGKey(0)
    k_x, k_p = jax.random.split(key)
    x = jax.random.normal(k_x, (B, T, IN), dtype=jnp.float32)
    raw = init_raw_params(k_p, PREDICT_SIZE)
    params = pack_params(raw)

    out = jax.block_until_ready(my_lstm_forward(x, params, PREDICT_SIZE))
    assert out.shape == (B, PREDICT_SIZE)

    ref_packed = _packed_reference(x, params)       # same math/precision as the kernel
    ref_f32 = _reference_forward_f32(x, raw)        # PyTorch-semantics f32 reference
    assert jnp.allclose(out, ref_packed, atol=2e-3, rtol=2e-3), \
        "mismatch vs packed-precision JAX reference"
    assert jnp.allclose(out, ref_f32, atol=5e-2), \
        "mismatch vs f32 PyTorch-semantics reference (beyond bf16-weight tolerance)"

    print("KERNEL_OK")
</pallas_src>

<mosaic_0001>
module attributes {stable_mosaic.version = 11 : i64} {
  func.func @_lstm_fc_kernel(%arg0: i32, %arg1: memref<8x2x1xf32, #tpu.memory_space<vmem>>, %arg2: memref<1x512xf32, #tpu.memory_space<vmem>>, %arg3: memref<128x512xbf16, #tpu.memory_space<vmem>>, %arg4: memref<1x512xf32, #tpu.memory_space<vmem>>, %arg5: memref<256x512xbf16, #tpu.memory_space<vmem>>, %arg6: memref<1x512xf32, #tpu.memory_space<vmem>>, %arg7: memref<128x8xf32, #tpu.memory_space<vmem>>, %arg8: memref<1x8xf32, #tpu.memory_space<vmem>>, %arg9: memref<2x8xf32, #tpu.memory_space<vmem>>) attributes {dimension_semantics = [#tpu.dimension_semantics<arbitrary>], iteration_bounds = array<i64: 1>, scalar_prefetch = 0 : i64, scratch_operands = 0 : i64, tpu.core_type = #tpu.core_type<tc>, window_params = [{pipeline_mode = #tpu.pipeline_mode<synchronous>, transform_indices = @transform_0, window_bounds = array<i64: 8, 2, 1>}, {pipeline_mode = #tpu.pipeline_mode<synchronous>, transform_indices = @transform_1, window_bounds = array<i64: 1, 512>}, {pipeline_mode = #tpu.pipeline_mode<synchronous>, transform_indices = @transform_2, window_bounds = array<i64: 128, 512>}, {pipeline_mode = #tpu.pipeline_mode<synchronous>, transform_indices = @transform_3, window_bounds = array<i64: 1, 512>}, {pipeline_mode = #tpu.pipeline_mode<synchronous>, transform_indices = @transform_4, window_bounds = array<i64: 256, 512>}, {pipeline_mode = #tpu.pipeline_mode<synchronous>, transform_indices = @transform_5, window_bounds = array<i64: 1, 512>}, {pipeline_mode = #tpu.pipeline_mode<synchronous>, transform_indices = @transform_6, window_bounds = array<i64: 128, 8>}, {pipeline_mode = #tpu.pipeline_mode<synchronous>, transform_indices = @transform_7, window_bounds = array<i64: 1, 8>}, {pipeline_mode = #tpu.pipeline_mode<synchronous>, transform_indices = @transform_8, window_bounds = array<i64: 2, 8>}]} {
    %c0 = arith.constant 0 : index
    %c0_0 = arith.constant 0 : index
    %0 = vector.load %arg2[%c0, %c0_0] : memref<1x512xf32, #tpu.memory_space<vmem>>, vector<1x512xf32>
    %c0_1 = arith.constant 0 : index
    %c0_2 = arith.constant 0 : index
    %1 = vector.load %arg3[%c0_1, %c0_2] : memref<128x512xbf16, #tpu.memory_space<vmem>>, vector<128x512xbf16>
    %c0_3 = arith.constant 0 : index
    %c0_4 = arith.constant 0 : index
    %2 = vector.load %arg4[%c0_3, %c0_4] : memref<1x512xf32, #tpu.memory_space<vmem>>, vector<1x512xf32>
    %c0_5 = arith.constant 0 : index
    %c0_6 = arith.constant 0 : index
    %3 = vector.load %arg5[%c0_5, %c0_6] : memref<256x512xbf16, #tpu.memory_space<vmem>>, vector<256x512xbf16>
    %c0_7 = arith.constant 0 : index
    %c0_8 = arith.constant 0 : index
    %4 = vector.load %arg6[%c0_7, %c0_8] : memref<1x512xf32, #tpu.memory_space<vmem>>, vector<1x512xf32>
    %cst = arith.constant 0.000000e+00 : f32
    %5 = vector.broadcast %cst : f32 to vector<2x128xf32>
    %cst_9 = arith.constant 0.000000e+00 : f32
    %6 = vector.broadcast %cst_9 : f32 to vector<2x128xf32>
    %cst_10 = arith.constant 0.000000e+00 : f32
    %7 = vector.broadcast %cst_10 : f32 to vector<2x128xf32>
    %cst_11 = arith.constant 0.000000e+00 : f32
    %8 = vector.broadcast %cst_11 : f32 to vector<2x128xf32>
    %c0_i32 = arith.constant 0 : i32
    %9 = arith.index_cast %c0_i32 : i32 to index
    %c0_12 = arith.constant 0 : index
    %c0_13 = arith.constant 0 : index
    %10 = vector.load %arg1[%9, %c0_12, %c0_13] : memref<8x2x1xf32, #tpu.memory_space<vmem>>, vector<1x2x1xf32>
    %11 = vector.shape_cast %10 : vector<1x2x1xf32> to vector<2x1xf32>
    %12 = vector.broadcast %11 : vector<2x1xf32> to vector<2x512xf32>
    %13 = vector.broadcast %0 : vector<1x512xf32> to vector<2x512xf32>
    %14 = arith.mulf %12, %13 : vector<2x512xf32>
    %15 = arith.truncf %5 : vector<2x128xf32> to vector<2x128xbf16>
    %cst_14 = arith.constant dense<0.000000e+00> : vector<2x512xf32>
    %16 = tpu.matmul %15, %1, %cst_14 {dimension_numbers = #tpu.dot_dimension_numbers<[1], [0], [0], [1], [0, 0, 1, 1], [], []>} : vector<2x128xbf16>, vector<128x512xbf16>, vector<2x512xf32> -> vector<2x512xf32>
    %17 = arith.addf %14, %16 : vector<2x512xf32>
    %18 = vector.broadcast %2 : vector<1x512xf32> to vector<2x512xf32>
    %19 = arith.addf %17, %18 : vector<2x512xf32>
    %20 = vector.extract_strided_slice %19 {offsets = [0, 0], sizes = [2, 384], strides = [1, 1]} : vector<2x512xf32> to vector<2x384xf32>
    %21 = arith.negf %20 : vector<2x384xf32>
    %22 = math.exp %21 : vector<2x384xf32>
    %cst_15 = arith.constant 1.000000e+00 : f32
    %23 = vector.broadcast %cst_15 : f32 to vector<2x384xf32>
    %24 = arith.addf %23, %22 : vector<2x384xf32>
    %25 = arith.divf %23, %24 : vector<2x384xf32>
    %26 = vector.extract_strided_slice %19 {offsets = [0, 384], sizes = [2, 128], strides = [1, 1]} : vector<2x512xf32> to vector<2x128xf32>
    %27 = math.tanh %26 : vector<2x128xf32>
    %28 = vector.extract_strided_slice %25 {offsets = [0, 128], sizes = [2, 128], strides = [1, 1]} : vector<2x384xf32> to vector<2x128xf32>
    %29 = arith.mulf %28, %6 : vector<2x128xf32>
    %30 = vector.extract_strided_slice %25 {offsets = [0, 0], sizes = [2, 128], strides = [1, 1]} : vector<2x384xf32> to vector<2x128xf32>
    %31 = arith.mulf %30, %27 : vector<2x128xf32>
    %32 = arith.addf %29, %31 : vector<2x128xf32>
    %33 = vector.extract_strided_slice %25 {offsets = [0, 256], sizes = [2, 128], strides = [1, 1]} : vector<2x384xf32> to vector<2x128xf32>
    %34 = math.tanh %32 : vector<2x128xf32>
    %35 = arith.mulf %33, %34 : vector<2x128xf32>
    %36 = tpu.concatenate %35, %7 in 1 : vector<2x128xf32>, vector<2x128xf32> -> vector<2x256xf32>
    %37 = arith.truncf %36 : vector<2x256xf32> to vector<2x256xbf16>
    %cst_16 = arith.constant dense<0.000000e+00> : vector<2x512xf32>
    %38 = tpu.matmul %37, %3, %cst_16 {dimension_numbers = #tpu.dot_dimension_numbers<[1], [0], [0], [1], [0, 0, 1, 1], [], []>} : vector<2x256xbf16>, vector<256x512xbf16>, vector<2x512xf32> -> vector<2x512xf32>
    %39 = vector.broadcast %4 : vector<1x512xf32> to vector<2x512xf32>
    %40 = arith.addf %38, %39 : vector<2x512xf32>
    %41 = vector.extract_strided_slice %40 {offsets = [0, 0], sizes = [2, 384], strides = [1, 1]} : vector<2x512xf32> to vector<2x384xf32>
    %42 = arith.negf %41 : vector<2x384xf32>
    %43 = math.exp %42 : vector<2x384xf32>
    %cst_17 = arith.constant 1.000000e+00 : f32
    %44 = vector.broadcast %cst_17 : f32 to vector<2x384xf32>
    %45 = arith.addf %44, %43 : vector<2x384xf32>
    %46 = arith.divf %44, %45 : vector<2x384xf32>
    %47 = vector.extract_strided_slice %40 {offsets = [0, 384], sizes = [2, 128], strides = [1, 1]} : vector<2x512xf32> to vector<2x128xf32>
    %48 = math.tanh %47 : vector<2x128xf32>
    %49 = vector.extract_strided_slice %46 {offsets = [0, 128], sizes = [2, 128], strides = [1, 1]} : vector<2x384xf32> to vector<2x128xf32>
    %50 = arith.mulf %49, %8 : vector<2x128xf32>
    %51 = vector.extract_strided_slice %46 {offsets = [0, 0], sizes = [2, 128], strides = [1, 1]} : vector<2x384xf32> to vector<2x128xf32>
    %52 = arith.mulf %51, %48 : vector<2x128xf32>
    %53 = arith.addf %50, %52 : vector<2x128xf32>
    %54 = vector.extract_strided_slice %46 {offsets = [0, 256], sizes = [2, 128], strides = [1, 1]} : vector<2x384xf32> to vector<2x128xf32>
    %55 = math.tanh %53 : vector<2x128xf32>
    %56 = arith.mulf %54, %55 : vector<2x128xf32>
    %c1_i32 = arith.constant 1 : i32
    %57 = arith.index_cast %c1_i32 : i32 to index
    %c0_18 = arith.constant 0 : index
    %c0_19 = arith.constant 0 : index
    %58 = vector.load %arg1[%57, %c0_18, %c0_19] : memref<8x2x1xf32, #tpu.memory_space<vmem>>, vector<1x2x1xf32>
    %59 = vector.shape_cast %58 : vector<1x2x1xf32> to vector<2x1xf32>
    %60 = vector.broadcast %59 : vector<2x1xf32> to vector<2x512xf32>
    %61 = vector.broadcast %0 : vector<1x512xf32> to vector<2x512xf32>
    %62 = arith.mulf %60, %61 : vector<2x512xf32>
    %63 = arith.truncf %35 : vector<2x128xf32> to vector<2x128xbf16>
    %cst_20 = arith.constant dense<0.000000e+00> : vector<2x512xf32>
    %64 = tpu.matmul %63, %1, %cst_20 {dimension_numbers = #tpu.dot_dimension_numbers<[1], [0], [0], [1], [0, 0, 1, 1], [], []>} : vector<2x128xbf16>, vector<128x512xbf16>, vector<2x512xf32> -> vector<2x512xf32>
    %65 = arith.addf %62, %64 : vector<2x512xf32>
    %66 = vector.broadcast %2 : vector<1x512xf32> to vector<2x512xf32>
    %67 = arith.addf %65, %66 : vector<2x512xf32>
    %68 = vector.extract_strided_slice %67 {offsets = [0, 0], sizes = [2, 384], strides = [1, 1]} : vector<2x512xf32> to vector<2x384xf32>
    %69 = arith.negf %68 : vector<2x384xf32>
    %70 = math.exp %69 : vector<2x384xf32>
    %cst_21 = arith.constant 1.000000e+00 : f32
    %71 = vector.broadcast %cst_21 : f32 to vector<2x384xf32>
    %72 = arith.addf %71, %70 : vector<2x384xf32>
    %73 = arith.divf %71, %72 : vector<2x384xf32>
    %74 = vector.extract_strided_slice %67 {offsets = [0, 384], sizes = [2, 128], strides = [1, 1]} : vector<2x512xf32> to vector<2x128xf32>
    %75 = math.tanh %74 : vector<2x128xf32>
    %76 = vector.extract_strided_slice %73 {offsets = [0, 128], sizes = [2, 128], strides = [1, 1]} : vector<2x384xf32> to vector<2x128xf32>
    %77 = arith.mulf %76, %32 : vector<2x128xf32>
    %78 = vector.extract_strided_slice %73 {offsets = [0, 0], sizes = [2, 128], strides = [1, 1]} : vector<2x384xf32> to vector<2x128xf32>
    %79 = arith.mulf %78, %75 : vector<2x128xf32>
    %80 = arith.addf %77, %79 : vector<2x128xf32>
    %81 = vector.extract_strided_slice %73 {offsets = [0, 256], sizes = [2, 128], strides = [1, 1]} : vector<2x384xf32> to vector<2x128xf32>
    %82 = math.tanh %80 : vector<2x128xf32>
    %83 = arith.mulf %81, %82 : vector<2x128xf32>
    %84 = tpu.concatenate %83, %56 in 1 : vector<2x128xf32>, vector<2x128xf32> -> vector<2x256xf32>
    %85 = arith.truncf %84 : vector<2x256xf32> to vector<2x256xbf16>
    %cst_22 = arith.constant dense<0.000000e+00> : vector<2x512xf32>
    %86 = tpu.matmul %85, %3, %cst_22 {dimension_numbers = #tpu.dot_dimension_numbers<[1], [0], [0], [1], [0, 0, 1, 1], [], []>} : vector<2x256xbf16>, vector<256x512xbf16>, vector<2x512xf32> -> vector<2x512xf32>
    %87 = vector.broadcast %4 : vector<1x512xf32> to vector<2x512xf32>
    %88 = arith.addf %86, %87 : vector<2x512xf32>
    %89 = vector.extract_strided_slice %88 {offsets = [0, 0], sizes = [2, 384], strides = [1, 1]} : vector<2x512xf32> to vector<2x384xf32>
    %90 = arith.negf %89 : vector<2x384xf32>
    %91 = math.exp %90 : vector<2x384xf32>
    %cst_23 = arith.constant 1.000000e+00 : f32
    %92 = vector.broadcast %cst_23 : f32 to vector<2x384xf32>
    %93 = arith.addf %92, %91 : vector<2x384xf32>
    %94 = arith.divf %92, %93 : vector<2x384xf32>
    %95 = vector.extract_strided_slice %88 {offsets = [0, 384], sizes = [2, 128], strides = [1, 1]} : vector<2x512xf32> to vector<2x128xf32>
    %96 = math.tanh %95 : vector<2x128xf32>
    %97 = vector.extract_strided_slice %94 {offsets = [0, 128], sizes = [2, 128], strides = [1, 1]} : vector<2x384xf32> to vector<2x128xf32>
    %98 = arith.mulf %97, %53 : vector<2x128xf32>
    %99 = vector.extract_strided_slice %94 {offsets = [0, 0], sizes = [2, 128], strides = [1, 1]} : vector<2x384xf32> to vector<2x128xf32>
    %100 = arith.mulf %99, %96 : vector<2x128xf32>
    %101 = arith.addf %98, %100 : vector<2x128xf32>
    %102 = vector.extract_strided_slice %94 {offsets = [0, 256], sizes = [2, 128], strides = [1, 1]} : vector<2x384xf32> to vector<2x128xf32>
    %103 = math.tanh %101 : vector<2x128xf32>
    %104 = arith.mulf %102, %103 : vector<2x128xf32>
    %c2_i32 = arith.constant 2 : i32
    %105 = arith.index_cast %c2_i32 : i32 to index
    %c0_24 = arith.constant 0 : index
    %c0_25 = arith.constant 0 : index
    %106 = vector.load %arg1[%105, %c0_24, %c0_25] : memref<8x2x1xf32, #tpu.memory_space<vmem>>, vector<1x2x1xf32>
    %107 = vector.shape_cast %106 : vector<1x2x1xf32> to vector<2x1xf32>
    %108 = vector.broadcast %107 : vector<2x1xf32> to vector<2x512xf32>
    %109 = vector.broadcast %0 : vector<1x512xf32> to vector<2x512xf32>
    %110 = arith.mulf %108, %109 : vector<2x512xf32>
    %111 = arith.truncf %83 : vector<2x128xf32> to vector<2x128xbf16>
    %cst_26 = arith.constant dense<0.000000e+00> : vector<2x512xf32>
    %112 = tpu.matmul %111, %1, %cst_26 {dimension_numbers = #tpu.dot_dimension_numbers<[1], [0], [0], [1], [0, 0, 1, 1], [], []>} : vector<2x128xbf16>, vector<128x512xbf16>, vector<2x512xf32> -> vector<2x512xf32>
    %113 = arith.addf %110, %112 : vector<2x512xf32>
    %114 = vector.broadcast %2 : vector<1x512xf32> to vector<2x512xf32>
    %115 = arith.addf %113, %114 : vector<2x512xf32>
    %116 = vector.extract_strided_slice %115 {offsets = [0, 0], sizes = [2, 384], strides = [1, 1]} : vector<2x512xf32> to vector<2x384xf32>
    %117 = arith.negf %116 : vector<2x384xf32>
    %118 = math.exp %117 : vector<2x384xf32>
    %cst_27 = arith.constant 1.000000e+00 : f32
    %119 = vector.broadcast %cst_27 : f32 to vector<2x384xf32>
    %120 = arith.addf %119, %118 : vector<2x384xf32>
    %121 = arith.divf %119, %120 : vector<2x384xf32>
    %122 = vector.extract_strided_slice %115 {offsets = [0, 384], sizes = [2, 128], strides = [1, 1]} : vector<2x512xf32> to vector<2x128xf32>
    %123 = math.tanh %122 : vector<2x128xf32>
    %124 = vector.extract_strided_slice %121 {offsets = [0, 128], sizes = [2, 128], strides = [1, 1]} : vector<2x384xf32> to vector<2x128xf32>
    %125 = arith.mulf %124, %80 : vector<2x128xf32>
    %126 = vector.extract_strided_slice %121 {offsets = [0, 0], sizes = [2, 128], strides = [1, 1]} : vector<2x384xf32> to vector<2x128xf32>
    %127 = arith.mulf %126, %123 : vector<2x128xf32>
    %128 = arith.addf %125, %127 : vector<2x128xf32>
    %129 = vector.extract_strided_slice %121 {offsets = [0, 256], sizes = [2, 128], strides = [1, 1]} : vector<2x384xf32> to vector<2x128xf32>
    %130 = math.tanh %128 : vector<2x128xf32>
    %131 = arith.mulf %129, %130 : vector<2x128xf32>
    %132 = tpu.concatenate %131, %104 in 1 : vector<2x128xf32>, vector<2x128xf32> -> vector<2x256xf32>
    %133 = arith.truncf %132 : vector<2x256xf32> to vector<2x256xbf16>
    %cst_28 = arith.constant dense<0.000000e+00> : vector<2x512xf32>
    %134 = tpu.matmul %133, %3, %cst_28 {dimension_numbers = #tpu.dot_dimension_numbers<[1], [0], [0], [1], [0, 0, 1, 1], [], []>} : vector<2x256xbf16>, vector<256x512xbf16>, vector<2x512xf32> -> vector<2x512xf32>
    %135 = vector.broadcast %4 : vector<1x512xf32> to vector<2x512xf32>
    %136 = arith.addf %134, %135 : vector<2x512xf32>
    %137 = vector.extract_strided_slice %136 {offsets = [0, 0], sizes = [2, 384], strides = [1, 1]} : vector<2x512xf32> to vector<2x384xf32>
    %138 = arith.negf %137 : vector<2x384xf32>
    %139 = math.exp %138 : vector<2x384xf32>
    %cst_29 = arith.constant 1.000000e+00 : f32
    %140 = vector.broadcast %cst_29 : f32 to vector<2x384xf32>
    %141 = arith.addf %140, %139 : vector<2x384xf32>
    %142 = arith.divf %140, %141 : vector<2x384xf32>
    %143 = vector.extract_strided_slice %136 {offsets = [0, 384], sizes = [2, 128], strides = [1, 1]} : vector<2x512xf32> to vector<2x128xf32>
    %144 = math.tanh %143 : vector<2x128xf32>
    %145 = vector.extract_strided_slice %142 {offsets = [0, 128], sizes = [2, 128], strides = [1, 1]} : vector<2x384xf32> to vector<2x128xf32>
    %146 = arith.mulf %145, %101 : vector<2x128xf32>
    %147 = vector.extract_strided_slice %142 {offsets = [0, 0], sizes = [2, 128], strides = [1, 1]} : vector<2x384xf32> to vector<2x128xf32>
    %148 = arith.mulf %147, %144 : vector<2x128xf32>
    %149 = arith.addf %146, %148 : vector<2x128xf32>
    %150 = vector.extract_strided_slice %142 {offsets = [0, 256], sizes = [2, 128], strides = [1, 1]} : vector<2x384xf32> to vector<2x128xf32>
    %151 = math.tanh %149 : vector<2x128xf32>
    %152 = arith.mulf %150, %151 : vector<2x128xf32>
    %c3_i32 = arith.constant 3 : i32
    %153 = arith.index_cast %c3_i32 : i32 to index
    %c0_30 = arith.constant 0 : index
    %c0_31 = arith.constant 0 : index
    %154 = vector.load %arg1[%153, %c0_30, %c0_31] : memref<8x2x1xf32, #tpu.memory_space<vmem>>, vector<1x2x1xf32>
    %155 = vector.shape_cast %154 : vector<1x2x1xf32> to vector<2x1xf32>
    %156 = vector.broadcast %155 : vector<2x1xf32> to vector<2x512xf32>
    %157 = vector.broadcast %0 : vector<1x512xf32> to vector<2x512xf32>
    %158 = arith.mulf %156, %157 : vector<2x512xf32>
    %159 = arith.truncf %131 : vector<2x128xf32> to vector<2x128xbf16>
    %cst_32 = arith.constant dense<0.000000e+00> : vector<2x512xf32>
    %160 = tpu.matmul %159, %1, %cst_32 {dimension_numbers = #tpu.dot_dimension_numbers<[1], [0], [0], [1], [0, 0, 1, 1], [], []>} : vector<2x128xbf16>, vector<128x512xbf16>, vector<2x512xf32> -> vector<2x512xf32>
    %161 = arith.addf %158, %160 : vector<2x512xf32>
    %162 = vector.broadcast %2 : vector<1x512xf32> to vector<2x512xf32>
    %163 = arith.addf %161, %162 : vector<2x512xf32>
    %164 = vector.extract_strided_slice %163 {offsets = [0, 0], sizes = [2, 384], strides = [1, 1]} : vector<2x512xf32> to vector<2x384xf32>
    %165 = arith.negf %164 : vector<2x384xf32>
    %166 = math.exp %165 : vector<2x384xf32>
    %cst_33 = arith.constant 1.000000e+00 : f32
    %167 = vector.broadcast %cst_33 : f32 to vector<2x384xf32>
    %168 = arith.addf %167, %166 : vector<2x384xf32>
    %169 = arith.divf %167, %168 : vector<2x384xf32>
    %170 = vector.extract_strided_slice %163 {offsets = [0, 384], sizes = [2, 128], strides = [1, 1]} : vector<2x512xf32> to vector<2x128xf32>
    %171 = math.tanh %170 : vector<2x128xf32>
    %172 = vector.extract_strided_slice %169 {offsets = [0, 128], sizes = [2, 128], strides = [1, 1]} : vector<2x384xf32> to vector<2x128xf32>
    %173 = arith.mulf %172, %128 : vector<2x128xf32>
    %174 = vector.extract_strided_slice %169 {offsets = [0, 0], sizes = [2, 128], strides = [1, 1]} : vector<2x384xf32> to vector<2x128xf32>
    %175 = arith.mulf %174, %171 : vector<2x128xf32>
    %176 = arith.addf %173, %175 : vector<2x128xf32>
    %177 = vector.extract_strided_slice %169 {offsets = [0, 256], sizes = [2, 128], strides = [1, 1]} : vector<2x384xf32> to vector<2x128xf32>
    %178 = math.tanh %176 : vector<2x128xf32>
    %179 = arith.mulf %177, %178 : vector<2x128xf32>
    %180 = tpu.concatenate %179, %152 in 1 : vector<2x128xf32>, vector<2x128xf32> -> vector<2x256xf32>
    %181 = arith.truncf %180 : vector<2x256xf32> to vector<2x256xbf16>
    %cst_34 = arith.constant dense<0.000000e+00> : vector<2x512xf32>
    %182 = tpu.matmul %181, %3, %cst_34 {dimension_numbers = #tpu.dot_dimension_numbers<[1], [0], [0], [1], [0, 0, 1, 1], [], []>} : vector<2x256xbf16>, vector<256x512xbf16>, vector<2x512xf32> -> vector<2x512xf32>
    %183 = vector.broadcast %4 : vector<1x512xf32> to vector<2x512xf32>
    %184 = arith.addf %182, %183 : vector<2x512xf32>
    %185 = vector.extract_strided_slice %184 {offsets = [0, 0], sizes = [2, 384], strides = [1, 1]} : vector<2x512xf32> to vector<2x384xf32>
    %186 = arith.negf %185 : vector<2x384xf32>
    %187 = math.exp %186 : vector<2x384xf32>
    %cst_35 = arith.constant 1.000000e+00 : f32
    %188 = vector.broadcast %cst_35 : f32 to vector<2x384xf32>
    %189 = arith.addf %188, %187 : vector<2x384xf32>
    %190 = arith.divf %188, %189 : vector<2x384xf32>
    %191 = vector.extract_strided_slice %184 {offsets = [0, 384], sizes = [2, 128], strides = [1, 1]} : vector<2x512xf32> to vector<2x128xf32>
    %192 = math.tanh %191 : vector<2x128xf32>
    %193 = vector.extract_strided_slice %190 {offsets = [0, 128], sizes = [2, 128], strides = [1, 1]} : vector<2x384xf32> to vector<2x128xf32>
    %194 = arith.mulf %193, %149 : vector<2x128xf32>
    %195 = vector.extract_strided_slice %190 {offsets = [0, 0], sizes = [2, 128], strides = [1, 1]} : vector<2x384xf32> to vector<2x128xf32>
    %196 = arith.mulf %195, %192 : vector<2x128xf32>
    %197 = arith.addf %194, %196 : vector<2x128xf32>
    %198 = vector.extract_strided_slice %190 {offsets = [0, 256], sizes = [2, 128], strides = [1, 1]} : vector<2x384xf32> to vector<2x128xf32>
    %199 = math.tanh %197 : vector<2x128xf32>
    %200 = arith.mulf %198, %199 : vector<2x128xf32>
    %c4_i32 = arith.constant 4 : i32
    %201 = arith.index_cast %c4_i32 : i32 to index
    %c0_36 = arith.constant 0 : index
    %c0_37 = arith.constant 0 : index
    %202 = vector.load %arg1[%201, %c0_36, %c0_37] : memref<8x2x1xf32, #tpu.memory_space<vmem>>, vector<1x2x1xf32>
    %203 = vector.shape_cast %202 : vector<1x2x1xf32> to vector<2x1xf32>
    %204 = vector.broadcast %203 : vector<2x1xf32> to vector<2x512xf32>
    %205 = vector.broadcast %0 : vector<1x512xf32> to vector<2x512xf32>
    %206 = arith.mulf %204, %205 : vector<2x512xf32>
    %207 = arith.truncf %179 : vector<2x128xf32> to vector<2x128xbf16>
    %cst_38 = arith.constant dense<0.000000e+00> : vector<2x512xf32>
    %208 = tpu.matmul %207, %1, %cst_38 {dimension_numbers = #tpu.dot_dimension_numbers<[1], [0], [0], [1], [0, 0, 1, 1], [], []>} : vector<2x128xbf16>, vector<128x512xbf16>, vector<2x512xf32> -> vector<2x512xf32>
    %209 = arith.addf %206, %208 : vector<2x512xf32>
    %210 = vector.broadcast %2 : vector<1x512xf32> to vector<2x512xf32>
    %211 = arith.addf %209, %210 : vector<2x512xf32>
    %212 = vector.extract_strided_slice %211 {offsets = [0, 0], sizes = [2, 384], strides = [1, 1]} : vector<2x512xf32> to vector<2x384xf32>
    %213 = arith.negf %212 : vector<2x384xf32>
    %214 = math.exp %213 : vector<2x384xf32>
    %cst_39 = arith.constant 1.000000e+00 : f32
    %215 = vector.broadcast %cst_39 : f32 to vector<2x384xf32>
    %216 = arith.addf %215, %214 : vector<2x384xf32>
    %217 = arith.divf %215, %216 : vector<2x384xf32>
    %218 = vector.extract_strided_slice %211 {offsets = [0, 384], sizes = [2, 128], strides = [1, 1]} : vector<2x512xf32> to vector<2x128xf32>
    %219 = math.tanh %218 : vector<2x128xf32>
    %220 = vector.extract_strided_slice %217 {offsets = [0, 128], sizes = [2, 128], strides = [1, 1]} : vector<2x384xf32> to vector<2x128xf32>
    %221 = arith.mulf %220, %176 : vector<2x128xf32>
    %222 = vector.extract_strided_slice %217 {offsets = [0, 0], sizes = [2, 128], strides = [1, 1]} : vector<2x384xf32> to vector<2x128xf32>
    %223 = arith.mulf %222, %219 : vector<2x128xf32>
    %224 = arith.addf %221, %223 : vector<2x128xf32>
    %225 = vector.extract_strided_slice %217 {offsets = [0, 256], sizes = [2, 128], strides = [1, 1]} : vector<2x384xf32> to vector<2x128xf32>
    %226 = math.tanh %224 : vector<2x128xf32>
    %227 = arith.mulf %225, %226 : vector<2x128xf32>
    %228 = tpu.concatenate %227, %200 in 1 : vector<2x128xf32>, vector<2x128xf32> -> vector<2x256xf32>
    %229 = arith.truncf %228 : vector<2x256xf32> to vector<2x256xbf16>
    %cst_40 = arith.constant dense<0.000000e+00> : vector<2x512xf32>
    %230 = tpu.matmul %229, %3, %cst_40 {dimension_numbers = #tpu.dot_dimension_numbers<[1], [0], [0], [1], [0, 0, 1, 1], [], []>} : vector<2x256xbf16>, vector<256x512xbf16>, vector<2x512xf32> -> vector<2x512xf32>
    %231 = vector.broadcast %4 : vector<1x512xf32> to vector<2x512xf32>
    %232 = arith.addf %230, %231 : vector<2x512xf32>
    %233 = vector.extract_strided_slice %232 {offsets = [0, 0], sizes = [2, 384], strides = [1, 1]} : vector<2x512xf32> to vector<2x384xf32>
    %234 = arith.negf %233 : vector<2x384xf32>
    %235 = math.exp %234 : vector<2x384xf32>
    %cst_41 = arith.constant 1.000000e+00 : f32
    %236 = vector.broadcast %cst_41 : f32 to vector<2x384xf32>
    %237 = arith.addf %236, %235 : vector<2x384xf32>
    %238 = arith.divf %236, %237 : vector<2x384xf32>
    %239 = vector.extract_strided_slice %232 {offsets = [0, 384], sizes = [2, 128], strides = [1, 1]} : vector<2x512xf32> to vector<2x128xf32>
    %240 = math.tanh %239 : vector<2x128xf32>
    %241 = vector.extract_strided_slice %238 {offsets = [0, 128], sizes = [2, 128], strides = [1, 1]} : vector<2x384xf32> to vector<2x128xf32>
    %242 = arith.mulf %241, %197 : vector<2x128xf32>
    %243 = vector.extract_strided_slice %238 {offsets = [0, 0], sizes = [2, 128], strides = [1, 1]} : vector<2x384xf32> to vector<2x128xf32>
    %244 = arith.mulf %243, %240 : vector<2x128xf32>
    %245 = arith.addf %242, %244 : vector<2x128xf32>
    %246 = vector.extract_strided_slice %238 {offsets = [0, 256], sizes = [2, 128], strides = [1, 1]} : vector<2x384xf32> to vector<2x128xf32>
    %247 = math.tanh %245 : vector<2x128xf32>
    %248 = arith.mulf %246, %247 : vector<2x128xf32>
    %c5_i32 = arith.constant 5 : i32
    %249 = arith.index_cast %c5_i32 : i32 to index
    %c0_42 = arith.constant 0 : index
    %c0_43 = arith.constant 0 : index
    %250 = vector.load %arg1[%249, %c0_42, %c0_43] : memref<8x2x1xf32, #tpu.memory_space<vmem>>, vector<1x2x1xf32>
    %251 = vector.shape_cast %250 : vector<1x2x1xf32> to vector<2x1xf32>
    %252 = vector.broadcast %251 : vector<2x1xf32> to vector<2x512xf32>
    %253 = vector.broadcast %0 : vector<1x512xf32> to vector<2x512xf32>
    %254 = arith.mulf %252, %253 : vector<2x512xf32>
    %255 = arith.truncf %227 : vector<2x128xf32> to vector<2x128xbf16>
    %cst_44 = arith.constant dense<0.000000e+00> : vector<2x512xf32>
    %256 = tpu.matmul %255, %1, %cst_44 {dimension_numbers = #tpu.dot_dimension_numbers<[1], [0], [0], [1], [0, 0, 1, 1], [], []>} : vector<2x128xbf16>, vector<128x512xbf16>, vector<2x512xf32> -> vector<2x512xf32>
    %257 = arith.addf %254, %256 : vector<2x512xf32>
    %258 = vector.broadcast %2 : vector<1x512xf32> to vector<2x512xf32>
    %259 = arith.addf %257, %258 : vector<2x512xf32>
    %260 = vector.extract_strided_slice %259 {offsets = [0, 0], sizes = [2, 384], strides = [1, 1]} : vector<2x512xf32> to vector<2x384xf32>
    %261 = arith.negf %260 : vector<2x384xf32>
    %262 = math.exp %261 : vector<2x384xf32>
    %cst_45 = arith.constant 1.000000e+00 : f32
    %263 = vector.broadcast %cst_45 : f32 to vector<2x384xf32>
    %264 = arith.addf %263, %262 : vector<2x384xf32>
    %265 = arith.divf %263, %264 : vector<2x384xf32>
    %266 = vector.extract_strided_slice %259 {offsets = [0, 384], sizes = [2, 128], strides = [1, 1]} : vector<2x512xf32> to vector<2x128xf32>
    %267 = math.tanh %266 : vector<2x128xf32>
    %268 = vector.extract_strided_slice %265 {offsets = [0, 128], sizes = [2, 128], strides = [1, 1]} : vector<2x384xf32> to vector<2x128xf32>
    %269 = arith.mulf %268, %224 : vector<2x128xf32>
    %270 = vector.extract_strided_slice %265 {offsets = [0, 0], sizes = [2, 128], strides = [1, 1]} : vector<2x384xf32> to vector<2x128xf32>
    %271 = arith.mulf %270, %267 : vector<2x128xf32>
    %272 = arith.addf %269, %271 : vector<2x128xf32>
    %273 = vector.extract_strided_slice %265 {offsets = [0, 256], sizes = [2, 128], strides = [1, 1]} : vector<2x384xf32> to vector<2x128xf32>
    %274 = math.tanh %272 : vector<2x128xf32>
    %275 = arith.mulf %273, %274 : vector<2x128xf32>
    %276 = tpu.concatenate %275, %248 in 1 : vector<2x128xf32>, vector<2x128xf32> -> vector<2x256xf32>
    %277 = arith.truncf %276 : vector<2x256xf32> to vector<2x256xbf16>
    %cst_46 = arith.constant dense<0.000000e+00> : vector<2x512xf32>
    %278 = tpu.matmul %277, %3, %cst_46 {dimension_numbers = #tpu.dot_dimension_numbers<[1], [0], [0], [1], [0, 0, 1, 1], [], []>} : vector<2x256xbf16>, vector<256x512xbf16>, vector<2x512xf32> -> vector<2x512xf32>
    %279 = vector.broadcast %4 : vector<1x512xf32> to vector<2x512xf32>
    %280 = arith.addf %278, %279 : vector<2x512xf32>
    %281 = vector.extract_strided_slice %280 {offsets = [0, 0], sizes = [2, 384], strides = [1, 1]} : vector<2x512xf32> to vector<2x384xf32>
    %282 = arith.negf %281 : vector<2x384xf32>
    %283 = math.exp %282 : vector<2x384xf32>
    %cst_47 = arith.constant 1.000000e+00 : f32
    %284 = vector.broadcast %cst_47 : f32 to vector<2x384xf32>
    %285 = arith.addf %284, %283 : vector<2x384xf32>
    %286 = arith.divf %284, %285 : vector<2x384xf32>
    %287 = vector.extract_strided_slice %280 {offsets = [0, 384], sizes = [2, 128], strides = [1, 1]} : vector<2x512xf32> to vector<2x128xf32>
    %288 = math.tanh %287 : vector<2x128xf32>
    %289 = vector.extract_strided_slice %286 {offsets = [0, 128], sizes = [2, 128], strides = [1, 1]} : vector<2x384xf32> to vector<2x128xf32>
    %290 = arith.mulf %289, %245 : vector<2x128xf32>
    %291 = vector.extract_strided_slice %286 {offsets = [0, 0], sizes = [2, 128], strides = [1, 1]} : vector<2x384xf32> to vector<2x128xf32>
    %292 = arith.mulf %291, %288 : vector<2x128xf32>
    %293 = arith.addf %290, %292 : vector<2x128xf32>
    %294 = vector.extract_strided_slice %286 {offsets = [0, 256], sizes = [2, 128], strides = [1, 1]} : vector<2x384xf32> to vector<2x128xf32>
    %295 = math.tanh %293 : vector<2x128xf32>
    %296 = arith.mulf %294, %295 : vector<2x128xf32>
    %c6_i32 = arith.constant 6 : i32
    %297 = arith.index_cast %c6_i32 : i32 to index
    %c0_48 = arith.constant 0 : index
    %c0_49 = arith.constant 0 : index
    %298 = vector.load %arg1[%297, %c0_48, %c0_49] : memref<8x2x1xf32, #tpu.memory_space<vmem>>, vector<1x2x1xf32>
    %299 = vector.shape_cast %298 : vector<1x2x1xf32> to vector<2x1xf32>
    %300 = vector.broadcast %299 : vector<2x1xf32> to vector<2x512xf32>
    %301 = vector.broadcast %0 : vector<1x512xf32> to vector<2x512xf32>
    %302 = arith.mulf %300, %301 : vector<2x512xf32>
    %303 = arith.truncf %275 : vector<2x128xf32> to vector<2x128xbf16>
    %cst_50 = arith.constant dense<0.000000e+00> : vector<2x512xf32>
    %304 = tpu.matmul %303, %1, %cst_50 {dimension_numbers = #tpu.dot_dimension_numbers<[1], [0], [0], [1], [0, 0, 1, 1], [], []>} : vector<2x128xbf16>, vector<128x512xbf16>, vector<2x512xf32> -> vector<2x512xf32>
    %305 = arith.addf %302, %304 : vector<2x512xf32>
    %306 = vector.broadcast %2 : vector<1x512xf32> to vector<2x512xf32>
    %307 = arith.addf %305, %306 : vector<2x512xf32>
    %308 = vector.extract_strided_slice %307 {offsets = [0, 0], sizes = [2, 384], strides = [1, 1]} : vector<2x512xf32> to vector<2x384xf32>
    %309 = arith.negf %308 : vector<2x384xf32>
    %310 = math.exp %309 : vector<2x384xf32>
    %cst_51 = arith.constant 1.000000e+00 : f32
    %311 = vector.broadcast %cst_51 : f32 to vector<2x384xf32>
    %312 = arith.addf %311, %310 : vector<2x384xf32>
    %313 = arith.divf %311, %312 : vector<2x384xf32>
    %314 = vector.extract_strided_slice %307 {offsets = [0, 384], sizes = [2, 128], strides = [1, 1]} : vector<2x512xf32> to vector<2x128xf32>
    %315 = math.tanh %314 : vector<2x128xf32>
    %316 = vector.extract_strided_slice %313 {offsets = [0, 128], sizes = [2, 128], strides = [1, 1]} : vector<2x384xf32> to vector<2x128xf32>
    %317 = arith.mulf %316, %272 : vector<2x128xf32>
    %318 = vector.extract_strided_slice %313 {offsets = [0, 0], sizes = [2, 128], strides = [1, 1]} : vector<2x384xf32> to vector<2x128xf32>
    %319 = arith.mulf %318, %315 : vector<2x128xf32>
    %320 = arith.addf %317, %319 : vector<2x128xf32>
    %321 = vector.extract_strided_slice %313 {offsets = [0, 256], sizes = [2, 128], strides = [1, 1]} : vector<2x384xf32> to vector<2x128xf32>
    %322 = math.tanh %320 : vector<2x128xf32>
    %323 = arith.mulf %321, %322 : vector<2x128xf32>
    %324 = tpu.concatenate %323, %296 in 1 : vector<2x128xf32>, vector<2x128xf32> -> vector<2x256xf32>
    %325 = arith.truncf %324 : vector<2x256xf32> to vector<2x256xbf16>
    %cst_52 = arith.constant dense<0.000000e+00> : vector<2x512xf32>
    %326 = tpu.matmul %325, %3, %cst_52 {dimension_numbers = #tpu.dot_dimension_numbers<[1], [0], [0], [1], [0, 0, 1, 1], [], []>} : vector<2x256xbf16>, vector<256x512xbf16>, vector<2x512xf32> -> vector<2x512xf32>
    %327 = vector.broadcast %4 : vector<1x512xf32> to vector<2x512xf32>
    %328 = arith.addf %326, %327 : vector<2x512xf32>
    %329 = vector.extract_strided_slice %328 {offsets = [0, 0], sizes = [2, 384], strides = [1, 1]} : vector<2x512xf32> to vector<2x384xf32>
    %330 = arith.negf %329 : vector<2x384xf32>
    %331 = math.exp %330 : vector<2x384xf32>
    %cst_53 = arith.constant 1.000000e+00 : f32
    %332 = vector.broadcast %cst_53 : f32 to vector<2x384xf32>
    %333 = arith.addf %332, %331 : vector<2x384xf32>
    %334 = arith.divf %332, %333 : vector<2x384xf32>
    %335 = vector.extract_strided_slice %328 {offsets = [0, 384], sizes = [2, 128], strides = [1, 1]} : vector<2x512xf32> to vector<2x128xf32>
    %336 = math.tanh %335 : vector<2x128xf32>
    %337 = vector.extract_strided_slice %334 {offsets = [0, 128], sizes = [2, 128], strides = [1, 1]} : vector<2x384xf32> to vector<2x128xf32>
    %338 = arith.mulf %337, %293 : vector<2x128xf32>
    %339 = vector.extract_strided_slice %334 {offsets = [0, 0], sizes = [2, 128], strides = [1, 1]} : vector<2x384xf32> to vector<2x128xf32>
    %340 = arith.mulf %339, %336 : vector<2x128xf32>
    %341 = arith.addf %338, %340 : vector<2x128xf32>
    %342 = vector.extract_strided_slice %334 {offsets = [0, 256], sizes = [2, 128], strides = [1, 1]} : vector<2x384xf32> to vector<2x128xf32>
    %343 = math.tanh %341 : vector<2x128xf32>
    %344 = arith.mulf %342, %343 : vector<2x128xf32>
    %c7_i32 = arith.constant 7 : i32
    %345 = arith.index_cast %c7_i32 : i32 to index
    %c0_54 = arith.constant 0 : index
    %c0_55 = arith.constant 0 : index
    %346 = vector.load %arg1[%345, %c0_54, %c0_55] : memref<8x2x1xf32, #tpu.memory_space<vmem>>, vector<1x2x1xf32>
    %347 = vector.shape_cast %346 : vector<1x2x1xf32> to vector<2x1xf32>
    %348 = vector.broadcast %347 : vector<2x1xf32> to vector<2x512xf32>
    %349 = vector.broadcast %0 : vector<1x512xf32> to vector<2x512xf32>
    %350 = arith.mulf %348, %349 : vector<2x512xf32>
    %351 = arith.truncf %323 : vector<2x128xf32> to vector<2x128xbf16>
    %cst_56 = arith.constant dense<0.000000e+00> : vector<2x512xf32>
    %352 = tpu.matmul %351, %1, %cst_56 {dimension_numbers = #tpu.dot_dimension_numbers<[1], [0], [0], [1], [0, 0, 1, 1], [], []>} : vector<2x128xbf16>, vector<128x512xbf16>, vector<2x512xf32> -> vector<2x512xf32>
    %353 = arith.addf %350, %352 : vector<2x512xf32>
    %354 = vector.broadcast %2 : vector<1x512xf32> to vector<2x512xf32>
    %355 = arith.addf %353, %354 : vector<2x512xf32>
    %356 = vector.extract_strided_slice %355 {offsets = [0, 0], sizes = [2, 384], strides = [1, 1]} : vector<2x512xf32> to vector<2x384xf32>
    %357 = arith.negf %356 : vector<2x384xf32>
    %358 = math.exp %357 : vector<2x384xf32>
    %cst_57 = arith.constant 1.000000e+00 : f32
    %359 = vector.broadcast %cst_57 : f32 to vector<2x384xf32>
    %360 = arith.addf %359, %358 : vector<2x384xf32>
    %361 = arith.divf %359, %360 : vector<2x384xf32>
    %362 = vector.extract_strided_slice %355 {offsets = [0, 384], sizes = [2, 128], strides = [1, 1]} : vector<2x512xf32> to vector<2x128xf32>
    %363 = math.tanh %362 : vector<2x128xf32>
    %364 = vector.extract_strided_slice %361 {offsets = [0, 128], sizes = [2, 128], strides = [1, 1]} : vector<2x384xf32> to vector<2x128xf32>
    %365 = arith.mulf %364, %320 : vector<2x128xf32>
    %366 = vector.extract_strided_slice %361 {offsets = [0, 0], sizes = [2, 128], strides = [1, 1]} : vector<2x384xf32> to vector<2x128xf32>
    %367 = arith.mulf %366, %363 : vector<2x128xf32>
    %368 = arith.addf %365, %367 : vector<2x128xf32>
    %369 = vector.extract_strided_slice %361 {offsets = [0, 256], sizes = [2, 128], strides = [1, 1]} : vector<2x384xf32> to vector<2x128xf32>
    %370 = math.tanh %368 : vector<2x128xf32>
    %371 = arith.mulf %369, %370 : vector<2x128xf32>
    %372 = tpu.concatenate %371, %344 in 1 : vector<2x128xf32>, vector<2x128xf32> -> vector<2x256xf32>
    %373 = arith.truncf %372 : vector<2x256xf32> to vector<2x256xbf16>
    %cst_58 = arith.constant dense<0.000000e+00> : vector<2x512xf32>
    %374 = tpu.matmul %373, %3, %cst_58 {dimension_numbers = #tpu.dot_dimension_numbers<[1], [0], [0], [1], [0, 0, 1, 1], [], []>} : vector<2x256xbf16>, vector<256x512xbf16>, vector<2x512xf32> -> vector<2x512xf32>
    %375 = vector.broadcast %4 : vector<1x512xf32> to vector<2x512xf32>
    %376 = arith.addf %374, %375 : vector<2x512xf32>
    %377 = vector.extract_strided_slice %376 {offsets = [0, 0], sizes = [2, 384], strides = [1, 1]} : vector<2x512xf32> to vector<2x384xf32>
    %378 = arith.negf %377 : vector<2x384xf32>
    %379 = math.exp %378 : vector<2x384xf32>
    %cst_59 = arith.constant 1.000000e+00 : f32
    %380 = vector.broadcast %cst_59 : f32 to vector<2x384xf32>
    %381 = arith.addf %380, %379 : vector<2x384xf32>
    %382 = arith.divf %380, %381 : vector<2x384xf32>
    %383 = vector.extract_strided_slice %376 {offsets = [0, 384], sizes = [2, 128], strides = [1, 1]} : vector<2x512xf32> to vector<2x128xf32>
    %384 = math.tanh %383 : vector<2x128xf32>
    %385 = vector.extract_strided_slice %382 {offsets = [0, 128], sizes = [2, 128], strides = [1, 1]} : vector<2x384xf32> to vector<2x128xf32>
    %386 = arith.mulf %385, %341 : vector<2x128xf32>
    %387 = vector.extract_strided_slice %382 {offsets = [0, 0], sizes = [2, 128], strides = [1, 1]} : vector<2x384xf32> to vector<2x128xf32>
    %388 = arith.mulf %387, %384 : vector<2x128xf32>
    %389 = arith.addf %386, %388 : vector<2x128xf32>
    %390 = vector.extract_strided_slice %382 {offsets = [0, 256], sizes = [2, 128], strides = [1, 1]} : vector<2x384xf32> to vector<2x128xf32>
    %391 = math.tanh %389 : vector<2x128xf32>
    %392 = arith.mulf %390, %391 : vector<2x128xf32>
    %c8_i32 = arith.constant 8 : i32
    %c0_60 = arith.constant 0 : index
    %c0_61 = arith.constant 0 : index
    %393 = vector.load %arg7[%c0_60, %c0_61] : memref<128x8xf32, #tpu.memory_space<vmem>>, vector<128x8xf32>
    %cst_62 = arith.constant dense<0.000000e+00> : vector<2x8xf32>
    %394 = tpu.matmul %392, %393, %cst_62 {dimension_numbers = #tpu.dot_dimension_numbers<[1], [0], [0], [1], [0, 0, 1, 1], [], []>} : vector<2x128xf32>, vector<128x8xf32>, vector<2x8xf32> -> vector<2x8xf32>
    %c0_63 = arith.constant 0 : index
    %c0_64 = arith.constant 0 : index
    %395 = vector.load %arg8[%c0_63, %c0_64] : memref<1x8xf32, #tpu.memory_space<vmem>>, vector<1x8xf32>
    %396 = vector.broadcast %395 : vector<1x8xf32> to vector<2x8xf32>
    %397 = arith.addf %394, %396 : vector<2x8xf32>
    %c0_65 = arith.constant 0 : index
    %c0_66 = arith.constant 0 : index
    %398 = vector.load %arg9[%c0_65, %c0_66] : memref<2x8xf32, #tpu.memory_space<vmem>>, vector<2x8xf32>
    tpu.vector_store %arg9[%c0_65, %c0_66], %397 {strides = array<i32>} : memref<2x8xf32, #tpu.memory_space<vmem>>, vector<2x8xf32>,
    return
  }
  func.func @transform_0(%arg0: i32) -> (i32, i32, i32) {
    %c0_i32 = arith.constant 0 : i32
    %c0_i32_0 = arith.constant 0 : i32
    %c0_i32_1 = arith.constant 0 : i32
    %c0_i32_2 = arith.constant 0 : i32
    return %c0_i32, %c0_i32_0, %c0_i32_1 : i32, i32, i32
  }
  func.func @transform_1(%arg0: i32) -> (i32, i32) {
    %c0_i32 = arith.constant 0 : i32
    %c0_i32_0 = arith.constant 0 : i32
    %c0_i32_1 = arith.constant 0 : i32
    return %c0_i32, %c0_i32_0 : i32, i32
  }
  func.func @transform_2(%arg0: i32) -> (i32, i32) {
    %c0_i32 = arith.constant 0 : i32
    %c0_i32_0 = arith.constant 0 : i32
    %c0_i32_1 = arith.constant 0 : i32
    return %c0_i32, %c0_i32_0 : i32, i32
  }
  func.func @transform_3(%arg0: i32) -> (i32, i32) {
    %c0_i32 = arith.constant 0 : i32
    %c0_i32_0 = arith.constant 0 : i32
    %c0_i32_1 = arith.constant 0 : i32
    return %c0_i32, %c0_i32_0 : i32, i32
  }
  func.func @transform_4(%arg0: i32) -> (i32, i32) {
    %c0_i32 = arith.constant 0 : i32
    %c0_i32_0 = arith.constant 0 : i32
    %c0_i32_1 = arith.constant 0 : i32
    return %c0_i32, %c0_i32_0 : i32, i32
  }
  func.func @transform_5(%arg0: i32) -> (i32, i32) {
    %c0_i32 = arith.constant 0 : i32
    %c0_i32_0 = arith.constant 0 : i32
    %c0_i32_1 = arith.constant 0 : i32
    return %c0_i32, %c0_i32_0 : i32, i32
  }
  func.func @transform_6(%arg0: i32) -> (i32, i32) {
    %c0_i32 = arith.constant 0 : i32
    %c0_i32_0 = arith.constant 0 : i32
    %c0_i32_1 = arith.constant 0 : i32
    return %c0_i32, %c0_i32_0 : i32, i32
  }
  func.func @transform_7(%arg0: i32) -> (i32, i32) {
    %c0_i32 = arith.constant 0 : i32
    %c0_i32_0 = arith.constant 0 : i32
    %c0_i32_1 = arith.constant 0 : i32
    return %c0_i32, %c0_i32_0 : i32, i32
  }
  func.func @transform_8(%arg0: i32) -> (i32, i32) {
    %c0_i32 = arith.constant 0 : i32
    %c0_i32_0 = arith.constant 0 : i32
    %c0_i32_1 = arith.constant 0 : i32
    return %c0_i32, %c0_i32_0 : i32, i32
  }
}

</mosaic_0001>

<llo_original>
// kernel: my_lstm_forward.1
$region0: #{my_lstm_forward.1}
  #allocation0 [shape = 'u32[]', space=smem, size = 0x4, offset = 0x4, fixed_abs, tag = 'smem constant byte address 0x4 - core index']
  #allocation1 [shape = 'u32[144,128]{1,0:T(1,128)}', space=vmem, size = 0x12000, scoped, tag = 'internal scratch']
  %s0 = inlined_call_operand.vmem [shape: f32[8,2,1], index: 0, kind: input, shape index: {}]
  %s1 = inlined_call_operand.vmem [shape: f32[1,512], index: 1, kind: input, shape index: {}]
  %s2 = inlined_call_operand.hbm [shape: bf16[128,512], index: 2, kind: input, shape index: {}]
  %s3 = inlined_call_operand.vmem [shape: f32[1,512], index: 3, kind: input, shape index: {}]
  %s4 = inlined_call_operand.hbm [shape: bf16[256,512], index: 4, kind: input, shape index: {}]
  %s5 = inlined_call_operand.vmem [shape: f32[1,512], index: 5, kind: input, shape index: {}]
  %s6 = inlined_call_operand.vmem [shape: f32[128,8], index: 6, kind: input, shape index: {}]
  %s7 = inlined_call_operand.vmem [shape: f32[1,8], index: 7, kind: input, shape index: {}]
  %s8 = inlined_call_operand.hbm [shape: f32[2,8], index: 8, kind: output, shape index: {}]
  %s9 = sld [smem:[#allocation0]]
  $region50: #{my_lstm_forward.1} parent=0
    _
  %s11 = ssub.s32 1, %s9
  %s12 = scalar_select 0, %s11, %s9
  $region1: #{my_lstm_forward.1} parent=0
    #allocation2 [shape = 'u8[131072]{0}', space=vmem, size = 0x20000, scoped, tag = 'input window, operand 2, single buffered']
    #allocation3 [shape = 's32[1]{0}', space=sflag, size = 0x4, scoped, tag = 'scoped memory for my_lstm_forward.1']
    #allocation4 [shape = 's32[1]{0}', space=sflag, size = 0x4, scoped, tag = 'scoped memory for my_lstm_forward.1']
    #allocation5 [shape = 'u8[262144]{0}', space=vmem, size = 0x40000, scoped, tag = 'input window, operand 4, single buffered']
    #allocation6 [shape = 's32[1]{0}', space=sflag, size = 0x4, scoped, tag = 'scoped memory for my_lstm_forward.1']
    #allocation7 [shape = 'u8[1024]{0}', space=vmem, size = 0x400, scoped, tag = 'output window, operand 0, single buffered']
    %13 = vsyncpa [#allocation3], 0
    %14 = vsyncpa [#allocation6], 0
    %15 = vsyncpa [#allocation4], 0
    // Predicated region
    $region2: #{my_lstm_forward.1} parent=1 // pred_check
      _
    $region3: #{my_lstm_forward.1} parent=1 // pred_check_branch
      %17 = sbr.rel (0) target = $region5
    $region4: #{my_lstm_forward.1} parent=1 // pred_region
      _
    $region5: #{my_lstm_forward.1} parent=1 // pred_fallthru
      _
    // Predicated region
    $region6: #{my_lstm_forward.1} parent=1 // pred_check
      _
    $region7: #{my_lstm_forward.1} parent=1 // pred_check_branch
      %19 = sbr.rel (0) target = $region9
    $region8: #{my_lstm_forward.1} parent=1 // pred_region
      _
    $region9: #{my_lstm_forward.1} parent=1 // pred_fallthru
      _
    // Predicated region
    $region10: #{my_lstm_forward.1} parent=1 // pred_check
      _
    $region11: #{my_lstm_forward.1} parent=1 // pred_check_branch
      %21 = sbr.rel (0) target = $region13
    $region12: #{my_lstm_forward.1} parent=1 // pred_region
      %s23 = ssub.s32 4096, 4096
      %24 = vsyncadd [#allocation3], %s23
      %s25 = sshll.u32 [#allocation2], 4
      %s26 = int_to_ptr.vmem [resolvable:$true] %s25
      %31 = dma.hbm_to_vmem [thread:$0]  %s2, 4096, %s26, [#allocation3], 256, 256, 16
    $region13: #{my_lstm_forward.1} parent=1 // pred_fallthru
      _
    // Predicated region
    $region14: #{my_lstm_forward.1} parent=1 // pred_check
      _
    $region15: #{my_lstm_forward.1} parent=1 // pred_check_branch
      %33 = sbr.rel (0) target = $region17
    $region16: #{my_lstm_forward.1} parent=1 // pred_region
      _
    $region17: #{my_lstm_forward.1} parent=1 // pred_fallthru
      _
    // Predicated region
    $region18: #{my_lstm_forward.1} parent=1 // pred_check
      _
    $region19: #{my_lstm_forward.1} parent=1 // pred_check_branch
      %35 = sbr.rel (0) target = $region21
    $region20: #{my_lstm_forward.1} parent=1 // pred_region
      %s37 = ssub.s32 8192, 8192
      %38 = vsyncadd [#allocation6], %s37
      %s39 = sshll.u32 [#allocation5], 4
      %s40 = int_to_ptr.vmem [resolvable:$true] %s39
      %45 = dma.hbm_to_vmem [thread:$0]  %s4, 8192, %s40, [#allocation6], 256, 256, 16
    $region21: #{my_lstm_forward.1} parent=1 // pred_fallthru
      _
    // Predicated region
    $region22: #{my_lstm_forward.1} parent=1 // pred_check
      _
    $region23: #{my_lstm_forward.1} parent=1 // pred_check_branch
      %47 = sbr.rel (0) target = $region25
    $region24: #{my_lstm_forward.1} parent=1 // pred_region
      _
    $region25: #{my_lstm_forward.1} parent=1 // pred_fallthru
      _
    // Predicated region
    $region26: #{my_lstm_forward.1} parent=1 // pred_check
      _
    $region27: #{my_lstm_forward.1} parent=1 // pred_check_branch
      %49 = sbr.rel (0) target = $region29
    $region28: #{my_lstm_forward.1} parent=1 // pred_region
      _
    $region29: #{my_lstm_forward.1} parent=1 // pred_fallthru
      _
    // Predicated region
    $region30: #{my_lstm_forward.1} parent=1 // pred_check
      _
    $region31: #{my_lstm_forward.1} parent=1 // pred_check_branch
      %51 = sbr.rel (0) target = $region33
    $region32: #{my_lstm_forward.1} parent=1 // pred_region
      _
    $region33: #{my_lstm_forward.1} parent=1 // pred_fallthru
      _
    // Predicated region
    $region34: #{my_lstm_forward.1} parent=1 // pred_check
      _
    $region35: #{my_lstm_forward.1} parent=1 // pred_check_branch
      %53 = sbr.rel (0) target = $region37
    $region36: #{my_lstm_forward.1} parent=1 // pred_region
      %54 = dma.done [#allocation3], 4096
    $region37: #{my_lstm_forward.1} parent=1 // pred_fallthru
      _
    // Predicated region
    $region38: #{my_lstm_forward.1} parent=1 // pred_check
      _
    $region39: #{my_lstm_forward.1} parent=1 // pred_check_branch
      %56 = sbr.rel (0) target = $region41
    $region40: #{my_lstm_forward.1} parent=1 // pred_region
      %57 = dma.done [#allocation6], 8192
    $region41: #{my_lstm_forward.1} parent=1 // pred_fallthru
      _
    %v59 = vld [vmem:[%s1] sm:$0xf]
    %v60 = vld [vmem:[#allocation2] sm:$0xff]
    %v61 = vld [vmem:[#allocation2 + $0x8] sm:$0xff]
    %v62 = vld [vmem:[#allocation2 + $0x10] sm:$0xff]
    %v63 = vld [vmem:[#allocation2 + $0x18] sm:$0xff]
    %v64 = vld [vmem:[#allocation2 + $0x20] sm:$0xff]
    %v65 = vld [vmem:[#allocation2 + $0x28] sm:$0xff]
    %v66 = vld [vmem:[#allocation2 + $0x30] sm:$0xff]
    %v67 = vld [vmem:[#allocation2 + $0x38] sm:$0xff]
    %v68 = vld [vmem:[#allocation2 + $0x40] sm:$0xff]
    %v69 = vld [vmem:[#allocation2 + $0x48] sm:$0xff]
    %v70 = vld [vmem:[#allocation2 + $0x50] sm:$0xff]
    %v71 = vld [vmem:[#allocation2 + $0x58] sm:$0xff]
    %v72 = vld [vmem:[#allocation2 + $0x60] sm:$0xff]
    %v73 = vld [vmem:[#allocation2 + $0x68] sm:$0xff]
    %v74 = vld [vmem:[#allocation2 + $0x70] sm:$0xff]
    %v75 = vld [vmem:[#allocation2 + $0x78] sm:$0xff]
    %v76 = vld [vmem:[#allocation2 + $0x80] sm:$0xff]
    %v77 = vld [vmem:[#allocation2 + $0x88] sm:$0xff]
    %v78 = vld [vmem:[#allocation2 + $0x90] sm:$0xff]
    %v79 = vld [vmem:[#allocation2 + $0x98] sm:$0xff]
    %v80 = vld [vmem:[#allocation2 + $0xa0] sm:$0xff]
    %v81 = vld [vmem:[#allocation2 + $0xa8] sm:$0xff]
    %v82 = vld [vmem:[#allocation2 + $0xb0] sm:$0xff]
    %v83 = vld [vmem:[#allocation2 + $0xb8] sm:$0xff]
    %v84 = vld [vmem:[#allocation2 + $0xc0] sm:$0xff]
    %v85 = vld [vmem:[#allocation2 + $0xc8] sm:$0xff]
    %v86 = vld [vmem:[#allocation2 + $0xd0] sm:$0xff]
    %v87 = vld [vmem:[#allocation2 + $0xd8] sm:$0xff]
    %v88 = vld [vmem:[#allocation2 + $0xe0] sm:$0xff]
    %v89 = vld [vmem:[#allocation2 + $0xe8] sm:$0xff]
    %v90 = vld [vmem:[#allocation2 + $0xf0] sm:$0xff]
    %v91 = vld [vmem:[#allocation2 + $0xf8] sm:$0xff]
    %v92 = vld [vmem:[%s3] sm:$0xf]
    %v93 = vld [vmem:[#allocation5] sm:$0xff]
    %v94 = vld [vmem:[#allocation5 + $0x8] sm:$0xff]
    %v95 = vld [vmem:[#allocation5 + $0x10] sm:$0xff]
    %v96 = vld [vmem:[#allocation5 + $0x18] sm:$0xff]
    %v97 = vld [vmem:[#allocation5 + $0x20] sm:$0xff]
    %v98 = vld [vmem:[#allocation5 + $0x28] sm:$0xff]
    %v99 = vld [vmem:[#allocation5 + $0x30] sm:$0xff]
    %v100 = vld [vmem:[#allocation5 + $0x38] sm:$0xff]
    %v101 = vld [vmem:[#allocation5 + $0x40] sm:$0xff]
    %v102 = vld [vmem:[#allocation5 + $0x48] sm:$0xff]
    %v103 = vld [vmem:[#allocation5 + $0x50] sm:$0xff]
    %v104 = vld [vmem:[#allocation5 + $0x58] sm:$0xff]
    %v105 = vld [vmem:[#allocation5 + $0x60] sm:$0xff]
    %v106 = vld [vmem:[#allocation5 + $0x68] sm:$0xff]
    %v107 = vld [vmem:[#allocation5 + $0x70] sm:$0xff]
    %v108 = vld [vmem:[#allocation5 + $0x78] sm:$0xff]
    %v109 = vld [vmem:[#allocation5 + $0x80] sm:$0xff]
    %v110 = vld [vmem:[#allocation5 + $0x88] sm:$0xff]
    %v111 = vld [vmem:[#allocation5 + $0x90] sm:$0xff]
    %v112 = vld [vmem:[#allocation5 + $0x98] sm:$0xff]
    %v113 = vld [vmem:[#allocation5 + $0xa0] sm:$0xff]
    %v114 = vld [vmem:[#allocation5 + $0xa8] sm:$0xff]
    %v115 = vld [vmem:[#allocation5 + $0xb0] sm:$0xff]
    %v116 = vld [vmem:[#allocation5 + $0xb8] sm:$0xff]
    %v117 = vld [vmem:[#allocation5 + $0xc0] sm:$0xff]
    %v118 = vld [vmem:[#allocation5 + $0xc8] sm:$0xff]
    %v119 = vld [vmem:[#allocation5 + $0xd0] sm:$0xff]
    %v120 = vld [vmem:[#allocation5 + $0xd8] sm:$0xff]
    %v121 = vld [vmem:[#allocation5 + $0xe0] sm:$0xff]
    %v122 = vld [vmem:[#allocation5 + $0xe8] sm:$0xff]
    %v123 = vld [vmem:[#allocation5 + $0xf0] sm:$0xff]
    %v124 = vld [vmem:[#allocation5 + $0xf8] sm:$0xff]
    %v125 = vld [vmem:[#allocation5 + $0x100] sm:$0xff]
    %v126 = vld [vmem:[#allocation5 + $0x108] sm:$0xff]
    %v127 = vld [vmem:[#allocation5 + $0x110] sm:$0xff]
    %v128 = vld [vmem:[#allocation5 + $0x118] sm:$0xff]
    %v129 = vld [vmem:[#allocation5 + $0x120] sm:$0xff]
    %v130 = vld [vmem:[#allocation5 + $0x128] sm:$0xff]
    %v131 = vld [vmem:[#allocation5 + $0x130] sm:$0xff]
    %v132 = vld [vmem:[#allocation5 + $0x138] sm:$0xff]
    %v133 = vld [vmem:[#allocation5 + $0x140] sm:$0xff]
    %v134 = vld [vmem:[#allocation5 + $0x148] sm:$0xff]
    %v135 = vld [vmem:[#allocation5 + $0x150] sm:$0xff]
    %v136 = vld [vmem:[#allocation5 + $0x158] sm:$0xff]
    %v137 = vld [vmem:[#allocation5 + $0x160] sm:$0xff]
    %v138 = vld [vmem:[#allocation5 + $0x168] sm:$0xff]
    %v139 = vld [vmem:[#allocation5 + $0x170] sm:$0xff]
    %v140 = vld [vmem:[#allocation5 + $0x178] sm:$0xff]
    %v141 = vld [vmem:[#allocation5 + $0x180] sm:$0xff]
    %v142 = vld [vmem:[#allocation5 + $0x188] sm:$0xff]
    %v143 = vld [vmem:[#allocation5 + $0x190] sm:$0xff]
    %v144 = vld [vmem:[#allocation5 + $0x198] sm:$0xff]
    %v145 = vld [vmem:[#allocation5 + $0x1a0] sm:$0xff]
    %v146 = vld [vmem:[#allocation5 + $0x1a8] sm:$0xff]
    %v147 = vld [vmem:[#allocation5 + $0x1b0] sm:$0xff]
    %v148 = vld [vmem:[#allocation5 + $0x1b8] sm:$0xff]
    %v149 = vld [vmem:[#allocation5 + $0x1c0] sm:$0xff]
    %v150 = vld [vmem:[#allocation5 + $0x1c8] sm:$0xff]
    %v151 = vld [vmem:[#allocation5 + $0x1d0] sm:$0xff]
    %v152 = vld [vmem:[#allocation5 + $0x1d8] sm:$0xff]
    %v153 = vld [vmem:[#allocation5 + $0x1e0] sm:$0xff]
    %v154 = vld [vmem:[#allocation5 + $0x1e8] sm:$0xff]
    %v155 = vld [vmem:[#allocation5 + $0x1f0] sm:$0xff]
    %v156 = vld [vmem:[#allocation5 + $0x1f8] sm:$0xff]
    %v157 = vld [vmem:[%s5] sm:$0xf]
    %v158 = vld [vmem:[%s0] sm:$0x3]
    %160 = vset.pattern.permute.xlu0 0
    %161 = vperm.xlu0 %160, %v158
    %v162 = vpop.permute.xlu0 %161
    %v165 = vlaneseq
    %v166 = vshrl.u32 %v165, 7
    %v167 = vsub.s32 0, %v166
    %v168 = vrot.slane %v59, %v167
    %v169 = vlaneseq
    %v170 = vshrl.u32 %v169, 7
    %v171 = vsub.s32 1, %v170
    %v172 = vrot.slane %v59, %v171
    %v173 = vlaneseq
    %v174 = vshrl.u32 %v173, 7
    %v175 = vsub.s32 2, %v174
    %v176 = vrot.slane %v59, %v175
    %v177 = vlaneseq
    %v178 = vshrl.u32 %v177, 7
    %v179 = vsub.s32 3, %v178
    %v180 = vrot.slane %v59, %v179
    %v185 = vmul.f32 %v162, %v168
    %v186 = vmul.f32 %v162, %v172
    %v187 = vmul.f32 %v162, %v176
    %v188 = vmul.f32 %v162, %v180
    %v221 = vunpack.c.l.b16 %v60
    %v222 = vunpack.c.h.b16 %v60
    %v223 = vunpack.c.l.b16 %v61
    %v224 = vunpack.c.h.b16 %v61
    %v225 = vunpack.c.l.b16 %v62
    %v226 = vunpack.c.h.b16 %v62
    %v227 = vunpack.c.l.b16 %v63
    %v228 = vunpack.c.h.b16 %v63
    %v229 = vunpack.c.l.b16 %v64
    %v230 = vunpack.c.h.b16 %v64
    %v231 = vunpack.c.l.b16 %v65
    %v232 = vunpack.c.h.b16 %v65
    %v233 = vunpack.c.l.b16 %v66
    %v234 = vunpack.c.h.b16 %v66
    %v235 = vunpack.c.l.b16 %v67
    %v236 = vunpack.c.h.b16 %v67
    %v237 = vunpack.c.l.b16 %v68
    %v238 = vunpack.c.h.b16 %v68
    %v239 = vunpack.c.l.b16 %v69
    %v240 = vunpack.c.h.b16 %v69
    %v241 = vunpack.c.l.b16 %v70
    %v242 = vunpack.c.h.b16 %v70
    %v243 = vunpack.c.l.b16 %v71
    %v244 = vunpack.c.h.b16 %v71
    %v245 = vunpack.c.l.b16 %v72
    %v246 = vunpack.c.h.b16 %v72
    %v247 = vunpack.c.l.b16 %v73
    %v248 = vunpack.c.h.b16 %v73
    %v249 = vunpack.c.l.b16 %v74
    %v250 = vunpack.c.h.b16 %v74
    %v251 = vunpack.c.l.b16 %v75
    %v252 = vunpack.c.h.b16 %v75
    %v253 = vunpack.c.l.b16 %v76
    %v254 = vunpack.c.h.b16 %v76
    %v255 = vunpack.c.l.b16 %v77
    %v256 = vunpack.c.h.b16 %v77
    %v257 = vunpack.c.l.b16 %v78
    %v258 = vunpack.c.h.b16 %v78
    %v259 = vunpack.c.l.b16 %v79
    %v260 = vunpack.c.h.b16 %v79
    %v261 = vunpack.c.l.b16 %v80
    %v262 = vunpack.c.h.b16 %v80
    %v263 = vunpack.c.l.b16 %v81
    %v264 = vunpack.c.h.b16 %v81
    %v265 = vunpack.c.l.b16 %v82
    %v266 = vunpack.c.h.b16 %v82
    %v267 = vunpack.c.l.b16 %v83
    %v268 = vunpack.c.h.b16 %v83
    %v269 = vunpack.c.l.b16 %v84
    %v270 = vunpack.c.h.b16 %v84
    %v271 = vunpack.c.l.b16 %v85
    %v272 = vunpack.c.h.b16 %v85
    %v273 = vunpack.c.l.b16 %v86
    %v274 = vunpack.c.h.b16 %v86
    %v275 = vunpack.c.l.b16 %v87
    %v276 = vunpack.c.h.b16 %v87
    %v277 = vunpack.c.l.b16 %v88
    %v278 = vunpack.c.h.b16 %v88
    %v279 = vunpack.c.l.b16 %v89
    %v280 = vunpack.c.h.b16 %v89
    %v281 = vunpack.c.l.b16 %v90
    %v282 = vunpack.c.h.b16 %v90
    %v283 = vunpack.c.l.b16 %v91
    %v284 = vunpack.c.h.b16 %v91
    %v285 = vpack.c.b16 %v225, %v221
    %v286 = vpack.c.b16 %v226, %v222
    %v287 = vpack.c.b16 %v227, %v223
    %v288 = vpack.c.b16 %v228, %v224
    %v289 = vpack.c.b16 %v233, %v229
    %v290 = vpack.c.b16 %v234, %v230
    %v291 = vpack.c.b16 %v235, %v231
    %v292 = vpack.c.b16 %v236, %v232
    %v293 = vpack.c.b16 %v241, %v237
    %v294 = vpack.c.b16 %v242, %v238
    %v295 = vpack.c.b16 %v243, %v239
    %v296 = vpack.c.b16 %v244, %v240
    %v297 = vpack.c.b16 %v249, %v245
    %v298 = vpack.c.b16 %v250, %v246
    %v299 = vpack.c.b16 %v251, %v247
    %v300 = vpack.c.b16 %v252, %v248
    %v301 = vpack.c.b16 %v257, %v253
    %v302 = vpack.c.b16 %v258, %v254
    %v303 = vpack.c.b16 %v259, %v255
    %v304 = vpack.c.b16 %v260, %v256
    %v305 = vpack.c.b16 %v265, %v261
    %v306 = vpack.c.b16 %v266, %v262
    %v307 = vpack.c.b16 %v267, %v263
    %v308 = vpack.c.b16 %v268, %v264
    %v309 = vpack.c.b16 %v273, %v269
    %v310 = vpack.c.b16 %v274, %v270
    %v311 = vpack.c.b16 %v275, %v271
    %v312 = vpack.c.b16 %v276, %v272
    %v313 = vpack.c.b16 %v281, %v277
    %v314 = vpack.c.b16 %v282, %v278
    %v315 = vpack.c.b16 %v283, %v279
    %v316 = vpack.c.b16 %v284, %v280
    %349 = vmatprep.subr.bf16.mxu0 %v286
    %350 = vmatpush1.bf16.msra.mxu0 %v285
    %351 = vmatprep.subr.bf16.mxu0 %v290
    %352 = vmatpush1.bf16.msra.mxu0 %v289
    %353 = vmatprep.subr.bf16.mxu0 %v294
    %354 = vmatpush1.bf16.msra.mxu0 %v293
    %355 = vmatprep.subr.bf16.mxu0 %v298
    %356 = vmatpush1.bf16.msra.mxu0 %v297
    %357 = vmatprep.subr.bf16.mxu0 %v302
    %358 = vmatpush1.bf16.msra.mxu0 %v301
    %359 = vmatprep.subr.bf16.mxu0 %v306
    %360 = vmatpush1.bf16.msra.mxu0 %v305
    %361 = vmatprep.subr.bf16.mxu0 %v310
    %362 = vmatpush1.bf16.msra.mxu0 %v309
    %363 = vmatprep.subr.bf16.mxu0 %v314
    %364 = vmatpush1.bf16.msra.mxu0 %v313
    %365 = vmatprep.subr.bf16.mxu0 0
    %366 = vmatpush1.bf16.msra.mxu0 0
    %367 = vmatprep.subr.bf16.mxu0 0
    %368 = vmatpush1.bf16.msra.mxu0 0
    %369 = vmatprep.subr.bf16.mxu0 0
    %370 = vmatpush1.bf16.msra.mxu0 0
    %371 = vmatprep.subr.bf16.mxu0 0
    %372 = vmatpush1.bf16.msra.mxu0 0
    %373 = vmatprep.subr.bf16.mxu0 0
    %374 = vmatpush1.bf16.msra.mxu0 0
    %375 = vmatprep.subr.bf16.mxu0 0
    %376 = vmatpush1.bf16.msra.mxu0 0
    %377 = vmatprep.subr.bf16.mxu0 0
    %378 = vmatpush1.bf16.msra.mxu0 0
    %379 = vmatprep.subr.bf16.mxu0 0
    %380 = vmatpush1.bf16.msra.mxu0 0
    %381 = vmatprep.mubr.bf16.mxu0 0
    %382 = vmatmul.mubr.bf16.gmra.mrb[0].mxu0 0
    %v383 = vpop.f32.mrb[0].mxu0
    %v384 = vadd.f32 0.0, %v383
    %v385 = vpop.f32.mrb[0].mxu0
    %v386 = vadd.f32 0.0, %v385
    %v387 = vpop.f32.mrb[0].mxu0
    %v388 = vpop.f32.mrb[0].mxu0
    %389 = vdwg.mxu0
    %390 = vmatprep.subr.bf16.mxu0 %v288
    %391 = vmatpush1.bf16.msra.mxu0 %v287
    %392 = vmatprep.subr.bf16.mxu0 %v292
    %393 = vmatpush1.bf16.msra.mxu0 %v291
    %394 = vmatprep.subr.bf16.mxu0 %v296
    %395 = vmatpush1.bf16.msra.mxu0 %v295
    %396 = vmatprep.subr.bf16.mxu0 %v300
    %397 = vmatpush1.bf16.msra.mxu0 %v299
    %398 = vmatprep.subr.bf16.mxu0 %v304
    %399 = vmatpush1.bf16.msra.mxu0 %v303
    %400 = vmatprep.subr.bf16.mxu0 %v308
    %401 = vmatpush1.bf16.msra.mxu0 %v307
    %402 = vmatprep.subr.bf16.mxu0 %v312
    %403 = vmatpush1.bf16.msra.mxu0 %v311
    %404 = vmatprep.subr.bf16.mxu0 %v316
    %405 = vmatpush1.bf16.msra.mxu0 %v315
    %406 = vmatprep.subr.bf16.mxu0 0
    %407 = vmatpush1.bf16.msra.mxu0 0
    %408 = vmatprep.subr.bf16.mxu0 0
    %409 = vmatpush1.bf16.msra.mxu0 0
    %410 = vmatprep.subr.bf16.mxu0 0
    %411 = vmatpush1.bf16.msra.mxu0 0
    %412 = vmatprep.subr.bf16.mxu0 0
    %413 = vmatpush1.bf16.msra.mxu0 0
    %414 = vmatprep.subr.bf16.mxu0 0
    %415 = vmatpush1.bf16.msra.mxu0 0
    %416 = vmatprep.subr.bf16.mxu0 0
    %417 = vmatpush1.bf16.msra.mxu0 0
    %418 = vmatprep.subr.bf16.mxu0 0
    %419 = vmatpush1.bf16.msra.mxu0 0
    %420 = vmatprep.subr.bf16.mxu0 0
    %421 = vmatpush1.bf16.msra.mxu0 0
    %422 = vmatprep.mubr.bf16.mxu0 0
    %423 = vmatmul.mubr.bf16.gmra.mrb[0].mxu0 0
    %v424 = vpop.f32.mrb[0].mxu0
    %v425 = vadd.f32 0.0, %v424
    %v426 = vpop.f32.mrb[0].mxu0
    %v427 = vadd.f32 0.0, %v426
    %v428 = vpop.f32.mrb[0].mxu0
    %v429 = vpop.f32.mrb[0].mxu0
    %430 = vdwg.mxu0
    %v431 = vadd.f32 %v185, %v384
    %v432 = vadd.f32 %v186, %v386
    %v433 = vadd.f32 %v187, %v425
    %v434 = vadd.f32 %v188, %v427
    %v436 = vlaneseq
    %v437 = vshrl.u32 %v436, 7
    %v438 = vsub.s32 0, %v437
    %v439 = vrot.slane %v92, %v438
    %v440 = vlaneseq
    %v441 = vshrl.u32 %v440, 7
    %v442 = vsub.s32 1, %v441
    %v443 = vrot.slane %v92, %v442
    %v444 = vlaneseq
    %v445 = vshrl.u32 %v444, 7
    %v446 = vsub.s32 2, %v445
    %v447 = vrot.slane %v92, %v446
    %v448 = vlaneseq
    %v449 = vshrl.u32 %v448, 7
    %v450 = vsub.s32 3, %v449
    %v451 = vrot.slane %v92, %v450
    %v456 = vadd.f32 %v431, %v439
    %v457 = vadd.f32 %v432, %v443
    %v458 = vadd.f32 %v433, %v447
    %v459 = vadd.f32 %v434, %v451
    %v460 = vxor.u32 %v456, 2147483648
    %v461 = vxor.u32 %v457, 2147483648
    %v462 = vxor.u32 %v458, 2147483648
    %v463 = vmul.f32 %v460, 1.442695
    %v464 = vpow.pop %v463
    %v465 = vmul.f32 %v461, 1.442695
    %v466 = vpow.pop %v465
    %v467 = vmul.f32 %v462, 1.442695
    %v468 = vpow.pop %v467
    %v469 = vadd.f32 %v464, 1.0
    %v470 = vadd.f32 %v466, 1.0
    %v471 = vadd.f32 %v468, 1.0
    %v472 = vrcp.pop %v469
    %v473 = vmul.f32 1.0, %v472
    %v474 = vrcp.pop %v470
    %v475 = vmul.f32 1.0, %v474
    %v476 = vrcp.pop %v471
    %v477 = vmul.f32 1.0, %v476
    %v478 = vtanh.pop %v459
    %v479 = vmul.f32 %v475, 0.0
    %v480 = vmul.f32 %v473, %v478
    %v481 = vadd.f32 %v479, %v480
    %v482 = vtanh.pop %v481
    %v483 = vmul.f32 %v477, %v482
    %v484 = vpack.c.bf16 %v483, %v483
    %v485 = vpack.c.bf16 0.0, 0.0
    %v487 = vlaneseq
    %v488 = vshrl.u32 %v487, 7
    %v489 = vsub.s32 0, %v488
    %v490 = vrot.slane %v157, %v489
    %v491 = vlaneseq
    %v492 = vshrl.u32 %v491, 7
    %v493 = vsub.s32 1, %v492
    %v494 = vrot.slane %v157, %v493
    %v495 = vlaneseq
    %v496 = vshrl.u32 %v495, 7
    %v497 = vsub.s32 2, %v496
    %v498 = vrot.slane %v157, %v497
    %v499 = vlaneseq
    %v500 = vshrl.u32 %v499, 7
    %v501 = vsub.s32 3, %v500
    %v502 = vrot.slane %v157, %v501
    %v571 = vunpack.c.l.b16 %v93
    %v572 = vunpack.c.h.b16 %v93
    %v573 = vunpack.c.l.b16 %v94
    %v574 = vunpack.c.h.b16 %v94
    %v575 = vunpack.c.l.b16 %v95
    %v576 = vunpack.c.h.b16 %v95
    %v577 = vunpack.c.l.b16 %v96
    %v578 = vunpack.c.h.b16 %v96
    %v579 = vunpack.c.l.b16 %v97
    %v580 = vunpack.c.h.b16 %v97
    %v581 = vunpack.c.l.b16 %v98
    %v582 = vunpack.c.h.b16 %v98
    %v583 = vunpack.c.l.b16 %v99
    %v584 = vunpack.c.h.b16 %v99
    %v585 = vunpack.c.l.b16 %v100
    %v586 = vunpack.c.h.b16 %v100
    %v587 = vunpack.c.l.b16 %v101
    %v588 = vunpack.c.h.b16 %v101
    %v589 = vunpack.c.l.b16 %v102
    %v590 = vunpack.c.h.b16 %v102
    %v591 = vunpack.c.l.b16 %v103
    %v592 = vunpack.c.h.b16 %v103
    %v593 = vunpack.c.l.b16 %v104
    %v594 = vunpack.c.h.b16 %v104
    %v595 = vunpack.c.l.b16 %v105
    %v596 = vunpack.c.h.b16 %v105
    %v597 = vunpack.c.l.b16 %v106
    %v598 = vunpack.c.h.b16 %v106
    %v599 = vunpack.c.l.b16 %v107
    %v600 = vunpack.c.h.b16 %v107
    %v601 = vunpack.c.l.b16 %v108
    %v602 = vunpack.c.h.b16 %v108
    %v603 = vunpack.c.l.b16 %v109
    %v604 = vunpack.c.h.b16 %v109
    %v605 = vunpack.c.l.b16 %v110
    %v606 = vunpack.c.h.b16 %v110
    %v607 = vunpack.c.l.b16 %v111
    %v608 = vunpack.c.h.b16 %v111
    %v609 = vunpack.c.l.b16 %v112
    %v610 = vunpack.c.h.b16 %v112
    %v611 = vunpack.c.l.b16 %v113
    %v612 = vunpack.c.h.b16 %v113
    %v613 = vunpack.c.l.b16 %v114
    %v614 = vunpack.c.h.b16 %v114
    %v615 = vunpack.c.l.b16 %v115
    %v616 = vunpack.c.h.b16 %v115
    %v617 = vunpack.c.l.b16 %v116
    %v618 = vunpack.c.h.b16 %v116
    %v619 = vunpack.c.l.b16 %v117
    %v620 = vunpack.c.h.b16 %v117
    %v621 = vunpack.c.l.b16 %v118
    %v622 = vunpack.c.h.b16 %v118
    %v623 = vunpack.c.l.b16 %v119
    %v624 = vunpack.c.h.b16 %v119
    %v625 = vunpack.c.l.b16 %v120
    %v626 = vunpack.c.h.b16 %v120
    %v627 = vunpack.c.l.b16 %v121
    %v628 = vunpack.c.h.b16 %v121
    %v629 = vunpack.c.l.b16 %v122
    %v630 = vunpack.c.h.b16 %v122
    %v631 = vunpack.c.l.b16 %v123
    %v632 = vunpack.c.h.b16 %v123
    %v633 = vunpack.c.l.b16 %v124
    %v634 = vunpack.c.h.b16 %v124
    %v635 = vunpack.c.l.b16 %v125
    %v636 = vunpack.c.h.b16 %v125
    %v637 = vunpack.c.l.b16 %v126
    %v638 = vunpack.c.h.b16 %v126
    %v639 = vunpack.c.l.b16 %v127
    %v640 = vunpack.c.h.b16 %v127
    %v641 = vunpack.c.l.b16 %v128
    %v642 = vunpack.c.h.b16 %v128
    %v643 = vunpack.c.l.b16 %v129
    %v644 = vunpack.c.h.b16 %v129
    %v645 = vunpack.c.l.b16 %v130
    %v646 = vunpack.c.h.b16 %v130
    %v647 = vunpack.c.l.b16 %v131
    %v648 = vunpack.c.h.b16 %v131
    %v649 = vunpack.c.l.b16 %v132
    %v650 = vunpack.c.h.b16 %v132
    %v651 = vunpack.c.l.b16 %v133
    %v652 = vunpack.c.h.b16 %v133
    %v653 = vunpack.c.l.b16 %v134
    %v654 = vunpack.c.h.b16 %v134
    %v655 = vunpack.c.l.b16 %v135
    %v656 = vunpack.c.h.b16 %v135
    %v657 = vunpack.c.l.b16 %v136
    %v658 = vunpack.c.h.b16 %v136
    %v659 = vunpack.c.l.b16 %v137
    %v660 = vunpack.c.h.b16 %v137
    %v661 = vunpack.c.l.b16 %v138
    %v662 = vunpack.c.h.b16 %v138
    %v663 = vunpack.c.l.b16 %v139
    %v664 = vunpack.c.h.b16 %v139
    %v665 = vunpack.c.l.b16 %v140
    %v666 = vunpack.c.h.b16 %v140
    %v667 = vunpack.c.l.b16 %v141
    %v668 = vunpack.c.h.b16 %v141
    %v669 = vunpack.c.l.b16 %v142
    %v670 = vunpack.c.h.b16 %v142
    %v671 = vunpack.c.l.b16 %v143
    %v672 = vunpack.c.h.b16 %v143
    %v673 = vunpack.c.l.b16 %v144
    %v674 = vunpack.c.h.b16 %v144
    %v675 = vunpack.c.l.b16 %v145
    %v676 = vunpack.c.h.b16 %v145
    %v677 = vunpack.c.l.b16 %v146
    %v678 = vunpack.c.h.b16 %v146
    %v679 = vunpack.c.l.b16 %v147
    %v680 = vunpack.c.h.b16 %v147
    %v681 = vunpack.c.l.b16 %v148
    %v682 = vunpack.c.h.b16 %v148
    %v683 = vunpack.c.l.b16 %v149
    %v684 = vunpack.c.h.b16 %v149
    %v685 = vunpack.c.l.b16 %v150
    %v686 = vunpack.c.h.b16 %v150
    %v687 = vunpack.c.l.b16 %v151
    %v688 = vunpack.c.h.b16 %v151
    %v689 = vunpack.c.l.b16 %v152
    %v690 = vunpack.c.h.b16 %v152
    %v691 = vunpack.c.l.b16 %v153
    %v692 = vunpack.c.h.b16 %v153
    %v693 = vunpack.c.l.b16 %v154
    %v694 = vunpack.c.h.b16 %v154
    %v695 = vunpack.c.l.b16 %v155
    %v696 = vunpack.c.h.b16 %v155
    %v697 = vunpack.c.l.b16 %v156
    %v698 = vunpack.c.h.b16 %v156
    %v699 = vpack.c.b16 %v575, %v571
    %v700 = vpack.c.b16 %v576, %v572
    %v701 = vpack.c.b16 %v577, %v573
    %v702 = vpack.c.b16 %v578, %v574
    %v703 = vpack.c.b16 %v583, %v579
    %v704 = vpack.c.b16 %v584, %v580
    %v705 = vpack.c.b16 %v585, %v581
    %v706 = vpack.c.b16 %v586, %v582
    %v707 = vpack.c.b16 %v591, %v587
    %v708 = vpack.c.b16 %v592, %v588
    %v709 = vpack.c.b16 %v593, %v589
    %v710 = vpack.c.b16 %v594, %v590
    %v711 = vpack.c.b16 %v599, %v595
    %v712 = vpack.c.b16 %v600, %v596
    %v713 = vpack.c.b16 %v601, %v597
    %v714 = vpack.c.b16 %v602, %v598
    %v715 = vpack.c.b16 %v607, %v603
    %v716 = vpack.c.b16 %v608, %v604
    %v717 = vpack.c.b16 %v609, %v605
    %v718 = vpack.c.b16 %v610, %v606
    %v719 = vpack.c.b16 %v615, %v611
    %v720 = vpack.c.b16 %v616, %v612
    %v721 = vpack.c.b16 %v617, %v613
    %v722 = vpack.c.b16 %v618, %v614
    %v723 = vpack.c.b16 %v623, %v619
    %v724 = vpack.c.b16 %v624, %v620
    %v725 = vpack.c.b16 %v625, %v621
    %v726 = vpack.c.b16 %v626, %v622
    %v727 = vpack.c.b16 %v631, %v627
    %v728 = vpack.c.b16 %v632, %v628
    %v729 = vpack.c.b16 %v633, %v629
    %v730 = vpack.c.b16 %v634, %v630
    %v731 = vpack.c.b16 %v639, %v635
    %v732 = vpack.c.b16 %v640, %v636
    %v733 = vpack.c.b16 %v641, %v637
    %v734 = vpack.c.b16 %v642, %v638
    %v735 = vpack.c.b16 %v647, %v643
    %v736 = vpack.c.b16 %v648, %v644
    %v737 = vpack.c.b16 %v649, %v645
    %v738 = vpack.c.b16 %v650, %v646
    %v739 = vpack.c.b16 %v655, %v651
    %v740 = vpack.c.b16 %v656, %v652
    %v741 = vpack.c.b16 %v657, %v653
    %v742 = vpack.c.b16 %v658, %v654
    %v743 = vpack.c.b16 %v663, %v659
    %v744 = vpack.c.b16 %v664, %v660
    %v745 = vpack.c.b16 %v665, %v661
    %v746 = vpack.c.b16 %v666, %v662
    %v747 = vpack.c.b16 %v671, %v667
    %v748 = vpack.c.b16 %v672, %v668
    %v749 = vpack.c.b16 %v673, %v669
    %v750 = vpack.c.b16 %v674, %v670
    %v751 = vpack.c.b16 %v679, %v675
    %v752 = vpack.c.b16 %v680, %v676
    %v753 = vpack.c.b16 %v681, %v677
    %v754 = vpack.c.b16 %v682, %v678
    %v755 = vpack.c.b16 %v687, %v683
    %v756 = vpack.c.b16 %v688, %v684
    %v757 = vpack.c.b16 %v689, %v685
    %v758 = vpack.c.b16 %v690, %v686
    %v759 = vpack.c.b16 %v695, %v691
    %v760 = vpack.c.b16 %v696, %v692
    %v761 = vpack.c.b16 %v697, %v693
    %v762 = vpack.c.b16 %v698, %v694
    %827 = vmatprep.subr.bf16.mxu0 %v700
    %828 = vmatpush1.bf16.msra.mxu0 %v699
    %829 = vmatprep.subr.bf16.mxu0 %v704
    %830 = vmatpush1.bf16.msra.mxu0 %v703
    %831 = vmatprep.subr.bf16.mxu0 %v708
    %832 = vmatpush1.bf16.msra.mxu0 %v707
    %833 = vmatprep.subr.bf16.mxu0 %v712
    %834 = vmatpush1.bf16.msra.mxu0 %v711
    %835 = vmatprep.subr.bf16.mxu0 %v716
    %836 = vmatpush1.bf16.msra.mxu0 %v715
    %837 = vmatprep.subr.bf16.mxu0 %v720
    %838 = vmatpush1.bf16.msra.mxu0 %v719
    %839 = vmatprep.subr.bf16.mxu0 %v724
    %840 = vmatpush1.bf16.msra.mxu0 %v723
    %841 = vmatprep.subr.bf16.mxu0 %v728
    %842 = vmatpush1.bf16.msra.mxu0 %v727
    %843 = vmatprep.subr.bf16.mxu0 %v732
    %844 = vmatpush1.bf16.msra.mxu0 %v731
    %845 = vmatprep.subr.bf16.mxu0 %v736
    %846 = vmatpush1.bf16.msra.mxu0 %v735
    %847 = vmatprep.subr.bf16.mxu0 %v740
    %848 = vmatpush1.bf16.msra.mxu0 %v739
    %849 = vmatprep.subr.bf16.mxu0 %v744
    %850 = vmatpush1.bf16.msra.mxu0 %v743
    %851 = vmatprep.subr.bf16.mxu0 %v748
    %852 = vmatpush1.bf16.msra.mxu0 %v747
    %853 = vmatprep.subr.bf16.mxu0 %v752
    %854 = vmatpush1.bf16.msra.mxu0 %v751
    %855 = vmatprep.subr.bf16.mxu0 %v756
    %856 = vmatpush1.bf16.msra.mxu0 %v755
    %857 = vmatprep.subr.bf16.mxu0 %v760
    %858 = vmatpush1.bf16.msra.mxu0 %v759
    %859 = vmatprep.mubr.bf16.mxu0 %v485
    %860 = vmatmul.mubr.bf16.gmra.mrb[0].mxu0 %v484
    %v861 = vpop.f32.mrb[0].mxu0
    %v862 = vadd.f32 %v490, %v861
    %v863 = vpop.f32.mrb[0].mxu0
    %v864 = vadd.f32 %v494, %v863
    %v865 = vpop.f32.mrb[0].mxu0
    %v866 = vpop.f32.mrb[0].mxu0
    %867 = vdwg.mxu0
    %868 = vmatprep.subr.bf16.mxu0 %v702
    %869 = vmatpush1.bf16.msra.mxu0 %v701
    %870 = vmatprep.subr.bf16.mxu0 %v706
    %871 = vmatpush1.bf16.msra.mxu0 %v705
    %872 = vmatprep.subr.bf16.mxu0 %v710
    %873 = vmatpush1.bf16.msra.mxu0 %v709
    %874 = vmatprep.subr.bf16.mxu0 %v714
    %875 = vmatpush1.bf16.msra.mxu0 %v713
    %876 = vmatprep.subr.bf16.mxu0 %v718
    %877 = vmatpush1.bf16.msra.mxu0 %v717
    %878 = vmatprep.subr.bf16.mxu0 %v722
    %879 = vmatpush1.bf16.msra.mxu0 %v721
    %880 = vmatprep.subr.bf16.mxu0 %v726
    %881 = vmatpush1.bf16.msra.mxu0 %v725
    %882 = vmatprep.subr.bf16.mxu0 %v730
    %883 = vmatpush1.bf16.msra.mxu0 %v729
    %884 = vmatprep.subr.bf16.mxu0 %v734
    %885 = vmatpush1.bf16.msra.mxu0 %v733
    %886 = vmatprep.subr.bf16.mxu0 %v738
    %887 = vmatpush1.bf16.msra.mxu0 %v737
    %888 = vmatprep.subr.bf16.mxu0 %v742
    %889 = vmatpush1.bf16.msra.mxu0 %v741
    %890 = vmatprep.subr.bf16.mxu0 %v746
    %891 = vmatpush1.bf16.msra.mxu0 %v745
    %892 = vmatprep.subr.bf16.mxu0 %v750
    %893 = vmatpush1.bf16.msra.mxu0 %v749
    %894 = vmatprep.subr.bf16.mxu0 %v754
    %895 = vmatpush1.bf16.msra.mxu0 %v753
    %896 = vmatprep.subr.bf16.mxu0 %v758
    %897 = vmatpush1.bf16.msra.mxu0 %v757
    %898 = vmatprep.subr.bf16.mxu0 %v762
    %899 = vmatpush1.bf16.msra.mxu0 %v761
    %900 = vmatprep.mubr.bf16.mxu0 %v485
    %901 = vmatmul.mubr.bf16.gmra.mrb[0].mxu0 %v484
    %v902 = vpop.f32.mrb[0].mxu0
    %v903 = vadd.f32 %v498, %v902
    %v904 = vpop.f32.mrb[0].mxu0
    %v905 = vadd.f32 %v502, %v904
    %v906 = vpop.f32.mrb[0].mxu0
    %v907 = vpop.f32.mrb[0].mxu0
    %908 = vdwg.mxu0
    %v909 = vxor.u32 %v862, 2147483648
    %v910 = vxor.u32 %v864, 2147483648
    %v911 = vxor.u32 %v903, 2147483648
    %v912 = vmul.f32 %v909, 1.442695
    %v913 = vpow.pop %v912
    %v914 = vmul.f32 %v910, 1.442695
    %v915 = vpow.pop %v914
    %v916 = vmul.f32 %v911, 1.442695
    %v917 = vpow.pop %v916
    %v918 = vadd.f32 %v913, 1.0
    %v919 = vadd.f32 %v915, 1.0
    %v920 = vadd.f32 %v917, 1.0
    %v921 = vrcp.pop %v918
    %v922 = vmul.f32 1.0, %v921
    %v923 = vrcp.pop %v919
    %v924 = vmul.f32 1.0, %v923
    %v925 = vrcp.pop %v920
    %v926 = vmul.f32 1.0, %v925
    %v927 = vtanh.pop %v905
    %v928 = vmul.f32 %v924, 0.0
    %v929 = vmul.f32 %v922, %v927
    %v930 = vadd.f32 %v928, %v929
    %v931 = vtanh.pop %v930
    %v932 = vmul.f32 %v926, %v931
    %s933 = scalar_lea.vmem %s0, 2
    %v934 = vld [vmem:[%s933] sm:$0x3]
    %936 = vset.pattern.permute.xlu0 0
    %937 = vperm.xlu0 %936, %v934
    %v938 = vpop.permute.xlu0 %937
    %v940 = vmul.f32 %v938, %v168
    %v941 = vmul.f32 %v938, %v172
    %v942 = vmul.f32 %v938, %v176
    %v943 = vmul.f32 %v938, %v180
    %944 = vmatprep.subr.bf16.mxu0 %v286
    %945 = vmatpush1.bf16.msra.mxu0 %v285
    %946 = vmatprep.subr.bf16.mxu0 %v290
    %947 = vmatpush1.bf16.msra.mxu0 %v289
    %948 = vmatprep.subr.bf16.mxu0 %v294
    %949 = vmatpush1.bf16.msra.mxu0 %v293
    %950 = vmatprep.subr.bf16.mxu0 %v298
    %951 = vmatpush1.bf16.msra.mxu0 %v297
    %952 = vmatprep.subr.bf16.mxu0 %v302
    %953 = vmatpush1.bf16.msra.mxu0 %v301
    %954 = vmatprep.subr.bf16.mxu0 %v306
    %955 = vmatpush1.bf16.msra.mxu0 %v305
    %956 = vmatprep.subr.bf16.mxu0 %v310
    %957 = vmatpush1.bf16.msra.mxu0 %v309
    %958 = vmatprep.subr.bf16.mxu0 %v314
    %959 = vmatpush1.bf16.msra.mxu0 %v313
    %960 = vmatprep.subr.bf16.mxu0 0
    %961 = vmatpush1.bf16.msra.mxu0 0
    %962 = vmatprep.subr.bf16.mxu0 0
    %963 = vmatpush1.bf16.msra.mxu0 0
    %964 = vmatprep.subr.bf16.mxu0 0
    %965 = vmatpush1.bf16.msra.mxu0 0
    %966 = vmatprep.subr.bf16.mxu0 0
    %967 = vmatpush1.bf16.msra.mxu0 0
    %968 = vmatprep.subr.bf16.mxu0 0
    %969 = vmatpush1.bf16.msra.mxu0 0
    %970 = vmatprep.subr.bf16.mxu0 0
    %971 = vmatpush1.bf16.msra.mxu0 0
    %972 = vmatprep.subr.bf16.mxu0 0
    %973 = vmatpush1.bf16.msra.mxu0 0
    %974 = vmatprep.subr.bf16.mxu0 0
    %975 = vmatpush1.bf16.msra.mxu0 0
    %976 = vmatprep.mubr.bf16.mxu0 0
    %977 = vmatmul.mubr.bf16.gmra.mrb[0].mxu0 %v484
    %v978 = vpop.f32.mrb[0].mxu0
    %v979 = vadd.f32 0.0, %v978
    %v980 = vpop.f32.mrb[0].mxu0
    %v981 = vadd.f32 0.0, %v980
    %v982 = vpop.f32.mrb[0].mxu0
    %v983 = vpop.f32.mrb[0].mxu0
    %984 = vdwg.mxu0
    %985 = vmatprep.subr.bf16.mxu0 %v288
    %986 = vmatpush1.bf16.msra.mxu0 %v287
    %987 = vmatprep.subr.bf16.mxu0 %v292
    %988 = vmatpush1.bf16.msra.mxu0 %v291
    %989 = vmatprep.subr.bf16.mxu0 %v296
    %990 = vmatpush1.bf16.msra.mxu0 %v295
    %991 = vmatprep.subr.bf16.mxu0 %v300
    %992 = vmatpush1.bf16.msra.mxu0 %v299
    %993 = vmatprep.subr.bf16.mxu0 %v304
    %994 = vmatpush1.bf16.msra.mxu0 %v303
    %995 = vmatprep.subr.bf16.mxu0 %v308
    %996 = vmatpush1.bf16.msra.mxu0 %v307
    %997 = vmatprep.subr.bf16.mxu0 %v312
    %998 = vmatpush1.bf16.msra.mxu0 %v311
    %999 = vmatprep.subr.bf16.mxu0 %v316
    %1000 = vmatpush1.bf16.msra.mxu0 %v315
    %1001 = vmatprep.subr.bf16.mxu0 0
    %1002 = vmatpush1.bf16.msra.mxu0 0
    %1003 = vmatprep.subr.bf16.mxu0 0
    %1004 = vmatpush1.bf16.msra.mxu0 0
    %1005 = vmatprep.subr.bf16.mxu0 0
    %1006 = vmatpush1.bf16.msra.mxu0 0
    %1007 = vmatprep.subr.bf16.mxu0 0
    %1008 = vmatpush1.bf16.msra.mxu0 0
    %1009 = vmatprep.subr.bf16.mxu0 0
    %1010 = vmatpush1.bf16.msra.mxu0 0
    %1011 = vmatprep.subr.bf16.mxu0 0
    %1012 = vmatpush1.bf16.msra.mxu0 0
    %1013 = vmatprep.subr.bf16.mxu0 0
    %1014 = vmatpush1.bf16.msra.mxu0 0
    %1015 = vmatprep.subr.bf16.mxu0 0
    %1016 = vmatpush1.bf16.msra.mxu0 0
    %1017 = vmatprep.mubr.bf16.mxu0 0
    %1018 = vmatmul.mubr.bf16.gmra.mrb[0].mxu0 %v484
    %v1019 = vpop.f32.mrb[0].mxu0
    %v1020 = vadd.f32 0.0, %v1019
    %v1021 = vpop.f32.mrb[0].mxu0
    %v1022 = vadd.f32 0.0, %v1021
    %v1023 = vpop.f32.mrb[0].mxu0
    %v1024 = vpop.f32.mrb[0].mxu0
    %1025 = vdwg.mxu0
    %v1026 = vadd.f32 %v940, %v979
    %v1027 = vadd.f32 %v941, %v981
    %v1028 = vadd.f32 %v942, %v1020
    %v1029 = vadd.f32 %v943, %v1022
    %v1030 = vadd.f32 %v1026, %v439
    %v1031 = vadd.f32 %v1027, %v443
    %v1032 = vadd.f32 %v1028, %v447
    %v1033 = vadd.f32 %v1029, %v451
    %v1034 = vxor.u32 %v1030, 2147483648
    %v1035 = vxor.u32 %v1031, 2147483648
    %v1036 = vxor.u32 %v1032, 2147483648
    %v1037 = vmul.f32 %v1034, 1.442695
    %v1038 = vpow.pop %v1037
    %v1039 = vmul.f32 %v1035, 1.442695
    %v1040 = vpow.pop %v1039
    %v1041 = vmul.f32 %v1036, 1.442695
    %v1042 = vpow.pop %v1041
    %v1043 = vadd.f32 %v1038, 1.0
    %v1044 = vadd.f32 %v1040, 1.0
    %v1045 = vadd.f32 %v1042, 1.0
    %v1046 = vrcp.pop %v1043
    %v1047 = vmul.f32 1.0, %v1046
    %v1048 = vrcp.pop %v1044
    %v1049 = vmul.f32 1.0, %v1048
    %v1050 = vrcp.pop %v1045
    %v1051 = vmul.f32 1.0, %v1050
    %v1052 = vtanh.pop %v1033
    %v1053 = vmul.f32 %v1049, %v481
    %v1054 = vmul.f32 %v1047, %v1052
    %v1055 = vadd.f32 %v1053, %v1054
    %v1056 = vtanh.pop %v1055
    %v1057 = vmul.f32 %v1051, %v1056
    %v1058 = vpack.c.bf16 %v1057, %v1057
    %v1059 = vpack.c.bf16 %v932, %v932
    %1060 = vmatprep.subr.bf16.mxu0 %v700
    %1061 = vmatpush1.bf16.msra.mxu0 %v699
    %1062 = vmatprep.subr.bf16.mxu0 %v704
    %1063 = vmatpush1.bf16.msra.mxu0 %v703
    %1064 = vmatprep.subr.bf16.mxu0 %v708
    %1065 = vmatpush1.bf16.msra.mxu0 %v707
    %1066 = vmatprep.subr.bf16.mxu0 %v712
    %1067 = vmatpush1.bf16.msra.mxu0 %v711
    %1068 = vmatprep.subr.bf16.mxu0 %v716
    %1069 = vmatpush1.bf16.msra.mxu0 %v715
    %1070 = vmatprep.subr.bf16.mxu0 %v720
    %1071 = vmatpush1.bf16.msra.mxu0 %v719
    %1072 = vmatprep.subr.bf16.mxu0 %v724
    %1073 = vmatpush1.bf16.msra.mxu0 %v723
    %1074 = vmatprep.subr.bf16.mxu0 %v728
    %1075 = vmatpush1.bf16.msra.mxu0 %v727
    %1076 = vmatprep.subr.bf16.mxu0 %v732
    %1077 = vmatpush1.bf16.msra.mxu0 %v731
    %1078 = vmatprep.subr.bf16.mxu0 %v736
    %1079 = vmatpush1.bf16.msra.mxu0 %v735
    %1080 = vmatprep.subr.bf16.mxu0 %v740
    %1081 = vmatpush1.bf16.msra.mxu0 %v739
    %1082 = vmatprep.subr.bf16.mxu0 %v744
    %1083 = vmatpush1.bf16.msra.mxu0 %v743
    %1084 = vmatprep.subr.bf16.mxu0 %v748
    %1085 = vmatpush1.bf16.msra.mxu0 %v747
    %1086 = vmatprep.subr.bf16.mxu0 %v752
    %1087 = vmatpush1.bf16.msra.mxu0 %v751
    %1088 = vmatprep.subr.bf16.mxu0 %v756
    %1089 = vmatpush1.bf16.msra.mxu0 %v755
    %1090 = vmatprep.subr.bf16.mxu0 %v760
    %1091 = vmatpush1.bf16.msra.mxu0 %v759
    %1092 = vmatprep.mubr.bf16.mxu0 %v1059
    %1093 = vmatmul.mubr.bf16.gmra.mrb[0].mxu0 %v1058
    %v1094 = vpop.f32.mrb[0].mxu0
    %v1095 = vadd.f32 %v490, %v1094
    %v1096 = vpop.f32.mrb[0].mxu0
    %v1097 = vadd.f32 %v494, %v1096
    %v1098 = vpop.f32.mrb[0].mxu0
    %v1099 = vpop.f32.mrb[0].mxu0
    %1100 = vdwg.mxu0
    %1101 = vmatprep.subr.bf16.mxu0 %v702
    %1102 = vmatpush1.bf16.msra.mxu0 %v701
    %1103 = vmatprep.subr.bf16.mxu0 %v706
    %1104 = vmatpush1.bf16.msra.mxu0 %v705
    %1105 = vmatprep.subr.bf16.mxu0 %v710
    %1106 = vmatpush1.bf16.msra.mxu0 %v709
    %1107 = vmatprep.subr.bf16.mxu0 %v714
    %1108 = vmatpush1.bf16.msra.mxu0 %v713
    %1109 = vmatprep.subr.bf16.mxu0 %v718
    %1110 = vmatpush1.bf16.msra.mxu0 %v717
    %1111 = vmatprep.subr.bf16.mxu0 %v722
    %1112 = vmatpush1.bf16.msra.mxu0 %v721
    %1113 = vmatprep.subr.bf16.mxu0 %v726
    %1114 = vmatpush1.bf16.msra.mxu0 %v725
    %1115 = vmatprep.subr.bf16.mxu0 %v730
    %1116 = vmatpush1.bf16.msra.mxu0 %v729
    %1117 = vmatprep.subr.bf16.mxu0 %v734
    %1118 = vmatpush1.bf16.msra.mxu0 %v733
    %1119 = vmatprep.subr.bf16.mxu0 %v738
    %1120 = vmatpush1.bf16.msra.mxu0 %v737
    %1121 = vmatprep.subr.bf16.mxu0 %v742
    %1122 = vmatpush1.bf16.msra.mxu0 %v741
    %1123 = vmatprep.subr.bf16.mxu0 %v746
    %1124 = vmatpush1.bf16.msra.mxu0 %v745
    %1125 = vmatprep.subr.bf16.mxu0 %v750
    %1126 = vmatpush1.bf16.msra.mxu0 %v749
    %1127 = vmatprep.subr.bf16.mxu0 %v754
    %1128 = vmatpush1.bf16.msra.mxu0 %v753
    %1129 = vmatprep.subr.bf16.mxu0 %v758
    %1130 = vmatpush1.bf16.msra.mxu0 %v757
    %1131 = vmatprep.subr.bf16.mxu0 %v762
    %1132 = vmatpush1.bf16.msra.mxu0 %v761
    %1133 = vmatprep.mubr.bf16.mxu0 %v1059
    %1134 = vmatmul.mubr.bf16.gmra.mrb[0].mxu0 %v1058
    %v1135 = vpop.f32.mrb[0].mxu0
    %v1136 = vadd.f32 %v498, %v1135
    %v1137 = vpop.f32.mrb[0].mxu0
    %v1138 = vadd.f32 %v502, %v1137
    %v1139 = vpop.f32.mrb[0].mxu0
    %v1140 = vpop.f32.mrb[0].mxu0
    %1141 = vdwg.mxu0
    %v1142 = vxor.u32 %v1095, 2147483648
    %v1143 = vxor.u32 %v1097, 2147483648
    %v1144 = vxor.u32 %v1136, 2147483648
    %v1145 = vmul.f32 %v1142, 1.442695
    %v1146 = vpow.pop %v1145
    %v1147 = vmul.f32 %v1143, 1.442695
    %v1148 = vpow.pop %v1147
    %v1149 = vmul.f32 %v1144, 1.442695
    %v1150 = vpow.pop %v1149
    %v1151 = vadd.f32 %v1146, 1.0
    %v1152 = vadd.f32 %v1148, 1.0
    %v1153 = vadd.f32 %v1150, 1.0
    %v1154 = vrcp.pop %v1151
    %v1155 = vmul.f32 1.0, %v1154
    %v1156 = vrcp.pop %v1152
    %v1157 = vmul.f32 1.0, %v1156
    %v1158 = vrcp.pop %v1153
    %v1159 = vmul.f32 1.0, %v1158
    %v1160 = vtanh.pop %v1138
    %v1161 = vmul.f32 %v1157, %v930
    %v1162 = vmul.f32 %v1155, %v1160
    %v1163 = vadd.f32 %v1161, %v1162
    %v1164 = vtanh.pop %v1163
    %v1165 = vmul.f32 %v1159, %v1164
    %s1166 = scalar_lea.vmem %s0, 4
    %v1167 = vld [vmem:[%s1166] sm:$0x3]
    %1169 = vset.pattern.permute.xlu0 0
    %1170 = vperm.xlu0 %1169, %v1167
    %v1171 = vpop.permute.xlu0 %1170
    %v1173 = vmul.f32 %v1171, %v168
    %v1174 = vmul.f32 %v1171, %v172
    %v1175 = vmul.f32 %v1171, %v176
    %v1176 = vmul.f32 %v1171, %v180
    %1177 = vmatprep.subr.bf16.mxu0 %v286
    %1178 = vmatpush1.bf16.msra.mxu0 %v285
    %1179 = vmatprep.subr.bf16.mxu0 %v290
    %1180 = vmatpush1.bf16.msra.mxu0 %v289
    %1181 = vmatprep.subr.bf16.mxu0 %v294
    %1182 = vmatpush1.bf16.msra.mxu0 %v293
    %1183 = vmatprep.subr.bf16.mxu0 %v298
    %1184 = vmatpush1.bf16.msra.mxu0 %v297
    %1185 = vmatprep.subr.bf16.mxu0 %v302
    %1186 = vmatpush1.bf16.msra.mxu0 %v301
    %1187 = vmatprep.subr.bf16.mxu0 %v306
    %1188 = vmatpush1.bf16.msra.mxu0 %v305
    %1189 = vmatprep.subr.bf16.mxu0 %v310
    %1190 = vmatpush1.bf16.msra.mxu0 %v309
    %1191 = vmatprep.subr.bf16.mxu0 %v314
    %1192 = vmatpush1.bf16.msra.mxu0 %v313
    %1193 = vmatprep.subr.bf16.mxu0 0
    %1194 = vmatpush1.bf16.msra.mxu0 0
    %1195 = vmatprep.subr.bf16.mxu0 0
    %1196 = vmatpush1.bf16.msra.mxu0 0
    %1197 = vmatprep.subr.bf16.mxu0 0
    %1198 = vmatpush1.bf16.msra.mxu0 0
    %1199 = vmatprep.subr.bf16.mxu0 0
    %1200 = vmatpush1.bf16.msra.mxu0 0
    %1201 = vmatprep.subr.bf16.mxu0 0
    %1202 = vmatpush1.bf16.msra.mxu0 0
    %1203 = vmatprep.subr.bf16.mxu0 0
    %1204 = vmatpush1.bf16.msra.mxu0 0
    %1205 = vmatprep.subr.bf16.mxu0 0
    %1206 = vmatpush1.bf16.msra.mxu0 0
    %1207 = vmatprep.subr.bf16.mxu0 0
    %1208 = vmatpush1.bf16.msra.mxu0 0
    %1209 = vmatprep.mubr.bf16.mxu0 0
    %1210 = vmatmul.mubr.bf16.gmra.mrb[0].mxu0 %v1058
    %v1211 = vpop.f32.mrb[0].mxu0
    %v1212 = vadd.f32 0.0, %v1211
    %v1213 = vpop.f32.mrb[0].mxu0
    %v1214 = vadd.f32 0.0, %v1213
    %v1215 = vpop.f32.mrb[0].mxu0
    %v1216 = vpop.f32.mrb[0].mxu0
    %1217 = vdwg.mxu0
    %1218 = vmatprep.subr.bf16.mxu0 %v288
    %1219 = vmatpush1.bf16.msra.mxu0 %v287
    %1220 = vmatprep.subr.bf16.mxu0 %v292
    %1221 = vmatpush1.bf16.msra.mxu0 %v291
    %1222 = vmatprep.subr.bf16.mxu0 %v296
    %1223 = vmatpush1.bf16.msra.mxu0 %v295
    %1224 = vmatprep.subr.bf16.mxu0 %v300
    %1225 = vmatpush1.bf16.msra.mxu0 %v299
    %1226 = vmatprep.subr.bf16.mxu0 %v304
    %1227 = vmatpush1.bf16.msra.mxu0 %v303
    %1228 = vmatprep.subr.bf16.mxu0 %v308
    %1229 = vmatpush1.bf16.msra.mxu0 %v307
    %1230 = vmatprep.subr.bf16.mxu0 %v312
    %1231 = vmatpush1.bf16.msra.mxu0 %v311
    %1232 = vmatprep.subr.bf16.mxu0 %v316
    %1233 = vmatpush1.bf16.msra.mxu0 %v315
    %1234 = vmatprep.subr.bf16.mxu0 0
    %1235 = vmatpush1.bf16.msra.mxu0 0
    %1236 = vmatprep.subr.bf16.mxu0 0
    %1237 = vmatpush1.bf16.msra.mxu0 0
    %1238 = vmatprep.subr.bf16.mxu0 0
    %1239 = vmatpush1.bf16.msra.mxu0 0
    %1240 = vmatprep.subr.bf16.mxu0 0
    %1241 = vmatpush1.bf16.msra.mxu0 0
    %1242 = vmatprep.subr.bf16.mxu0 0
    %1243 = vmatpush1.bf16.msra.mxu0 0
    %1244 = vmatprep.subr.bf16.mxu0 0
    %1245 = vmatpush1.bf16.msra.mxu0 0
    %1246 = vmatprep.subr.bf16.mxu0 0
    %1247 = vmatpush1.bf16.msra.mxu0 0
    %1248 = vmatprep.subr.bf16.mxu0 0
    %1249 = vmatpush1.bf16.msra.mxu0 0
    %1250 = vmatprep.mubr.bf16.mxu0 0
    %1251 = vmatmul.mubr.bf16.gmra.mrb[0].mxu0 %v1058
    %v1252 = vpop.f32.mrb[0].mxu0
    %v1253 = vadd.f32 0.0, %v1252
    %v1254 = vpop.f32.mrb[0].mxu0
    %v1255 = vadd.f32 0.0, %v1254
    %v1256 = vpop.f32.mrb[0].mxu0
    %v1257 = vpop.f32.mrb[0].mxu0
    %1258 = vdwg.mxu0
    %v1259 = vadd.f32 %v1173, %v1212
    %v1260 = vadd.f32 %v1174, %v1214
    %v1261 = vadd.f32 %v1175, %v1253
    %v1262 = vadd.f32 %v1176, %v1255
    %v1263 = vadd.f32 %v1259, %v439
    %v1264 = vadd.f32 %v1260, %v443
    %v1265 = vadd.f32 %v1261, %v447
    %v1266 = vadd.f32 %v1262, %v451
    %v1267 = vxor.u32 %v1263, 2147483648
    %v1268 = vxor.u32 %v1264, 2147483648
    %v1269 = vxor.u32 %v1265, 2147483648
    %v1270 = vmul.f32 %v1267, 1.442695
    %v1271 = vpow.pop %v1270
    %v1272 = vmul.f32 %v1268, 1.442695
    %v1273 = vpow.pop %v1272
    %v1274 = vmul.f32 %v1269, 1.442695
    %v1275 = vpow.pop %v1274
    %v1276 = vadd.f32 %v1271, 1.0
    %v1277 = vadd.f32 %v1273, 1.0
    %v1278 = vadd.f32 %v1275, 1.0
    %v1279 = vrcp.pop %v1276
    %v1280 = vmul.f32 1.0, %v1279
    %v1281 = vrcp.pop %v1277
    %v1282 = vmul.f32 1.0, %v1281
    %v1283 = vrcp.pop %v1278
    %v1284 = vmul.f32 1.0, %v1283
    %v1285 = vtanh.pop %v1266
    %v1286 = vmul.f32 %v1282, %v1055
    %v1287 = vmul.f32 %v1280, %v1285
    %v1288 = vadd.f32 %v1286, %v1287
    %v1289 = vtanh.pop %v1288
    %v1290 = vmul.f32 %v1284, %v1289
    %v1291 = vpack.c.bf16 %v1290, %v1290
    %v1292 = vpack.c.bf16 %v1165, %v1165
    %1293 = vmatprep.subr.bf16.mxu0 %v700
    %1294 = vmatpush1.bf16.msra.mxu0 %v699
    %1295 = vmatprep.subr.bf16.mxu0 %v704
    %1296 = vmatpush1.bf16.msra.mxu0 %v703
    %1297 = vmatprep.subr.bf16.mxu0 %v708
    %1298 = vmatpush1.bf16.msra.mxu0 %v707
    %1299 = vmatprep.subr.bf16.mxu0 %v712
    %1300 = vmatpush1.bf16.msra.mxu0 %v711
    %1301 = vmatprep.subr.bf16.mxu0 %v716
    %1302 = vmatpush1.bf16.msra.mxu0 %v715
    %1303 = vmatprep.subr.bf16.mxu0 %v720
    %1304 = vmatpush1.bf16.msra.mxu0 %v719
    %1305 = vmatprep.subr.bf16.mxu0 %v724
    %1306 = vmatpush1.bf16.msra.mxu0 %v723
    %1307 = vmatprep.subr.bf16.mxu0 %v728
    %1308 = vmatpush1.bf16.msra.mxu0 %v727
    %1309 = vmatprep.subr.bf16.mxu0 %v732
    %1310 = vmatpush1.bf16.msra.mxu0 %v731
    %1311 = vmatprep.subr.bf16.mxu0 %v736
    %1312 = vmatpush1.bf16.msra.mxu0 %v735
    %1313 = vmatprep.subr.bf16.mxu0 %v740
    %1314 = vmatpush1.bf16.msra.mxu0 %v739
    %1315 = vmatprep.subr.bf16.mxu0 %v744
    %1316 = vmatpush1.bf16.msra.mxu0 %v743
    %1317 = vmatprep.subr.bf16.mxu0 %v748
    %1318 = vmatpush1.bf16.msra.mxu0 %v747
    %1319 = vmatprep.subr.bf16.mxu0 %v752
    %1320 = vmatpush1.bf16.msra.mxu0 %v751
    %1321 = vmatprep.subr.bf16.mxu0 %v756
    %1322 = vmatpush1.bf16.msra.mxu0 %v755
    %1323 = vmatprep.subr.bf16.mxu0 %v760
    %1324 = vmatpush1.bf16.msra.mxu0 %v759
    %1325 = vmatprep.mubr.bf16.mxu0 %v1292
    %1326 = vmatmul.mubr.bf16.gmra.mrb[0].mxu0 %v1291
    %v1327 = vpop.f32.mrb[0].mxu0
    %v1328 = vadd.f32 %v490, %v1327
    %v1329 = vpop.f32.mrb[0].mxu0
    %v1330 = vadd.f32 %v494, %v1329
    %v1331 = vpop.f32.mrb[0].mxu0
    %v1332 = vpop.f32.mrb[0].mxu0
    %1333 = vdwg.mxu0
    %1334 = vmatprep.subr.bf16.mxu0 %v702
    %1335 = vmatpush1.bf16.msra.mxu0 %v701
    %1336 = vmatprep.subr.bf16.mxu0 %v706
    %1337 = vmatpush1.bf16.msra.mxu0 %v705
    %1338 = vmatprep.subr.bf16.mxu0 %v710
    %1339 = vmatpush1.bf16.msra.mxu0 %v709
    %1340 = vmatprep.subr.bf16.mxu0 %v714
    %1341 = vmatpush1.bf16.msra.mxu0 %v713
    %1342 = vmatprep.subr.bf16.mxu0 %v718
    %1343 = vmatpush1.bf16.msra.mxu0 %v717
    %1344 = vmatprep.subr.bf16.mxu0 %v722
    %1345 = vmatpush1.bf16.msra.mxu0 %v721
    %1346 = vmatprep.subr.bf16.mxu0 %v726
    %1347 = vmatpush1.bf16.msra.mxu0 %v725
    %1348 = vmatprep.subr.bf16.mxu0 %v730
    %1349 = vmatpush1.bf16.msra.mxu0 %v729
    %1350 = vmatprep.subr.bf16.mxu0 %v734
    %1351 = vmatpush1.bf16.msra.mxu0 %v733
    %1352 = vmatprep.subr.bf16.mxu0 %v738
    %1353 = vmatpush1.bf16.msra.mxu0 %v737
    %1354 = vmatprep.subr.bf16.mxu0 %v742
    %1355 = vmatpush1.bf16.msra.mxu0 %v741
    %1356 = vmatprep.subr.bf16.mxu0 %v746
    %1357 = vmatpush1.bf16.msra.mxu0 %v745
    %1358 = vmatprep.subr.bf16.mxu0 %v750
    %1359 = vmatpush1.bf16.msra.mxu0 %v749
    %1360 = vmatprep.subr.bf16.mxu0 %v754
    %1361 = vmatpush1.bf16.msra.mxu0 %v753
    %1362 = vmatprep.subr.bf16.mxu0 %v758
    %1363 = vmatpush1.bf16.msra.mxu0 %v757
    %1364 = vmatprep.subr.bf16.mxu0 %v762
    %1365 = vmatpush1.bf16.msra.mxu0 %v761
    %1366 = vmatprep.mubr.bf16.mxu0 %v1292
    %1367 = vmatmul.mubr.bf16.gmra.mrb[0].mxu0 %v1291
    %v1368 = vpop.f32.mrb[0].mxu0
    %v1369 = vadd.f32 %v498, %v1368
    %v1370 = vpop.f32.mrb[0].mxu0
    %v1371 = vadd.f32 %v502, %v1370
    %v1372 = vpop.f32.mrb[0].mxu0
    %v1373 = vpop.f32.mrb[0].mxu0
    %1374 = vdwg.mxu0
    %v1375 = vxor.u32 %v1328, 2147483648
    %v1376 = vxor.u32 %v1330, 2147483648
    %v1377 = vxor.u32 %v1369, 2147483648
    %v1378 = vmul.f32 %v1375, 1.442695
    %v1379 = vpow.pop %v1378
    %v1380 = vmul.f32 %v1376, 1.442695
    %v1381 = vpow.pop %v1380
    %v1382 = vmul.f32 %v1377, 1.442695
    %v1383 = vpow.pop %v1382
    %v1384 = vadd.f32 %v1379, 1.0
    %v1385 = vadd.f32 %v1381, 1.0
    %v1386 = vadd.f32 %v1383, 1.0
    %v1387 = vrcp.pop %v1384
    %v1388 = vmul.f32 1.0, %v1387
    %v1389 = vrcp.pop %v1385
    %v1390 = vmul.f32 1.0, %v1389
    %v1391 = vrcp.pop %v1386
    %v1392 = vmul.f32 1.0, %v1391
    %v1393 = vtanh.pop %v1371
    %v1394 = vmul.f32 %v1390, %v1163
    %v1395 = vmul.f32 %v1388, %v1393
    %v1396 = vadd.f32 %v1394, %v1395
    %v1397 = vtanh.pop %v1396
    %v1398 = vmul.f32 %v1392, %v1397
    %s1399 = scalar_lea.vmem %s0, 6
    %v1400 = vld [vmem:[%s1399] sm:$0x3]
    %1402 = vset.pattern.permute.xlu0 0
    %1403 = vperm.xlu0 %1402, %v1400
    %v1404 = vpop.permute.xlu0 %1403
    %v1406 = vmul.f32 %v1404, %v168
    %v1407 = vmul.f32 %v1404, %v172
    %v1408 = vmul.f32 %v1404, %v176
    %v1409 = vmul.f32 %v1404, %v180
    %1410 = vmatprep.subr.bf16.mxu0 %v286
    %1411 = vmatpush1.bf16.msra.mxu0 %v285
    %1412 = vmatprep.subr.bf16.mxu0 %v290
    %1413 = vmatpush1.bf16.msra.mxu0 %v289
    %1414 = vmatprep.subr.bf16.mxu0 %v294
    %1415 = vmatpush1.bf16.msra.mxu0 %v293
    %1416 = vmatprep.subr.bf16.mxu0 %v298
    %1417 = vmatpush1.bf16.msra.mxu0 %v297
    %1418 = vmatprep.subr.bf16.mxu0 %v302
    %1419 = vmatpush1.bf16.msra.mxu0 %v301
    %1420 = vmatprep.subr.bf16.mxu0 %v306
    %1421 = vmatpush1.bf16.msra.mxu0 %v305
    %1422 = vmatprep.subr.bf16.mxu0 %v310
    %1423 = vmatpush1.bf16.msra.mxu0 %v309
    %1424 = vmatprep.subr.bf16.mxu0 %v314
    %1425 = vmatpush1.bf16.msra.mxu0 %v313
    %1426 = vmatprep.subr.bf16.mxu0 0
    %1427 = vmatpush1.bf16.msra.mxu0 0
    %1428 = vmatprep.subr.bf16.mxu0 0
    %1429 = vmatpush1.bf16.msra.mxu0 0
    %1430 = vmatprep.subr.bf16.mxu0 0
    %1431 = vmatpush1.bf16.msra.mxu0 0
    %1432 = vmatprep.subr.bf16.mxu0 0
    %1433 = vmatpush1.bf16.msra.mxu0 0
    %1434 = vmatprep.subr.bf16.mxu0 0
    %1435 = vmatpush1.bf16.msra.mxu0 0
    %1436 = vmatprep.subr.bf16.mxu0 0
    %1437 = vmatpush1.bf16.msra.mxu0 0
    %1438 = vmatprep.subr.bf16.mxu0 0
    %1439 = vmatpush1.bf16.msra.mxu0 0
    %1440 = vmatprep.subr.bf16.mxu0 0
    %1441 = vmatpush1.bf16.msra.mxu0 0
    %1442 = vmatprep.mubr.bf16.mxu0 0
    %1443 = vmatmul.mubr.bf16.gmra.mrb[0].mxu0 %v1291
    %v1444 = vpop.f32.mrb[0].mxu0
    %v1445 = vadd.f32 0.0, %v1444
    %v1446 = vpop.f32.mrb[0].mxu0
    %v1447 = vadd.f32 0.0, %v1446
    %v1448 = vpop.f32.mrb[0].mxu0
    %v1449 = vpop.f32.mrb[0].mxu0
    %1450 = vdwg.mxu0
    %1451 = vmatprep.subr.bf16.mxu0 %v288
    %1452 = vmatpush1.bf16.msra.mxu0 %v287
    %1453 = vmatprep.subr.bf16.mxu0 %v292
    %1454 = vmatpush1.bf16.msra.mxu0 %v291
    %1455 = vmatprep.subr.bf16.mxu0 %v296
    %1456 = vmatpush1.bf16.msra.mxu0 %v295
    %1457 = vmatprep.subr.bf16.mxu0 %v300
    %1458 = vmatpush1.bf16.msra.mxu0 %v299
    %1459 = vmatprep.subr.bf16.mxu0 %v304
    %1460 = vmatpush1.bf16.msra.mxu0 %v303
    %1461 = vmatprep.subr.bf16.mxu0 %v308
    %1462 = vmatpush1.bf16.msra.mxu0 %v307
    %1463 = vmatprep.subr.bf16.mxu0 %v312
    %1464 = vmatpush1.bf16.msra.mxu0 %v311
    %1465 = vmatprep.subr.bf16.mxu0 %v316
    %1466 = vmatpush1.bf16.msra.mxu0 %v315
    %1467 = vmatprep.subr.bf16.mxu0 0
    %1468 = vmatpush1.bf16.msra.mxu0 0
    %1469 = vmatprep.subr.bf16.mxu0 0
    %1470 = vmatpush1.bf16.msra.mxu0 0
    %1471 = vmatprep.subr.bf16.mxu0 0
    %1472 = vmatpush1.bf16.msra.mxu0 0
    %1473 = vmatprep.subr.bf16.mxu0 0
    %1474 = vmatpush1.bf16.msra.mxu0 0
    %1475 = vmatprep.subr.bf16.mxu0 0
    %1476 = vmatpush1.bf16.msra.mxu0 0
    %1477 = vmatprep.subr.bf16.mxu0 0
    %1478 = vmatpush1.bf16.msra.mxu0 0
    %1479 = vmatprep.subr.bf16.mxu0 0
    %1480 = vmatpush1.bf16.msra.mxu0 0
    %1481 = vmatprep.subr.bf16.mxu0 0
    %1482 = vmatpush1.bf16.msra.mxu0 0
    %1483 = vmatprep.mubr.bf16.mxu0 0
    %1484 = vmatmul.mubr.bf16.gmra.mrb[0].mxu0 %v1291
    %v1485 = vpop.f32.mrb[0].mxu0
    %v1486 = vadd.f32 0.0, %v1485
    %v1487 = vpop.f32.mrb[0].mxu0
    %v1488 = vadd.f32 0.0, %v1487
    %v1489 = vpop.f32.mrb[0].mxu0
    %v1490 = vpop.f32.mrb[0].mxu0
    %1491 = vdwg.mxu0
    %v1492 = vadd.f32 %v1406, %v1445
    %v1493 = vadd.f32 %v1407, %v1447
    %v1494 = vadd.f32 %v1408, %v1486
    %v1495 = vadd.f32 %v1409, %v1488
    %v1496 = vadd.f32 %v1492, %v439
    %v1497 = vadd.f32 %v1493, %v443
    %v1498 = vadd.f32 %v1494, %v447
    %v1499 = vadd.f32 %v1495, %v451
    %v1500 = vxor.u32 %v1496, 2147483648
    %v1501 = vxor.u32 %v1497, 2147483648
    %v1502 = vxor.u32 %v1498, 2147483648
    %v1503 = vmul.f32 %v1500, 1.442695
    %v1504 = vpow.pop %v1503
    %v1505 = vmul.f32 %v1501, 1.442695
    %v1506 = vpow.pop %v1505
    %v1507 = vmul.f32 %v1502, 1.442695
    %v1508 = vpow.pop %v1507
    %v1509 = vadd.f32 %v1504, 1.0
    %v1510 = vadd.f32 %v1506, 1.0
    %v1511 = vadd.f32 %v1508, 1.0
    %v1512 = vrcp.pop %v1509
    %v1513 = vmul.f32 1.0, %v1512
    %v1514 = vrcp.pop %v1510
    %v1515 = vmul.f32 1.0, %v1514
    %v1516 = vrcp.pop %v1511
    %v1517 = vmul.f32 1.0, %v1516
    %v1518 = vtanh.pop %v1499
    %v1519 = vmul.f32 %v1515, %v1288
    %v1520 = vmul.f32 %v1513, %v1518
    %v1521 = vadd.f32 %v1519, %v1520
    %v1522 = vtanh.pop %v1521
    %v1523 = vmul.f32 %v1517, %v1522
    %v1524 = vpack.c.bf16 %v1523, %v1523
    %v1525 = vpack.c.bf16 %v1398, %v1398
    %1526 = vmatprep.subr.bf16.mxu0 %v700
    %1527 = vmatpush1.bf16.msra.mxu0 %v699
    %1528 = vmatprep.subr.bf16.mxu0 %v704
    %1529 = vmatpush1.bf16.msra.mxu0 %v703
    %1530 = vmatprep.subr.bf16.mxu0 %v708
    %1531 = vmatpush1.bf16.msra.mxu0 %v707
    %1532 = vmatprep.subr.bf16.mxu0 %v712
    %1533 = vmatpush1.bf16.msra.mxu0 %v711
    %1534 = vmatprep.subr.bf16.mxu0 %v716
    %1535 = vmatpush1.bf16.msra.mxu0 %v715
    %1536 = vmatprep.subr.bf16.mxu0 %v720
    %1537 = vmatpush1.bf16.msra.mxu0 %v719
    %1538 = vmatprep.subr.bf16.mxu0 %v724
    %1539 = vmatpush1.bf16.msra.mxu0 %v723
    %1540 = vmatprep.subr.bf16.mxu0 %v728
    %1541 = vmatpush1.bf16.msra.mxu0 %v727
    %1542 = vmatprep.subr.bf16.mxu0 %v732
    %1543 = vmatpush1.bf16.msra.mxu0 %v731
    %1544 = vmatprep.subr.bf16.mxu0 %v736
    %1545 = vmatpush1.bf16.msra.mxu0 %v735
    %1546 = vmatprep.subr.bf16.mxu0 %v740
    %1547 = vmatpush1.bf16.msra.mxu0 %v739
    %1548 = vmatprep.subr.bf16.mxu0 %v744
    %1549 = vmatpush1.bf16.msra.mxu0 %v743
    %1550 = vmatprep.subr.bf16.mxu0 %v748
    %1551 = vmatpush1.bf16.msra.mxu0 %v747
    %1552 = vmatprep.subr.bf16.mxu0 %v752
    %1553 = vmatpush1.bf16.msra.mxu0 %v751
    %1554 = vmatprep.subr.bf16.mxu0 %v756
    %1555 = vmatpush1.bf16.msra.mxu0 %v755
    %1556 = vmatprep.subr.bf16.mxu0 %v760
    %1557 = vmatpush1.bf16.msra.mxu0 %v759
    %1558 = vmatprep.mubr.bf16.mxu0 %v1525
    %1559 = vmatmul.mubr.bf16.gmra.mrb[0].mxu0 %v1524
    %v1560 = vpop.f32.mrb[0].mxu0
    %v1561 = vadd.f32 %v490, %v1560
    %v1562 = vpop.f32.mrb[0].mxu0
    %v1563 = vadd.f32 %v494, %v1562
    %v1564 = vpop.f32.mrb[0].mxu0
    %v1565 = vpop.f32.mrb[0].mxu0
    %1566 = vdwg.mxu0
    %1567 = vmatprep.subr.bf16.mxu0 %v702
    %1568 = vmatpush1.bf16.msra.mxu0 %v701
    %1569 = vmatprep.subr.bf16.mxu0 %v706
    %1570 = vmatpush1.bf16.msra.mxu0 %v705
    %1571 = vmatprep.subr.bf16.mxu0 %v710
    %1572 = vmatpush1.bf16.msra.mxu0 %v709
    %1573 = vmatprep.subr.bf16.mxu0 %v714
    %1574 = vmatpush1.bf16.msra.mxu0 %v713
    %1575 = vmatprep.subr.bf16.mxu0 %v718
    %1576 = vmatpush1.bf16.msra.mxu0 %v717
    %1577 = vmatprep.subr.bf16.mxu0 %v722
    %1578 = vmatpush1.bf16.msra.mxu0 %v721
    %1579 = vmatprep.subr.bf16.mxu0 %v726
    %1580 = vmatpush1.bf16.msra.mxu0 %v725
    %1581 = vmatprep.subr.bf16.mxu0 %v730
    %1582 = vmatpush1.bf16.msra.mxu0 %v729
    %1583 = vmatprep.subr.bf16.mxu0 %v734
    %1584 = vmatpush1.bf16.msra.mxu0 %v733
    %1585 = vmatprep.subr.bf16.mxu0 %v738
    %1586 = vmatpush1.bf16.msra.mxu0 %v737
    %1587 = vmatprep.subr.bf16.mxu0 %v742
    %1588 = vmatpush1.bf16.msra.mxu0 %v741
    %1589 = vmatprep.subr.bf16.mxu0 %v746
    %1590 = vmatpush1.bf16.msra.mxu0 %v745
    %1591 = vmatprep.subr.bf16.mxu0 %v750
    %1592 = vmatpush1.bf16.msra.mxu0 %v749
    %1593 = vmatprep.subr.bf16.mxu0 %v754
    %1594 = vmatpush1.bf16.msra.mxu0 %v753
    %1595 = vmatprep.subr.bf16.mxu0 %v758
    %1596 = vmatpush1.bf16.msra.mxu0 %v757
    %1597 = vmatprep.subr.bf16.mxu0 %v762
    %1598 = vmatpush1.bf16.msra.mxu0 %v761
    %1599 = vmatprep.mubr.bf16.mxu0 %v1525
    %1600 = vmatmul.mubr.bf16.gmra.mrb[0].mxu0 %v1524
    %v1601 = vpop.f32.mrb[0].mxu0
    %v1602 = vadd.f32 %v498, %v1601
    %v1603 = vpop.f32.mrb[0].mxu0
    %v1604 = vadd.f32 %v502, %v1603
    %v1605 = vpop.f32.mrb[0].mxu0
    %v1606 = vpop.f32.mrb[0].mxu0
    %1607 = vdwg.mxu0
    %v1608 = vxor.u32 %v1561, 2147483648
    %v1609 = vxor.u32 %v1563, 2147483648
    %v1610 = vxor.u32 %v1602, 2147483648
    %v1611 = vmul.f32 %v1608, 1.442695
    %v1612 = vpow.pop %v1611
    %v1613 = vmul.f32 %v1609, 1.442695
    %v1614 = vpow.pop %v1613
    %v1615 = vmul.f32 %v1610, 1.442695
    %v1616 = vpow.pop %v1615
    %v1617 = vadd.f32 %v1612, 1.0
    %v1618 = vadd.f32 %v1614, 1.0
    %v1619 = vadd.f32 %v1616, 1.0
    %v1620 = vrcp.pop %v1617
    %v1621 = vmul.f32 1.0, %v1620
    %v1622 = vrcp.pop %v1618
    %v1623 = vmul.f32 1.0, %v1622
    %v1624 = vrcp.pop %v1619
    %v1625 = vmul.f32 1.0, %v1624
    %v1626 = vtanh.pop %v1604
    %v1627 = vmul.f32 %v1623, %v1396
    %v1628 = vmul.f32 %v1621, %v1626
    %v1629 = vadd.f32 %v1627, %v1628
    %v1630 = vtanh.pop %v1629
    %v1631 = vmul.f32 %v1625, %v1630
    %s1632 = scalar_lea.vmem %s0, 8
    %v1633 = vld [vmem:[%s1632] sm:$0x3]
    %1635 = vset.pattern.permute.xlu0 0
    %1636 = vperm.xlu0 %1635, %v1633
    %v1637 = vpop.permute.xlu0 %1636
    %v1639 = vmul.f32 %v1637, %v168
    %v1640 = vmul.f32 %v1637, %v172
    %v1641 = vmul.f32 %v1637, %v176
    %v1642 = vmul.f32 %v1637, %v180
    %1643 = vmatprep.subr.bf16.mxu0 %v286
    %1644 = vmatpush1.bf16.msra.mxu0 %v285
    %1645 = vmatprep.subr.bf16.mxu0 %v290
    %1646 = vmatpush1.bf16.msra.mxu0 %v289
    %1647 = vmatprep.subr.bf16.mxu0 %v294
    %1648 = vmatpush1.bf16.msra.mxu0 %v293
    %1649 = vmatprep.subr.bf16.mxu0 %v298
    %1650 = vmatpush1.bf16.msra.mxu0 %v297
    %1651 = vmatprep.subr.bf16.mxu0 %v302
    %1652 = vmatpush1.bf16.msra.mxu0 %v301
    %1653 = vmatprep.subr.bf16.mxu0 %v306
    %1654 = vmatpush1.bf16.msra.mxu0 %v305
    %1655 = vmatprep.subr.bf16.mxu0 %v310
    %1656 = vmatpush1.bf16.msra.mxu0 %v309
    %1657 = vmatprep.subr.bf16.mxu0 %v314
    %1658 = vmatpush1.bf16.msra.mxu0 %v313
    %1659 = vmatprep.subr.bf16.mxu0 0
    %1660 = vmatpush1.bf16.msra.mxu0 0
    %1661 = vmatprep.subr.bf16.mxu0 0
    %1662 = vmatpush1.bf16.msra.mxu0 0
    %1663 = vmatprep.subr.bf16.mxu0 0
    %1664 = vmatpush1.bf16.msra.mxu0 0
    %1665 = vmatprep.subr.bf16.mxu0 0
    %1666 = vmatpush1.bf16.msra.mxu0 0
    %1667 = vmatprep.subr.bf16.mxu0 0
    %1668 = vmatpush1.bf16.msra.mxu0 0
    %1669 = vmatprep.subr.bf16.mxu0 0
    %1670 = vmatpush1.bf16.msra.mxu0 0
    %1671 = vmatprep.subr.bf16.mxu0 0
    %1672 = vmatpush1.bf16.msra.mxu0 0
    %1673 = vmatprep.subr.bf16.mxu0 0
    %1674 = vmatpush1.bf16.msra.mxu0 0
    %1675 = vmatprep.mubr.bf16.mxu0 0
    %1676 = vmatmul.mubr.bf16.gmra.mrb[0].mxu0 %v1524
    %v1677 = vpop.f32.mrb[0].mxu0
    %v1678 = vadd.f32 0.0, %v1677
    %v1679 = vpop.f32.mrb[0].mxu0
    %v1680 = vadd.f32 0.0, %v1679
    %v1681 = vpop.f32.mrb[0].mxu0
    %v1682 = vpop.f32.mrb[0].mxu0
    %1683 = vdwg.mxu0
    %1684 = vmatprep.subr.bf16.mxu0 %v288
    %1685 = vmatpush1.bf16.msra.mxu0 %v287
    %1686 = vmatprep.subr.bf16.mxu0 %v292
    %1687 = vmatpush1.bf16.msra.mxu0 %v291
    %1688 = vmatprep.subr.bf16.mxu0 %v296
    %1689 = vmatpush1.bf16.msra.mxu0 %v295
    %1690 = vmatprep.subr.bf16.mxu0 %v300
    %1691 = vmatpush1.bf16.msra.mxu0 %v299
    %1692 = vmatprep.subr.bf16.mxu0 %v304
    %1693 = vmatpush1.bf16.msra.mxu0 %v303
    %1694 = vmatprep.subr.bf16.mxu0 %v308
    %1695 = vmatpush1.bf16.msra.mxu0 %v307
    %1696 = vmatprep.subr.bf16.mxu0 %v312
    %1697 = vmatpush1.bf16.msra.mxu0 %v311
    %1698 = vmatprep.subr.bf16.mxu0 %v316
    %1699 = vmatpush1.bf16.msra.mxu0 %v315
    %1700 = vmatprep.subr.bf16.mxu0 0
    %1701 = vmatpush1.bf16.msra.mxu0 0
    %1702 = vmatprep.subr.bf16.mxu0 0
    %1703 = vmatpush1.bf16.msra.mxu0 0
    %1704 = vmatprep.subr.bf16.mxu0 0
    %1705 = vmatpush1.bf16.msra.mxu0 0
    %1706 = vmatprep.subr.bf16.mxu0 0
    %1707 = vmatpush1.bf16.msra.mxu0 0
    %1708 = vmatprep.subr.bf16.mxu0 0
    %1709 = vmatpush1.bf16.msra.mxu0 0
    %1710 = vmatprep.subr.bf16.mxu0 0
    %1711 = vmatpush1.bf16.msra.mxu0 0
    %1712 = vmatprep.subr.bf16.mxu0 0
    %1713 = vmatpush1.bf16.msra.mxu0 0
    %1714 = vmatprep.subr.bf16.mxu0 0
    %1715 = vmatpush1.bf16.msra.mxu0 0
    %1716 = vmatprep.mubr.bf16.mxu0 0
    %1717 = vmatmul.mubr.bf16.gmra.mrb[0].mxu0 %v1524
    %v1718 = vpop.f32.mrb[0].mxu0
    %v1719 = vadd.f32 0.0, %v1718
    %v1720 = vpop.f32.mrb[0].mxu0
    %v1721 = vadd.f32 0.0, %v1720
    %v1722 = vpop.f32.mrb[0].mxu0
    %v1723 = vpop.f32.mrb[0].mxu0
    %1724 = vdwg.mxu0
    %v1725 = vadd.f32 %v1639, %v1678
    %v1726 = vadd.f32 %v1640, %v1680
    %v1727 = vadd.f32 %v1641, %v1719
    %v1728 = vadd.f32 %v1642, %v1721
    %v1729 = vadd.f32 %v1725, %v439
    %v1730 = vadd.f32 %v1726, %v443
    %v1731 = vadd.f32 %v1727, %v447
    %v1732 = vadd.f32 %v1728, %v451
    %v1733 = vxor.u32 %v1729, 2147483648
    %v1734 = vxor.u32 %v1730, 2147483648
    %v1735 = vxor.u32 %v1731, 2147483648
    %v1736 = vmul.f32 %v1733, 1.442695
    %v1737 = vpow.pop %v1736
    %v1738 = vmul.f32 %v1734, 1.442695
    %v1739 = vpow.pop %v1738
    %v1740 = vmul.f32 %v1735, 1.442695
    %v1741 = vpow.pop %v1740
    %v1742 = vadd.f32 %v1737, 1.0
    %v1743 = vadd.f32 %v1739, 1.0
    %v1744 = vadd.f32 %v1741, 1.0
    %v1745 = vrcp.pop %v1742
    %v1746 = vmul.f32 1.0, %v1745
    %v1747 = vrcp.pop %v1743
    %v1748 = vmul.f32 1.0, %v1747
    %v1749 = vrcp.pop %v1744
    %v1750 = vmul.f32 1.0, %v1749
    %v1751 = vtanh.pop %v1732
    %v1752 = vmul.f32 %v1748, %v1521
    %v1753 = vmul.f32 %v1746, %v1751
    %v1754 = vadd.f32 %v1752, %v1753
    %v1755 = vtanh.pop %v1754
    %v1756 = vmul.f32 %v1750, %v1755
    %v1757 = vpack.c.bf16 %v1756, %v1756
    %v1758 = vpack.c.bf16 %v1631, %v1631
    %1759 = vmatprep.subr.bf16.mxu0 %v700
    %1760 = vmatpush1.bf16.msra.mxu0 %v699
    %1761 = vmatprep.subr.bf16.mxu0 %v704
    %1762 = vmatpush1.bf16.msra.mxu0 %v703
    %1763 = vmatprep.subr.bf16.mxu0 %v708
    %1764 = vmatpush1.bf16.msra.mxu0 %v707
    %1765 = vmatprep.subr.bf16.mxu0 %v712
    %1766 = vmatpush1.bf16.msra.mxu0 %v711
    %1767 = vmatprep.subr.bf16.mxu0 %v716
    %1768 = vmatpush1.bf16.msra.mxu0 %v715
    %1769 = vmatprep.subr.bf16.mxu0 %v720
    %1770 = vmatpush1.bf16.msra.mxu0 %v719
    %1771 = vmatprep.subr.bf16.mxu0 %v724
    %1772 = vmatpush1.bf16.msra.mxu0 %v723
    %1773 = vmatprep.subr.bf16.mxu0 %v728
    %1774 = vmatpush1.bf16.msra.mxu0 %v727
    %1775 = vmatprep.subr.bf16.mxu0 %v732
    %1776 = vmatpush1.bf16.msra.mxu0 %v731
    %1777 = vmatprep.subr.bf16.mxu0 %v736
    %1778 = vmatpush1.bf16.msra.mxu0 %v735
    %1779 = vmatprep.subr.bf16.mxu0 %v740
    %1780 = vmatpush1.bf16.msra.mxu0 %v739
    %1781 = vmatprep.subr.bf16.mxu0 %v744
    %1782 = vmatpush1.bf16.msra.mxu0 %v743
    %1783 = vmatprep.subr.bf16.mxu0 %v748
    %1784 = vmatpush1.bf16.msra.mxu0 %v747
    %1785 = vmatprep.subr.bf16.mxu0 %v752
    %1786 = vmatpush1.bf16.msra.mxu0 %v751
    %1787 = vmatprep.subr.bf16.mxu0 %v756
    %1788 = vmatpush1.bf16.msra.mxu0 %v755
    %1789 = vmatprep.subr.bf16.mxu0 %v760
    %1790 = vmatpush1.bf16.msra.mxu0 %v759
    %1791 = vmatprep.mubr.bf16.mxu0 %v1758
    %1792 = vmatmul.mubr.bf16.gmra.mrb[0].mxu0 %v1757
    %v1793 = vpop.f32.mrb[0].mxu0
    %v1794 = vadd.f32 %v490, %v1793
    %v1795 = vpop.f32.mrb[0].mxu0
    %v1796 = vadd.f32 %v494, %v1795
    %v1797 = vpop.f32.mrb[0].mxu0
    %v1798 = vpop.f32.mrb[0].mxu0
    %1799 = vdwg.mxu0
    %1800 = vmatprep.subr.bf16.mxu0 %v702
    %1801 = vmatpush1.bf16.msra.mxu0 %v701
    %1802 = vmatprep.subr.bf16.mxu0 %v706
    %1803 = vmatpush1.bf16.msra.mxu0 %v705
    %1804 = vmatprep.subr.bf16.mxu0 %v710
    %1805 = vmatpush1.bf16.msra.mxu0 %v709
    %1806 = vmatprep.subr.bf16.mxu0 %v714
    %1807 = vmatpush1.bf16.msra.mxu0 %v713
    %1808 = vmatprep.subr.bf16.mxu0 %v718
    %1809 = vmatpush1.bf16.msra.mxu0 %v717
    %1810 = vmatprep.subr.bf16.mxu0 %v722
    %1811 = vmatpush1.bf16.msra.mxu0 %v721
    %1812 = vmatprep.subr.bf16.mxu0 %v726
    %1813 = vmatpush1.bf16.msra.mxu0 %v725
    %1814 = vmatprep.subr.bf16.mxu0 %v730
    %1815 = vmatpush1.bf16.msra.mxu0 %v729
    %1816 = vmatprep.subr.bf16.mxu0 %v734
    %1817 = vmatpush1.bf16.msra.mxu0 %v733
    %1818 = vmatprep.subr.bf16.mxu0 %v738
    %1819 = vmatpush1.bf16.msra.mxu0 %v737
    %1820 = vmatprep.subr.bf16.mxu0 %v742
    %1821 = vmatpush1.bf16.msra.mxu0 %v741
    %1822 = vmatprep.subr.bf16.mxu0 %v746
    %1823 = vmatpush1.bf16.msra.mxu0 %v745
    %1824 = vmatprep.subr.bf16.mxu0 %v750
    %1825 = vmatpush1.bf16.msra.mxu0 %v749
    %1826 = vmatprep.subr.bf16.mxu0 %v754
    %1827 = vmatpush1.bf16.msra.mxu0 %v753
    %1828 = vmatprep.subr.bf16.mxu0 %v758
    %1829 = vmatpush1.bf16.msra.mxu0 %v757
    %1830 = vmatprep.subr.bf16.mxu0 %v762
    %1831 = vmatpush1.bf16.msra.mxu0 %v761
    %1832 = vmatprep.mubr.bf16.mxu0 %v1758
    %1833 = vmatmul.mubr.bf16.gmra.mrb[0].mxu0 %v1757
    %v1834 = vpop.f32.mrb[0].mxu0
    %v1835 = vadd.f32 %v498, %v1834
    %v1836 = vpop.f32.mrb[0].mxu0
    %v1837 = vadd.f32 %v502, %v1836
    %v1838 = vpop.f32.mrb[0].mxu0
    %v1839 = vpop.f32.mrb[0].mxu0
    %1840 = vdwg.mxu0
    %v1841 = vxor.u32 %v1794, 2147483648
    %v1842 = vxor.u32 %v1796, 2147483648
    %v1843 = vxor.u32 %v1835, 2147483648
    %v1844 = vmul.f32 %v1841, 1.442695
    %v1845 = vpow.pop %v1844
    %v1846 = vmul.f32 %v1842, 1.442695
    %v1847 = vpow.pop %v1846
    %v1848 = vmul.f32 %v1843, 1.442695
    %v1849 = vpow.pop %v1848
    %v1850 = vadd.f32 %v1845, 1.0
    %v1851 = vadd.f32 %v1847, 1.0
    %v1852 = vadd.f32 %v1849, 1.0
    %v1853 = vrcp.pop %v1850
    %v1854 = vmul.f32 1.0, %v1853
    %v1855 = vrcp.pop %v1851
    %v1856 = vmul.f32 1.0, %v1855
    %v1857 = vrcp.pop %v1852
    %v1858 = vmul.f32 1.0, %v1857
    %v1859 = vtanh.pop %v1837
    %v1860 = vmul.f32 %v1856, %v1629
    %v1861 = vmul.f32 %v1854, %v1859
    %v1862 = vadd.f32 %v1860, %v1861
    %v1863 = vtanh.pop %v1862
    %v1864 = vmul.f32 %v1858, %v1863
    %s1865 = scalar_lea.vmem %s0, 10
    %v1866 = vld [vmem:[%s1865] sm:$0x3]
    %1868 = vset.pattern.permute.xlu0 0
    %1869 = vperm.xlu0 %1868, %v1866
    %v1870 = vpop.permute.xlu0 %1869
    %v1872 = vmul.f32 %v1870, %v168
    %v1873 = vmul.f32 %v1870, %v172
    %v1874 = vmul.f32 %v1870, %v176
    %v1875 = vmul.f32 %v1870, %v180
    %1876 = vmatprep.subr.bf16.mxu0 %v286
    %1877 = vmatpush1.bf16.msra.mxu0 %v285
    %1878 = vmatprep.subr.bf16.mxu0 %v290
    %1879 = vmatpush1.bf16.msra.mxu0 %v289
    %1880 = vmatprep.subr.bf16.mxu0 %v294
    %1881 = vmatpush1.bf16.msra.mxu0 %v293
    %1882 = vmatprep.subr.bf16.mxu0 %v298
    %1883 = vmatpush1.bf16.msra.mxu0 %v297
    %1884 = vmatprep.subr.bf16.mxu0 %v302
    %1885 = vmatpush1.bf16.msra.mxu0 %v301
    %1886 = vmatprep.subr.bf16.mxu0 %v306
    %1887 = vmatpush1.bf16.msra.mxu0 %v305
    %1888 = vmatprep.subr.bf16.mxu0 %v310
    %1889 = vmatpush1.bf16.msra.mxu0 %v309
    %1890 = vmatprep.subr.bf16.mxu0 %v314
    %1891 = vmatpush1.bf16.msra.mxu0 %v313
    %1892 = vmatprep.subr.bf16.mxu0 0
    %1893 = vmatpush1.bf16.msra.mxu0 0
    %1894 = vmatprep.subr.bf16.mxu0 0
    %1895 = vmatpush1.bf16.msra.mxu0 0
    %1896 = vmatprep.subr.bf16.mxu0 0
    %1897 = vmatpush1.bf16.msra.mxu0 0
    %1898 = vmatprep.subr.bf16.mxu0 0
    %1899 = vmatpush1.bf16.msra.mxu0 0
    %1900 = vmatprep.subr.bf16.mxu0 0
    %1901 = vmatpush1.bf16.msra.mxu0 0
    %1902 = vmatprep.subr.bf16.mxu0 0
    %1903 = vmatpush1.bf16.msra.mxu0 0
    %1904 = vmatprep.subr.bf16.mxu0 0
    %1905 = vmatpush1.bf16.msra.mxu0 0
    %1906 = vmatprep.subr.bf16.mxu0 0
    %1907 = vmatpush1.bf16.msra.mxu0 0
    %1908 = vmatprep.mubr.bf16.mxu0 0
    %1909 = vmatmul.mubr.bf16.gmra.mrb[0].mxu0 %v1757
    %v1910 = vpop.f32.mrb[0].mxu0
    %v1911 = vadd.f32 0.0, %v1910
    %v1912 = vpop.f32.mrb[0].mxu0
    %v1913 = vadd.f32 0.0, %v1912
    %v1914 = vpop.f32.mrb[0].mxu0
    %v1915 = vpop.f32.mrb[0].mxu0
    %1916 = vdwg.mxu0
    %1917 = vmatprep.subr.bf16.mxu0 %v288
    %1918 = vmatpush1.bf16.msra.mxu0 %v287
    %1919 = vmatprep.subr.bf16.mxu0 %v292
    %1920 = vmatpush1.bf16.msra.mxu0 %v291
    %1921 = vmatprep.subr.bf16.mxu0 %v296
    %1922 = vmatpush1.bf16.msra.mxu0 %v295
    %1923 = vmatprep.subr.bf16.mxu0 %v300
    %1924 = vmatpush1.bf16.msra.mxu0 %v299
    %1925 = vmatprep.subr.bf16.mxu0 %v304
    %1926 = vmatpush1.bf16.msra.mxu0 %v303
    %1927 = vmatprep.subr.bf16.mxu0 %v308
    %1928 = vmatpush1.bf16.msra.mxu0 %v307
    %1929 = vmatprep.subr.bf16.mxu0 %v312
    %1930 = vmatpush1.bf16.msra.mxu0 %v311
    %1931 = vmatprep.subr.bf16.mxu0 %v316
    %1932 = vmatpush1.bf16.msra.mxu0 %v315
    %1933 = vmatprep.subr.bf16.mxu0 0
    %1934 = vmatpush1.bf16.msra.mxu0 0
    %1935 = vmatprep.subr.bf16.mxu0 0
    %1936 = vmatpush1.bf16.msra.mxu0 0
    %1937 = vmatprep.subr.bf16.mxu0 0
    %1938 = vmatpush1.bf16.msra.mxu0 0
    %1939 = vmatprep.subr.bf16.mxu0 0
    %1940 = vmatpush1.bf16.msra.mxu0 0
    %1941 = vmatprep.subr.bf16.mxu0 0
    %1942 = vmatpush1.bf16.msra.mxu0 0
    %1943 = vmatprep.subr.bf16.mxu0 0
    %1944 = vmatpush1.bf16.msra.mxu0 0
    %1945 = vmatprep.subr.bf16.mxu0 0
    %1946 = vmatpush1.bf16.msra.mxu0 0
    %1947 = vmatprep.subr.bf16.mxu0 0
    %1948 = vmatpush1.bf16.msra.mxu0 0
    %1949 = vmatprep.mubr.bf16.mxu0 0
    %1950 = vmatmul.mubr.bf16.gmra.mrb[0].mxu0 %v1757
    %v1951 = vpop.f32.mrb[0].mxu0
    %v1952 = vadd.f32 0.0, %v1951
    %v1953 = vpop.f32.mrb[0].mxu0
    %v1954 = vadd.f32 0.0, %v1953
    %v1955 = vpop.f32.mrb[0].mxu0
    %v1956 = vpop.f32.mrb[0].mxu0
    %1957 = vdwg.mxu0
    %v1958 = vadd.f32 %v1872, %v1911
    %v1959 = vadd.f32 %v1873, %v1913
    %v1960 = vadd.f32 %v1874, %v1952
    %v1961 = vadd.f32 %v1875, %v1954
    %v1962 = vadd.f32 %v1958, %v439
    %v1963 = vadd.f32 %v1959, %v443
    %v1964 = vadd.f32 %v1960, %v447
    %v1965 = vadd.f32 %v1961, %v451
    %v1966 = vxor.u32 %v1962, 2147483648
    %v1967 = vxor.u32 %v1963, 2147483648
    %v1968 = vxor.u32 %v1964, 2147483648
    %v1969 = vmul.f32 %v1966, 1.442695
    %v1970 = vpow.pop %v1969
    %v1971 = vmul.f32 %v1967, 1.442695
    %v1972 = vpow.pop %v1971
    %v1973 = vmul.f32 %v1968, 1.442695
    %v1974 = vpow.pop %v1973
    %v1975 = vadd.f32 %v1970, 1.0
    %v1976 = vadd.f32 %v1972, 1.0
    %v1977 = vadd.f32 %v1974, 1.0
    %v1978 = vrcp.pop %v1975
    %v1979 = vmul.f32 1.0, %v1978
    %v1980 = vrcp.pop %v1976
    %v1981 = vmul.f32 1.0, %v1980
    %v1982 = vrcp.pop %v1977
    %v1983 = vmul.f32 1.0, %v1982
    %v1984 = vtanh.pop %v1965
    %v1985 = vmul.f32 %v1981, %v1754
    %v1986 = vmul.f32 %v1979, %v1984
    %v1987 = vadd.f32 %v1985, %v1986
    %v1988 = vtanh.pop %v1987
    %v1989 = vmul.f32 %v1983, %v1988
    %v1990 = vpack.c.bf16 %v1989, %v1989
    %v1991 = vpack.c.bf16 %v1864, %v1864
    %1992 = vmatprep.subr.bf16.mxu0 %v700
    %1993 = vmatpush1.bf16.msra.mxu0 %v699
    %1994 = vmatprep.subr.bf16.mxu0 %v704
    %1995 = vmatpush1.bf16.msra.mxu0 %v703
    %1996 = vmatprep.subr.bf16.mxu0 %v708
    %1997 = vmatpush1.bf16.msra.mxu0 %v707
    %1998 = vmatprep.subr.bf16.mxu0 %v712
    %1999 = vmatpush1.bf16.msra.mxu0 %v711
    %2000 = vmatprep.subr.bf16.mxu0 %v716
    %2001 = vmatpush1.bf16.msra.mxu0 %v715
    %2002 = vmatprep.subr.bf16.mxu0 %v720
    %2003 = vmatpush1.bf16.msra.mxu0 %v719
    %2004 = vmatprep.subr.bf16.mxu0 %v724
    %2005 = vmatpush1.bf16.msra.mxu0 %v723
    %2006 = vmatprep.subr.bf16.mxu0 %v728
    %2007 = vmatpush1.bf16.msra.mxu0 %v727
    %2008 = vmatprep.subr.bf16.mxu0 %v732
    %2009 = vmatpush1.bf16.msra.mxu0 %v731
    %2010 = vmatprep.subr.bf16.mxu0 %v736
    %2011 = vmatpush1.bf16.msra.mxu0 %v735
    %2012 = vmatprep.subr.bf16.mxu0 %v740
    %2013 = vmatpush1.bf16.msra.mxu0 %v739
    %2014 = vmatprep.subr.bf16.mxu0 %v744
    %2015 = vmatpush1.bf16.msra.mxu0 %v743
    %2016 = vmatprep.subr.bf16.mxu0 %v748
    %2017 = vmatpush1.bf16.msra.mxu0 %v747
    %2018 = vmatprep.subr.bf16.mxu0 %v752
    %2019 = vmatpush1.bf16.msra.mxu0 %v751
    %2020 = vmatprep.subr.bf16.mxu0 %v756
    %2021 = vmatpush1.bf16.msra.mxu0 %v755
    %2022 = vmatprep.subr.bf16.mxu0 %v760
    %2023 = vmatpush1.bf16.msra.mxu0 %v759
    %2024 = vmatprep.mubr.bf16.mxu0 %v1991
    %2025 = vmatmul.mubr.bf16.gmra.mrb[0].mxu0 %v1990
    %v2026 = vpop.f32.mrb[0].mxu0
    %v2027 = vadd.f32 %v490, %v2026
    %v2028 = vpop.f32.mrb[0].mxu0
    %v2029 = vadd.f32 %v494, %v2028
    %v2030 = vpop.f32.mrb[0].mxu0
    %v2031 = vpop.f32.mrb[0].mxu0
    %2032 = vdwg.mxu0
    %2033 = vmatprep.subr.bf16.mxu0 %v702
    %2034 = vmatpush1.bf16.msra.mxu0 %v701
    %2035 = vmatprep.subr.bf16.mxu0 %v706
    %2036 = vmatpush1.bf16.msra.mxu0 %v705
    %2037 = vmatprep.subr.bf16.mxu0 %v710
    %2038 = vmatpush1.bf16.msra.mxu0 %v709
    %2039 = vmatprep.subr.bf16.mxu0 %v714
    %2040 = vmatpush1.bf16.msra.mxu0 %v713
    %2041 = vmatprep.subr.bf16.mxu0 %v718
    %2042 = vmatpush1.bf16.msra.mxu0 %v717
    %2043 = vmatprep.subr.bf16.mxu0 %v722
    %2044 = vmatpush1.bf16.msra.mxu0 %v721
    %2045 = vmatprep.subr.bf16.mxu0 %v726
    %2046 = vmatpush1.bf16.msra.mxu0 %v725
    %2047 = vmatprep.subr.bf16.mxu0 %v730
    %2048 = vmatpush1.bf16.msra.mxu0 %v729
    %2049 = vmatprep.subr.bf16.mxu0 %v734
    %2050 = vmatpush1.bf16.msra.mxu0 %v733
    %2051 = vmatprep.subr.bf16.mxu0 %v738
    %2052 = vmatpush1.bf16.msra.mxu0 %v737
    %2053 = vmatprep.subr.bf16.mxu0 %v742
    %2054 = vmatpush1.bf16.msra.mxu0 %v741
    %2055 = vmatprep.subr.bf16.mxu0 %v746
    %2056 = vmatpush1.bf16.msra.mxu0 %v745
    %2057 = vmatprep.subr.bf16.mxu0 %v750
    %2058 = vmatpush1.bf16.msra.mxu0 %v749
    %2059 = vmatprep.subr.bf16.mxu0 %v754
    %2060 = vmatpush1.bf16.msra.mxu0 %v753
    %2061 = vmatprep.subr.bf16.mxu0 %v758
    %2062 = vmatpush1.bf16.msra.mxu0 %v757
    %2063 = vmatprep.subr.bf16.mxu0 %v762
    %2064 = vmatpush1.bf16.msra.mxu0 %v761
    %2065 = vmatprep.mubr.bf16.mxu0 %v1991
    %2066 = vmatmul.mubr.bf16.gmra.mrb[0].mxu0 %v1990
    %v2067 = vpop.f32.mrb[0].mxu0
    %v2068 = vadd.f32 %v498, %v2067
    %v2069 = vpop.f32.mrb[0].mxu0
    %v2070 = vadd.f32 %v502, %v2069
    %v2071 = vpop.f32.mrb[0].mxu0
    %v2072 = vpop.f32.mrb[0].mxu0
    %2073 = vdwg.mxu0
    %v2074 = vxor.u32 %v2027, 2147483648
    %v2075 = vxor.u32 %v2029, 2147483648
    %v2076 = vxor.u32 %v2068, 2147483648
    %v2077 = vmul.f32 %v2074, 1.442695
    %v2078 = vpow.pop %v2077
    %v2079 = vmul.f32 %v2075, 1.442695
    %v2080 = vpow.pop %v2079
    %v2081 = vmul.f32 %v2076, 1.442695
    %v2082 = vpow.pop %v2081
    %v2083 = vadd.f32 %v2078, 1.0
    %v2084 = vadd.f32 %v2080, 1.0
    %v2085 = vadd.f32 %v2082, 1.0
    %v2086 = vrcp.pop %v2083
    %v2087 = vmul.f32 1.0, %v2086
    %v2088 = vrcp.pop %v2084
    %v2089 = vmul.f32 1.0, %v2088
    %v2090 = vrcp.pop %v2085
    %v2091 = vmul.f32 1.0, %v2090
    %v2092 = vtanh.pop %v2070
    %v2093 = vmul.f32 %v2089, %v1862
    %v2094 = vmul.f32 %v2087, %v2092
    %v2095 = vadd.f32 %v2093, %v2094
    %v2096 = vtanh.pop %v2095
    %v2097 = vmul.f32 %v2091, %v2096
    %s2098 = scalar_lea.vmem %s0, 12
    %v2099 = vld [vmem:[%s2098] sm:$0x3]
    %2101 = vset.pattern.permute.xlu0 0
    %2102 = vperm.xlu0 %2101, %v2099
    %v2103 = vpop.permute.xlu0 %2102
    %v2105 = vmul.f32 %v2103, %v168
    %v2106 = vmul.f32 %v2103, %v172
    %v2107 = vmul.f32 %v2103, %v176
    %v2108 = vmul.f32 %v2103, %v180
    %2109 = vmatprep.subr.bf16.mxu0 %v286
    %2110 = vmatpush1.bf16.msra.mxu0 %v285
    %2111 = vmatprep.subr.bf16.mxu0 %v290
    %2112 = vmatpush1.bf16.msra.mxu0 %v289
    %2113 = vmatprep.subr.bf16.mxu0 %v294
    %2114 = vmatpush1.bf16.msra.mxu0 %v293
    %2115 = vmatprep.subr.bf16.mxu0 %v298
    %2116 = vmatpush1.bf16.msra.mxu0 %v297
    %2117 = vmatprep.subr.bf16.mxu0 %v302
    %2118 = vmatpush1.bf16.msra.mxu0 %v301
    %2119 = vmatprep.subr.bf16.mxu0 %v306
    %2120 = vmatpush1.bf16.msra.mxu0 %v305
    %2121 = vmatprep.subr.bf16.mxu0 %v310
    %2122 = vmatpush1.bf16.msra.mxu0 %v309
    %2123 = vmatprep.subr.bf16.mxu0 %v314
    %2124 = vmatpush1.bf16.msra.mxu0 %v313
    %2125 = vmatprep.subr.bf16.mxu0 0
    %2126 = vmatpush1.bf16.msra.mxu0 0
    %2127 = vmatprep.subr.bf16.mxu0 0
    %2128 = vmatpush1.bf16.msra.mxu0 0
    %2129 = vmatprep.subr.bf16.mxu0 0
    %2130 = vmatpush1.bf16.msra.mxu0 0
    %2131 = vmatprep.subr.bf16.mxu0 0
    %2132 = vmatpush1.bf16.msra.mxu0 0
    %2133 = vmatprep.subr.bf16.mxu0 0
    %2134 = vmatpush1.bf16.msra.mxu0 0
    %2135 = vmatprep.subr.bf16.mxu0 0
    %2136 = vmatpush1.bf16.msra.mxu0 0
    %2137 = vmatprep.subr.bf16.mxu0 0
    %2138 = vmatpush1.bf16.msra.mxu0 0
    %2139 = vmatprep.subr.bf16.mxu0 0
    %2140 = vmatpush1.bf16.msra.mxu0 0
    %2141 = vmatprep.mubr.bf16.mxu0 0
    %2142 = vmatmul.mubr.bf16.gmra.mrb[0].mxu0 %v1990
    %v2143 = vpop.f32.mrb[0].mxu0
    %v2144 = vadd.f32 0.0, %v2143
    %v2145 = vpop.f32.mrb[0].mxu0
    %v2146 = vadd.f32 0.0, %v2145
    %v2147 = vpop.f32.mrb[0].mxu0
    %v2148 = vpop.f32.mrb[0].mxu0
    %2149 = vdwg.mxu0
    %2150 = vmatprep.subr.bf16.mxu0 %v288
    %2151 = vmatpush1.bf16.msra.mxu0 %v287
    %2152 = vmatprep.subr.bf16.mxu0 %v292
    %2153 = vmatpush1.bf16.msra.mxu0 %v291
    %2154 = vmatprep.subr.bf16.mxu0 %v296
    %2155 = vmatpush1.bf16.msra.mxu0 %v295
    %2156 = vmatprep.subr.bf16.mxu0 %v300
    %2157 = vmatpush1.bf16.msra.mxu0 %v299
    %2158 = vmatprep.subr.bf16.mxu0 %v304
    %2159 = vmatpush1.bf16.msra.mxu0 %v303
    %2160 = vmatprep.subr.bf16.mxu0 %v308
    %2161 = vmatpush1.bf16.msra.mxu0 %v307
    %2162 = vmatprep.subr.bf16.mxu0 %v312
    %2163 = vmatpush1.bf16.msra.mxu0 %v311
    %2164 = vmatprep.subr.bf16.mxu0 %v316
    %2165 = vmatpush1.bf16.msra.mxu0 %v315
    %2166 = vmatprep.subr.bf16.mxu0 0
    %2167 = vmatpush1.bf16.msra.mxu0 0
    %2168 = vmatprep.subr.bf16.mxu0 0
    %2169 = vmatpush1.bf16.msra.mxu0 0
    %2170 = vmatprep.subr.bf16.mxu0 0
    %2171 = vmatpush1.bf16.msra.mxu0 0
    %2172 = vmatprep.subr.bf16.mxu0 0
    %2173 = vmatpush1.bf16.msra.mxu0 0
    %2174 = vmatprep.subr.bf16.mxu0 0
    %2175 = vmatpush1.bf16.msra.mxu0 0
    %2176 = vmatprep.subr.bf16.mxu0 0
    %2177 = vmatpush1.bf16.msra.mxu0 0
    %2178 = vmatprep.subr.bf16.mxu0 0
    %2179 = vmatpush1.bf16.msra.mxu0 0
    %2180 = vmatprep.subr.bf16.mxu0 0
    %2181 = vmatpush1.bf16.msra.mxu0 0
    %2182 = vmatprep.mubr.bf16.mxu0 0
    %2183 = vmatmul.mubr.bf16.gmra.mrb[0].mxu0 %v1990
    %v2184 = vpop.f32.mrb[0].mxu0
    %v2185 = vadd.f32 0.0, %v2184
    %v2186 = vpop.f32.mrb[0].mxu0
    %v2187 = vadd.f32 0.0, %v2186
    %v2188 = vpop.f32.mrb[0].mxu0
    %v2189 = vpop.f32.mrb[0].mxu0
    %2190 = vdwg.mxu0
    %v2191 = vadd.f32 %v2105, %v2144
    %v2192 = vadd.f32 %v2106, %v2146
    %v2193 = vadd.f32 %v2107, %v2185
    %v2194 = vadd.f32 %v2108, %v2187
    %v2195 = vadd.f32 %v2191, %v439
    %v2196 = vadd.f32 %v2192, %v443
    %v2197 = vadd.f32 %v2193, %v447
    %v2198 = vadd.f32 %v2194, %v451
    %v2199 = vxor.u32 %v2195, 2147483648
    %v2200 = vxor.u32 %v2196, 2147483648
    %v2201 = vxor.u32 %v2197, 2147483648
    %v2202 = vmul.f32 %v2199, 1.442695
    %v2203 = vpow.pop %v2202
    %v2204 = vmul.f32 %v2200, 1.442695
    %v2205 = vpow.pop %v2204
    %v2206 = vmul.f32 %v2201, 1.442695
    %v2207 = vpow.pop %v2206
    %v2208 = vadd.f32 %v2203, 1.0
    %v2209 = vadd.f32 %v2205, 1.0
    %v2210 = vadd.f32 %v2207, 1.0
    %v2211 = vrcp.pop %v2208
    %v2212 = vmul.f32 1.0, %v2211
    %v2213 = vrcp.pop %v2209
    %v2214 = vmul.f32 1.0, %v2213
    %v2215 = vrcp.pop %v2210
    %v2216 = vmul.f32 1.0, %v2215
    %v2217 = vtanh.pop %v2198
    %v2218 = vmul.f32 %v2214, %v1987
    %v2219 = vmul.f32 %v2212, %v2217
    %v2220 = vadd.f32 %v2218, %v2219
    %v2221 = vtanh.pop %v2220
    %v2222 = vmul.f32 %v2216, %v2221
    %v2223 = vpack.c.bf16 %v2222, %v2222
    %v2224 = vpack.c.bf16 %v2097, %v2097
    %2225 = vmatprep.subr.bf16.mxu0 %v700
    %2226 = vmatpush1.bf16.msra.mxu0 %v699
    %2227 = vmatprep.subr.bf16.mxu0 %v704
    %2228 = vmatpush1.bf16.msra.mxu0 %v703
    %2229 = vmatprep.subr.bf16.mxu0 %v708
    %2230 = vmatpush1.bf16.msra.mxu0 %v707
    %2231 = vmatprep.subr.bf16.mxu0 %v712
    %2232 = vmatpush1.bf16.msra.mxu0 %v711
    %2233 = vmatprep.subr.bf16.mxu0 %v716
    %2234 = vmatpush1.bf16.msra.mxu0 %v715
    %2235 = vmatprep.subr.bf16.mxu0 %v720
    %2236 = vmatpush1.bf16.msra.mxu0 %v719
    %2237 = vmatprep.subr.bf16.mxu0 %v724
    %2238 = vmatpush1.bf16.msra.mxu0 %v723
    %2239 = vmatprep.subr.bf16.mxu0 %v728
    %2240 = vmatpush1.bf16.msra.mxu0 %v727
    %2241 = vmatprep.subr.bf16.mxu0 %v732
    %2242 = vmatpush1.bf16.msra.mxu0 %v731
    %2243 = vmatprep.subr.bf16.mxu0 %v736
    %2244 = vmatpush1.bf16.msra.mxu0 %v735
    %2245 = vmatprep.subr.bf16.mxu0 %v740
    %2246 = vmatpush1.bf16.msra.mxu0 %v739
    %2247 = vmatprep.subr.bf16.mxu0 %v744
    %2248 = vmatpush1.bf16.msra.mxu0 %v743
    %2249 = vmatprep.subr.bf16.mxu0 %v748
    %2250 = vmatpush1.bf16.msra.mxu0 %v747
    %2251 = vmatprep.subr.bf16.mxu0 %v752
    %2252 = vmatpush1.bf16.msra.mxu0 %v751
    %2253 = vmatprep.subr.bf16.mxu0 %v756
    %2254 = vmatpush1.bf16.msra.mxu0 %v755
    %2255 = vmatprep.subr.bf16.mxu0 %v760
    %2256 = vmatpush1.bf16.msra.mxu0 %v759
    %2257 = vmatprep.mubr.bf16.mxu0 %v2224
    %2258 = vmatmul.mubr.bf16.gmra.mrb[0].mxu0 %v2223
    %v2259 = vpop.f32.mrb[0].mxu0
    %v2260 = vadd.f32 %v490, %v2259
    %v2261 = vpop.f32.mrb[0].mxu0
    %v2262 = vadd.f32 %v494, %v2261
    %v2263 = vpop.f32.mrb[0].mxu0
    %v2264 = vpop.f32.mrb[0].mxu0
    %2265 = vdwg.mxu0
    %2266 = vmatprep.subr.bf16.mxu0 %v702
    %2267 = vmatpush1.bf16.msra.mxu0 %v701
    %2268 = vmatprep.subr.bf16.mxu0 %v706
    %2269 = vmatpush1.bf16.msra.mxu0 %v705
    %2270 = vmatprep.subr.bf16.mxu0 %v710
    %2271 = vmatpush1.bf16.msra.mxu0 %v709
    %2272 = vmatprep.subr.bf16.mxu0 %v714
    %2273 = vmatpush1.bf16.msra.mxu0 %v713
    %2274 = vmatprep.subr.bf16.mxu0 %v718
    %2275 = vmatpush1.bf16.msra.mxu0 %v717
    %2276 = vmatprep.subr.bf16.mxu0 %v722
    %2277 = vmatpush1.bf16.msra.mxu0 %v721
    %2278 = vmatprep.subr.bf16.mxu0 %v726
    %2279 = vmatpush1.bf16.msra.mxu0 %v725
    %2280 = vmatprep.subr.bf16.mxu0 %v730
    %2281 = vmatpush1.bf16.msra.mxu0 %v729
    %2282 = vmatprep.subr.bf16.mxu0 %v734
    %2283 = vmatpush1.bf16.msra.mxu0 %v733
    %2284 = vmatprep.subr.bf16.mxu0 %v738
    %2285 = vmatpush1.bf16.msra.mxu0 %v737
    %2286 = vmatprep.subr.bf16.mxu0 %v742
    %2287 = vmatpush1.bf16.msra.mxu0 %v741
    %2288 = vmatprep.subr.bf16.mxu0 %v746
    %2289 = vmatpush1.bf16.msra.mxu0 %v745
    %2290 = vmatprep.subr.bf16.mxu0 %v750
    %2291 = vmatpush1.bf16.msra.mxu0 %v749
    %2292 = vmatprep.subr.bf16.mxu0 %v754
    %2293 = vmatpush1.bf16.msra.mxu0 %v753
    %2294 = vmatprep.subr.bf16.mxu0 %v758
    %2295 = vmatpush1.bf16.msra.mxu0 %v757
    %2296 = vmatprep.subr.bf16.mxu0 %v762
    %2297 = vmatpush1.bf16.msra.mxu0 %v761
    %2298 = vmatprep.mubr.bf16.mxu0 %v2224
    %2299 = vmatmul.mubr.bf16.gmra.mrb[0].mxu0 %v2223
    %v2300 = vpop.f32.mrb[0].mxu0
    %v2301 = vadd.f32 %v498, %v2300
    %v2302 = vpop.f32.mrb[0].mxu0
    %v2303 = vadd.f32 %v502, %v2302
    %v2304 = vpop.f32.mrb[0].mxu0
    %v2305 = vpop.f32.mrb[0].mxu0
    %2306 = vdwg.mxu0
    %v2307 = vxor.u32 %v2260, 2147483648
    %v2308 = vxor.u32 %v2262, 2147483648
    %v2309 = vxor.u32 %v2301, 2147483648
    %v2310 = vmul.f32 %v2307, 1.442695
    %v2311 = vpow.pop %v2310
    %v2312 = vmul.f32 %v2308, 1.442695
    %v2313 = vpow.pop %v2312
    %v2314 = vmul.f32 %v2309, 1.442695
    %v2315 = vpow.pop %v2314
    %v2316 = vadd.f32 %v2311, 1.0
    %v2317 = vadd.f32 %v2313, 1.0
    %v2318 = vadd.f32 %v2315, 1.0
    %v2319 = vrcp.pop %v2316
    %v2320 = vmul.f32 1.0, %v2319
    %v2321 = vrcp.pop %v2317
    %v2322 = vmul.f32 1.0, %v2321
    %v2323 = vrcp.pop %v2318
    %v2324 = vmul.f32 1.0, %v2323
    %v2325 = vtanh.pop %v2303
    %v2326 = vmul.f32 %v2322, %v2095
    %v2327 = vmul.f32 %v2320, %v2325
    %v2328 = vadd.f32 %v2326, %v2327
    %v2329 = vtanh.pop %v2328
    %v2330 = vmul.f32 %v2324, %v2329
    %s2331 = scalar_lea.vmem %s0, 14
    %v2332 = vld [vmem:[%s2331] sm:$0x3]
    %2334 = vset.pattern.permute.xlu0 0
    %2335 = vperm.xlu0 %2334, %v2332
    %v2336 = vpop.permute.xlu0 %2335
    %v2338 = vmul.f32 %v2336, %v168
    %v2339 = vmul.f32 %v2336, %v172
    %v2340 = vmul.f32 %v2336, %v176
    %v2341 = vmul.f32 %v2336, %v180
    %2342 = vmatprep.subr.bf16.mxu0 %v286
    %2343 = vmatpush1.bf16.msra.mxu0 %v285
    %2344 = vmatprep.subr.bf16.mxu0 %v290
    %2345 = vmatpush1.bf16.msra.mxu0 %v289
    %2346 = vmatprep.subr.bf16.mxu0 %v294
    %2347 = vmatpush1.bf16.msra.mxu0 %v293
    %2348 = vmatprep.subr.bf16.mxu0 %v298
    %2349 = vmatpush1.bf16.msra.mxu0 %v297
    %2350 = vmatprep.subr.bf16.mxu0 %v302
    %2351 = vmatpush1.bf16.msra.mxu0 %v301
    %2352 = vmatprep.subr.bf16.mxu0 %v306
    %2353 = vmatpush1.bf16.msra.mxu0 %v305
    %2354 = vmatprep.subr.bf16.mxu0 %v310
    %2355 = vmatpush1.bf16.msra.mxu0 %v309
    %2356 = vmatprep.subr.bf16.mxu0 %v314
    %2357 = vmatpush1.bf16.msra.mxu0 %v313
    %2358 = vmatprep.subr.bf16.mxu0 0
    %2359 = vmatpush1.bf16.msra.mxu0 0
    %2360 = vmatprep.subr.bf16.mxu0 0
    %2361 = vmatpush1.bf16.msra.mxu0 0
    %2362 = vmatprep.subr.bf16.mxu0 0
    %2363 = vmatpush1.bf16.msra.mxu0 0
    %2364 = vmatprep.subr.bf16.mxu0 0
    %2365 = vmatpush1.bf16.msra.mxu0 0
    %2366 = vmatprep.subr.bf16.mxu0 0
    %2367 = vmatpush1.bf16.msra.mxu0 0
    %2368 = vmatprep.subr.bf16.mxu0 0
    %2369 = vmatpush1.bf16.msra.mxu0 0
    %2370 = vmatprep.subr.bf16.mxu0 0
    %2371 = vmatpush1.bf16.msra.mxu0 0
    %2372 = vmatprep.subr.bf16.mxu0 0
    %2373 = vmatpush1.bf16.msra.mxu0 0
    %2374 = vmatprep.mubr.bf16.mxu0 0
    %2375 = vmatmul.mubr.bf16.gmra.mrb[0].mxu0 %v2223
    %v2376 = vpop.f32.mrb[0].mxu0
    %v2377 = vadd.f32 0.0, %v2376
    %v2378 = vpop.f32.mrb[0].mxu0
    %v2379 = vadd.f32 0.0, %v2378
    %v2380 = vpop.f32.mrb[0].mxu0
    %v2381 = vpop.f32.mrb[0].mxu0
    %2382 = vdwg.mxu0
    %2383 = vmatprep.subr.bf16.mxu0 %v288
    %2384 = vmatpush1.bf16.msra.mxu0 %v287
    %2385 = vmatprep.subr.bf16.mxu0 %v292
    %2386 = vmatpush1.bf16.msra.mxu0 %v291
    %2387 = vmatprep.subr.bf16.mxu0 %v296
    %2388 = vmatpush1.bf16.msra.mxu0 %v295
    %2389 = vmatprep.subr.bf16.mxu0 %v300
    %2390 = vmatpush1.bf16.msra.mxu0 %v299
    %2391 = vmatprep.subr.bf16.mxu0 %v304
    %2392 = vmatpush1.bf16.msra.mxu0 %v303
    %2393 = vmatprep.subr.bf16.mxu0 %v308
    %2394 = vmatpush1.bf16.msra.mxu0 %v307
    %2395 = vmatprep.subr.bf16.mxu0 %v312
    %2396 = vmatpush1.bf16.msra.mxu0 %v311
    %2397 = vmatprep.subr.bf16.mxu0 %v316
    %2398 = vmatpush1.bf16.msra.mxu0 %v315
    %2399 = vmatprep.subr.bf16.mxu0 0
    %2400 = vmatpush1.bf16.msra.mxu0 0
    %2401 = vmatprep.subr.bf16.mxu0 0
    %2402 = vmatpush1.bf16.msra.mxu0 0
    %2403 = vmatprep.subr.bf16.mxu0 0
    %2404 = vmatpush1.bf16.msra.mxu0 0
    %2405 = vmatprep.subr.bf16.mxu0 0
    %2406 = vmatpush1.bf16.msra.mxu0 0
    %2407 = vmatprep.subr.bf16.mxu0 0
    %2408 = vmatpush1.bf16.msra.mxu0 0
    %2409 = vmatprep.subr.bf16.mxu0 0
    %2410 = vmatpush1.bf16.msra.mxu0 0
    %2411 = vmatprep.subr.bf16.mxu0 0
    %2412 = vmatpush1.bf16.msra.mxu0 0
    %2413 = vmatprep.subr.bf16.mxu0 0
    %2414 = vmatpush1.bf16.msra.mxu0 0
    %2415 = vmatprep.mubr.bf16.mxu0 0
    %2416 = vmatmul.mubr.bf16.gmra.mrb[0].mxu0 %v2223
    %v2417 = vpop.f32.mrb[0].mxu0
    %v2418 = vadd.f32 0.0, %v2417
    %v2419 = vpop.f32.mrb[0].mxu0
    %v2420 = vadd.f32 0.0, %v2419
    %v2421 = vpop.f32.mrb[0].mxu0
    %v2422 = vpop.f32.mrb[0].mxu0
    %2423 = vdwg.mxu0
    %v2424 = vadd.f32 %v2338, %v2377
    %v2425 = vadd.f32 %v2339, %v2379
    %v2426 = vadd.f32 %v2340, %v2418
    %v2427 = vadd.f32 %v2341, %v2420
    %v2428 = vadd.f32 %v2424, %v439
    %v2429 = vadd.f32 %v2425, %v443
    %v2430 = vadd.f32 %v2426, %v447
    %v2431 = vadd.f32 %v2427, %v451
    %v2432 = vxor.u32 %v2428, 2147483648
    %v2433 = vxor.u32 %v2429, 2147483648
    %v2434 = vxor.u32 %v2430, 2147483648
    %v2435 = vmul.f32 %v2432, 1.442695
    %v2436 = vpow.pop %v2435
    %v2437 = vmul.f32 %v2433, 1.442695
    %v2438 = vpow.pop %v2437
    %v2439 = vmul.f32 %v2434, 1.442695
    %v2440 = vpow.pop %v2439
    %v2441 = vadd.f32 %v2436, 1.0
    %v2442 = vadd.f32 %v2438, 1.0
    %v2443 = vadd.f32 %v2440, 1.0
    %v2444 = vrcp.pop %v2441
    %v2445 = vmul.f32 1.0, %v2444
    %v2446 = vrcp.pop %v2442
    %v2447 = vmul.f32 1.0, %v2446
    %v2448 = vrcp.pop %v2443
    %v2449 = vmul.f32 1.0, %v2448
    %v2450 = vtanh.pop %v2431
    %v2451 = vmul.f32 %v2447, %v2220
    %v2452 = vmul.f32 %v2445, %v2450
    %v2453 = vadd.f32 %v2451, %v2452
    %v2454 = vtanh.pop %v2453
    %v2455 = vmul.f32 %v2449, %v2454
    %v2456 = vpack.c.bf16 %v2455, %v2455
    %v2457 = vpack.c.bf16 %v2330, %v2330
    %2458 = vmatprep.subr.bf16.mxu0 %v700
    %2459 = vmatpush1.bf16.msra.mxu0 %v699
    %2460 = vmatprep.subr.bf16.mxu0 %v704
    %2461 = vmatpush1.bf16.msra.mxu0 %v703
    %2462 = vmatprep.subr.bf16.mxu0 %v708
    %2463 = vmatpush1.bf16.msra.mxu0 %v707
    %2464 = vmatprep.subr.bf16.mxu0 %v712
    %2465 = vmatpush1.bf16.msra.mxu0 %v711
    %2466 = vmatprep.subr.bf16.mxu0 %v716
    %2467 = vmatpush1.bf16.msra.mxu0 %v715
    %2468 = vmatprep.subr.bf16.mxu0 %v720
    %2469 = vmatpush1.bf16.msra.mxu0 %v719
    %2470 = vmatprep.subr.bf16.mxu0 %v724
    %2471 = vmatpush1.bf16.msra.mxu0 %v723
    %2472 = vmatprep.subr.bf16.mxu0 %v728
    %2473 = vmatpush1.bf16.msra.mxu0 %v727
    %2474 = vmatprep.subr.bf16.mxu0 %v732
    %2475 = vmatpush1.bf16.msra.mxu0 %v731
    %2476 = vmatprep.subr.bf16.mxu0 %v736
    %2477 = vmatpush1.bf16.msra.mxu0 %v735
    %2478 = vmatprep.subr.bf16.mxu0 %v740
    %2479 = vmatpush1.bf16.msra.mxu0 %v739
    %2480 = vmatprep.subr.bf16.mxu0 %v744
    %2481 = vmatpush1.bf16.msra.mxu0 %v743
    %2482 = vmatprep.subr.bf16.mxu0 %v748
    %2483 = vmatpush1.bf16.msra.mxu0 %v747
    %2484 = vmatprep.subr.bf16.mxu0 %v752
    %2485 = vmatpush1.bf16.msra.mxu0 %v751
    %2486 = vmatprep.subr.bf16.mxu0 %v756
    %2487 = vmatpush1.bf16.msra.mxu0 %v755
    %2488 = vmatprep.subr.bf16.mxu0 %v760
    %2489 = vmatpush1.bf16.msra.mxu0 %v759
    %2490 = vmatprep.mubr.bf16.mxu0 %v2457
    %2491 = vmatmul.mubr.bf16.gmra.mrb[0].mxu0 %v2456
    %v2492 = vpop.f32.mrb[0].mxu0
    %v2493 = vadd.f32 %v490, %v2492
    %v2494 = vpop.f32.mrb[0].mxu0
    %v2495 = vadd.f32 %v494, %v2494
    %v2496 = vpop.f32.mrb[0].mxu0
    %v2497 = vpop.f32.mrb[0].mxu0
    %2498 = vdwg.mxu0
    %2499 = vmatprep.subr.bf16.mxu0 %v702
    %2500 = vmatpush1.bf16.msra.mxu0 %v701
    %2501 = vmatprep.subr.bf16.mxu0 %v706
    %2502 = vmatpush1.bf16.msra.mxu0 %v705
    %2503 = vmatprep.subr.bf16.mxu0 %v710
    %2504 = vmatpush1.bf16.msra.mxu0 %v709
    %2505 = vmatprep.subr.bf16.mxu0 %v714
    %2506 = vmatpush1.bf16.msra.mxu0 %v713
    %2507 = vmatprep.subr.bf16.mxu0 %v718
    %2508 = vmatpush1.bf16.msra.mxu0 %v717
    %2509 = vmatprep.subr.bf16.mxu0 %v722
    %2510 = vmatpush1.bf16.msra.mxu0 %v721
    %2511 = vmatprep.subr.bf16.mxu0 %v726
    %2512 = vmatpush1.bf16.msra.mxu0 %v725
    %2513 = vmatprep.subr.bf16.mxu0 %v730
    %2514 = vmatpush1.bf16.msra.mxu0 %v729
    %2515 = vmatprep.subr.bf16.mxu0 %v734
    %2516 = vmatpush1.bf16.msra.mxu0 %v733
    %2517 = vmatprep.subr.bf16.mxu0 %v738
    %2518 = vmatpush1.bf16.msra.mxu0 %v737
    %2519 = vmatprep.subr.bf16.mxu0 %v742
    %2520 = vmatpush1.bf16.msra.mxu0 %v741
    %2521 = vmatprep.subr.bf16.mxu0 %v746
    %2522 = vmatpush1.bf16.msra.mxu0 %v745
    %2523 = vmatprep.subr.bf16.mxu0 %v750
    %2524 = vmatpush1.bf16.msra.mxu0 %v749
    %2525 = vmatprep.subr.bf16.mxu0 %v754
    %2526 = vmatpush1.bf16.msra.mxu0 %v753
    %2527 = vmatprep.subr.bf16.mxu0 %v758
    %2528 = vmatpush1.bf16.msra.mxu0 %v757
    %2529 = vmatprep.subr.bf16.mxu0 %v762
    %2530 = vmatpush1.bf16.msra.mxu0 %v761
    %2531 = vmatprep.mubr.bf16.mxu0 %v2457
    %2532 = vmatmul.mubr.bf16.gmra.mrb[0].mxu0 %v2456
    %v2533 = vpop.f32.mrb[0].mxu0
    %v2534 = vadd.f32 %v498, %v2533
    %v2535 = vpop.f32.mrb[0].mxu0
    %v2536 = vadd.f32 %v502, %v2535
    %v2537 = vpop.f32.mrb[0].mxu0
    %v2538 = vpop.f32.mrb[0].mxu0
    %2539 = vdwg.mxu0
    %v2540 = vxor.u32 %v2493, 2147483648
    %v2541 = vxor.u32 %v2495, 2147483648
    %v2542 = vxor.u32 %v2534, 2147483648
    %v2543 = vmul.f32 %v2540, 1.442695
    %v2544 = vpow.pop %v2543
    %v2545 = vmul.f32 %v2541, 1.442695
    %v2546 = vpow.pop %v2545
    %v2547 = vmul.f32 %v2542, 1.442695
    %v2548 = vpow.pop %v2547
    %v2549 = vadd.f32 %v2544, 1.0
    %v2550 = vadd.f32 %v2546, 1.0
    %v2551 = vadd.f32 %v2548, 1.0
    %v2552 = vrcp.pop %v2549
    %v2553 = vmul.f32 1.0, %v2552
    %v2554 = vrcp.pop %v2550
    %v2555 = vmul.f32 1.0, %v2554
    %v2556 = vrcp.pop %v2551
    %v2557 = vmul.f32 1.0, %v2556
    %v2558 = vtanh.pop %v2536
    %v2559 = vmul.f32 %v2555, %v2328
    %v2560 = vmul.f32 %v2553, %v2558
    %v2561 = vadd.f32 %v2559, %v2560
    %v2562 = vtanh.pop %v2561
    %v2563 = vmul.f32 %v2557, %v2562
    %v2564 = vld [vmem:[%s6] sm:$0xff]
    %v2565 = vld [vmem:[%s6 + $0x8] sm:$0xff]
    %v2566 = vld [vmem:[%s6 + $0x10] sm:$0xff]
    %v2567 = vld [vmem:[%s6 + $0x18] sm:$0xff]
    %v2568 = vld [vmem:[%s6 + $0x20] sm:$0xff]
    %v2569 = vld [vmem:[%s6 + $0x28] sm:$0xff]
    %v2570 = vld [vmem:[%s6 + $0x30] sm:$0xff]
    %v2571 = vld [vmem:[%s6 + $0x38] sm:$0xff]
    %v2572 = vld [vmem:[%s6 + $0x40] sm:$0xff]
    %v2573 = vld [vmem:[%s6 + $0x48] sm:$0xff]
    %v2574 = vld [vmem:[%s6 + $0x50] sm:$0xff]
    %v2575 = vld [vmem:[%s6 + $0x58] sm:$0xff]
    %v2576 = vld [vmem:[%s6 + $0x60] sm:$0xff]
    %v2577 = vld [vmem:[%s6 + $0x68] sm:$0xff]
    %v2578 = vld [vmem:[%s6 + $0x70] sm:$0xff]
    %v2579 = vld [vmem:[%s6 + $0x78] sm:$0xff]
    %v2580 = vld [vmem:[%s7] sm:$0x1]
    %v2582 = vlaneseq
    %v2583 = vshrl.u32 %v2582, 7
    %v2584 = vsub.s32 0, %v2583
    %v2585 = vrot.slane %v2580, %v2584
    %2587 = vmatprep.subr.mxu0 0.0
    %2588 = vmatpush1.msra.mxu0 %v2564
    %2589 = vmatprep.subr.mxu0 0.0
    %2590 = vmatpush1.msra.mxu0 %v2565
    %2591 = vmatprep.subr.mxu0 0.0
    %2592 = vmatpush1.msra.mxu0 %v2566
    %2593 = vmatprep.subr.mxu0 0.0
    %2594 = vmatpush1.msra.mxu0 %v2567
    %2595 = vmatprep.subr.mxu0 0.0
    %2596 = vmatpush1.msra.mxu0 %v2568
    %2597 = vmatprep.subr.mxu0 0.0
    %2598 = vmatpush1.msra.mxu0 %v2569
    %2599 = vmatprep.subr.mxu0 0.0
    %2600 = vmatpush1.msra.mxu0 %v2570
    %2601 = vmatprep.subr.mxu0 0.0
    %2602 = vmatpush1.msra.mxu0 %v2571
    %2603 = vmatprep.subr.mxu0 0.0
    %2604 = vmatpush1.msra.mxu0 %v2572
    %2605 = vmatprep.subr.mxu0 0.0
    %2606 = vmatpush1.msra.mxu0 %v2573
    %2607 = vmatprep.subr.mxu0 0.0
    %2608 = vmatpush1.msra.mxu0 %v2574
    %2609 = vmatprep.subr.mxu0 0.0
    %2610 = vmatpush1.msra.mxu0 %v2575
    %2611 = vmatprep.subr.mxu0 0.0
    %2612 = vmatpush1.msra.mxu0 %v2576
    %2613 = vmatprep.subr.mxu0 0.0
    %2614 = vmatpush1.msra.mxu0 %v2577
    %2615 = vmatprep.subr.mxu0 0.0
    %2616 = vmatpush1.msra.mxu0 %v2578
    %2617 = vmatprep.subr.mxu0 0.0
    %2618 = vmatpush1.msra.mxu0 %v2579
    %2619 = vmatprep.subr.mxu0 0.0
    %2620 = vmatpush1.msra.mxu0 0.0
    %2621 = vmatprep.subr.mxu0 0.0
    %2622 = vmatpush1.msra.mxu0 0.0
    %2623 = vmatprep.subr.mxu0 0.0
    %2624 = vmatpush1.msra.mxu0 0.0
    %2625 = vmatprep.subr.mxu0 0.0
    %2626 = vmatpush1.msra.mxu0 0.0
    %2627 = vmatprep.subr.mxu0 0.0
    %2628 = vmatpush1.msra.mxu0 0.0
    %2629 = vmatprep.subr.mxu0 0.0
    %2630 = vmatpush1.msra.mxu0 0.0
    %2631 = vmatprep.subr.mxu0 0.0
    %2632 = vmatpush1.msra.mxu0 0.0
    %2633 = vmatprep.subr.mxu0 0.0
    %2634 = vmatpush1.msra.mxu0 0.0
    %2635 = vmatprep.subr.mxu0 0.0
    %2636 = vmatpush1.msra.mxu0 0.0
    %2637 = vmatprep.subr.mxu0 0.0
    %2638 = vmatpush1.msra.mxu0 0.0
    %2639 = vmatprep.subr.mxu0 0.0
    %2640 = vmatpush1.msra.mxu0 0.0
    %2641 = vmatprep.subr.mxu0 0.0
    %2642 = vmatpush1.msra.mxu0 0.0
    %2643 = vmatprep.subr.mxu0 0.0
    %2644 = vmatpush1.msra.mxu0 0.0
    %2645 = vmatprep.subr.mxu0 0.0
    %2646 = vmatpush1.msra.mxu0 0.0
    %2647 = vmatprep.subr.mxu0 0.0
    %2648 = vmatpush1.msra.mxu0 0.0
    %2649 = vmatprep.subr.mxu0 0.0
    %2650 = vmatpush1.msra.mxu0 0.0
    %2651 = vmatprep.mubr.f32.mxu0 0.0
    %2652 = vmatmul.mubr.f32.gmra.mrb[0].mxu0 %v2563
    %v2653 = vpop.f32.mrb[0].mxu0
    %v2654 = vadd.f32 %v2585, %v2653
    %v2655 = vpop.f32.mrb[0].mxu0
    %2656 = vdwg.mxu0
    %vm2657 = vcmask 58368
    %2658 = vst.msk [vmem:[#allocation7] sm:$0x3] %vm2657, %v2654
    // Predicated region
    $region42: #{my_lstm_forward.1} parent=1 // pred_check
      _
    $region43: #{my_lstm_forward.1} parent=1 // pred_check_branch
      %2660 = sbr.rel (0) target = $region45
    $region44: #{my_lstm_forward.1} parent=1 // pred_region
      %s2662 = ssub.s32 32, 32
      %2663 = vsyncadd [#allocation4], %s2662
      %s2665 = sshll.u32 [#allocation7], 4
      %s2666 = int_to_ptr.vmem [resolvable:$true] %s2665
      %2668 = dma.vmem_to_hbm [thread:$0]  %s2666, 32, %s8, [#allocation4]
    $region45: #{my_lstm_forward.1} parent=1 // pred_fallthru
      _
    // Predicated region
    $region46: #{my_lstm_forward.1} parent=1 // pred_check
      _
    $region47: #{my_lstm_forward.1} parent=1 // pred_check_branch
      %2670 = sbr.rel (0) target = $region49
    $region48: #{my_lstm_forward.1} parent=1 // pred_region
      %2671 = dma.done [#allocation4], 32
    $region49: #{my_lstm_forward.1} parent=1 // pred_fallthru
      _
    %2672 = vsyncpa [#allocation3], 1
    %2673 = vsyncpa [#allocation6], 1
    %2674 = vsyncpa [#allocation4], 1

</llo_original>
